<compile_context>
chip_gen: v5e
topology: v5e:2x2
jax: 0.10.0
libtpu: 0.0.40
codegen_flags: <defaults>
</compile_context>

<pallas_src>
import functools

import jax
import jax.numpy as jnp
from jax.experimental import pallas as pl
from jax.experimental.pallas import tpu as pltpu


# ----------------------------------------------------------------------------
# Tiling helpers
# ----------------------------------------------------------------------------
_TM, _TN, _TK = 512, 512, 512          # works on v5e/v6e/v7x VMEM budgets
_VMEM_LIMIT = 64 * 1024 * 1024


def _pick_tile(dim, target, align):
    """Largest `align`-multiple divisor of dim that is <= target, else full dim.

    Never pads: a full-dim block is always legal (exempt from the (8,128)
    constraint), it just uses more VMEM for awkward dims.
    """
    if dim <= target:
        return dim
    t = (target // align) * align
    while t >= align:
        if dim % t == 0:
            return t
        t -= align
    return dim


# ----------------------------------------------------------------------------
# Tiled matmul (+ bias, optional GELU, optional fused residual add)
# ----------------------------------------------------------------------------
def _matmul_bias_kernel(a_ref, b_ref, bias_ref, *rest, activation, has_residual):
    if has_residual:
        res_ref, o_ref, acc_ref = rest
    else:
        o_ref, acc_ref = rest

    @pl.when(pl.program_id(2) == 0)
    def _init():
        acc_ref[...] = jnp.zeros_like(acc_ref)

    acc_ref[...] += jnp.dot(a_ref[...], b_ref[...],
                            preferred_element_type=jnp.float32)

    @pl.when(pl.program_id(2) == pl.num_programs(2) - 1)
    def _finalize():
        out = acc_ref[...] + bias_ref[...]
        if activation == "gelu":
            # TODO(synk): PyTorch nn.GELU defaults to exact erf; tanh approx is
            # used for a guaranteed Mosaic (EUP) lowering path.
            out = jax.nn.gelu(out, approximate=True)
        if has_residual:
            out = out + res_ref[...].astype(jnp.float32)
        o_ref[...] = out.astype(o_ref.dtype)


def matmul_bias(a, b, bias2d, activation=None, residual=None,
                out_dtype=jnp.bfloat16):
    """out = act(a @ b + bias) [+ residual].

    `a`/`b`/`residual` are bf16, `bias2d` is (1, N) fp32 (prepared once).
    No padding / slicing: tile sizes are aligned divisors of the real dims.
    """
    M, K = a.shape
    K2, N = b.shape
    assert K == K2
    tm = _pick_tile(M, _TM, 8)
    tn = _pick_tile(N, _TN, 128)
    tk = _pick_tile(K, _TK, 128)

    inputs = [a, b, bias2d]
    in_specs = [
        pl.BlockSpec((tm, tk), lambda i, j, k: (i, k)),
        pl.BlockSpec((tk, tn), lambda i, j, k: (k, j)),
        pl.BlockSpec((1, tn), lambda i, j, k: (0, j)),
    ]
    has_res = residual is not None
    if has_res:
        inputs.append(residual)
        in_specs.append(pl.BlockSpec((tm, tn), lambda i, j, k: (i, j)))

    flops = 2 * M * N * K
    bytes_acc = 2 * (M * K + K * N + (2 if has_res else 1) * M * N) + 4 * N
    transc = M * N if activation == "gelu" else 0

    return pl.pallas_call(
        functools.partial(_matmul_bias_kernel, activation=activation,
                          has_residual=has_res),
        out_shape=jax.ShapeDtypeStruct((M, N), out_dtype),
        grid=(M // tm, N // tn, K // tk),
        in_specs=in_specs,
        out_specs=pl.BlockSpec((tm, tn), lambda i, j, k: (i, j)),
        scratch_shapes=[pltpu.VMEM((tm, tn), jnp.float32)],
        compiler_params=pltpu.CompilerParams(
            dimension_semantics=("parallel", "parallel", "arbitrary"),
            vmem_limit_bytes=_VMEM_LIMIT),
        cost_estimate=pl.CostEstimate(flops=flops, transcendentals=transc,
                                      bytes_accessed=bytes_acc),
    )(*inputs)


# ----------------------------------------------------------------------------
# LayerNorm fused into a matmul.  The LN'd A tile is computed once per M-tile
# (at the first N-tile) and cached in a VMEM scratch; the N axis is "arbitrary"
# so the scratch is valid for all subsequent N-tiles of the same M-tile.
# ----------------------------------------------------------------------------
def _ln_matmul_bias_kernel(x_ref, g_ref, b_ref, w_ref, bias_ref, o_ref, xn_ref,
                           *, activation, eps):
    @pl.when(pl.program_id(1) == 0)
    def _ln_prologue():
        x = x_ref[...].astype(jnp.float32)
        mean = jnp.mean(x, axis=-1, keepdims=True)
        var = jnp.mean(jnp.square(x - mean), axis=-1, keepdims=True)
        xn = (x - mean) * jax.lax.rsqrt(var + eps)
        xn_ref[...] = (xn * g_ref[...] + b_ref[...]).astype(xn_ref.dtype)

    acc = jnp.dot(xn_ref[...], w_ref[...], preferred_element_type=jnp.float32)
    acc = acc + bias_ref[...]
    if activation == "gelu":
        acc = jax.nn.gelu(acc, approximate=True)
    o_ref[...] = acc.astype(o_ref.dtype)


def ln_matmul_bias(x, gamma2d, beta2d, w, bias2d, activation=None,
                   out_dtype=jnp.bfloat16, eps=1e-6):
    """out = act(LayerNorm(x) @ w + bias).  K (= embed dim) kept whole per tile."""
    # TODO(synk): LayerNorm eps fixed at 1e-6 (timm); HF ViT default is 1e-12 —
    # must match the target checkpoint.
    M, K = x.shape
    K2, N = w.shape
    assert K == K2
    tm = _pick_tile(M, _TM, 8)
    tn = _pick_tile(N, _TN, 128)

    flops = 2 * M * N * K + 8 * M * K
    bytes_acc = 2 * (M * K + K * N + M * N) + 4 * (N + 2 * K)
    transc = M * N if activation == "gelu" else 0

    return pl.pallas_call(
        functools.partial(_ln_matmul_bias_kernel, activation=activation, eps=eps),
        out_shape=jax.ShapeDtypeStruct((M, N), out_dtype),
        grid=(M // tm, N // tn),
        in_specs=[
            pl.BlockSpec((tm, K), lambda i, j: (i, 0)),
            pl.BlockSpec((1, K), lambda i, j: (0, 0)),
            pl.BlockSpec((1, K), lambda i, j: (0, 0)),
            pl.BlockSpec((K, tn), lambda i, j: (0, j)),
            pl.BlockSpec((1, tn), lambda i, j: (0, j)),
        ],
        out_specs=pl.BlockSpec((tm, tn), lambda i, j: (i, j)),
        scratch_shapes=[pltpu.VMEM((tm, K), jnp.bfloat16)],
        compiler_params=pltpu.CompilerParams(
            dimension_semantics=("parallel", "arbitrary"),
            vmem_limit_bytes=_VMEM_LIMIT),
        cost_estimate=pl.CostEstimate(flops=flops, transcendentals=transc,
                                      bytes_accessed=bytes_acc),
    )(x, gamma2d, beta2d, w, bias2d)


# ----------------------------------------------------------------------------
# Patch embedding: patches @ W + bias + pos_embed, fused (grid over batch).
# ----------------------------------------------------------------------------
def _patch_embed_kernel(p_ref, w_ref, bias_ref, pos_ref, o_ref):
    acc = jnp.dot(p_ref[0], w_ref[...], preferred_element_type=jnp.float32)
    o_ref[0] = (acc + bias_ref[...] + pos_ref[...]).astype(o_ref.dtype)


def patch_embed(patches, w, bias2d, pos2d):
    B, N, Cpp = patches.shape
    D = w.shape[1]
    return pl.pallas_call(
        _patch_embed_kernel,
        out_shape=jax.ShapeDtypeStruct((B, N, D), jnp.bfloat16),
        grid=(B,),
        in_specs=[
            pl.BlockSpec((1, N, Cpp), lambda b: (b, 0, 0)),
            pl.BlockSpec((Cpp, D), lambda b: (0, 0)),
            pl.BlockSpec((1, D), lambda b: (0, 0)),
            pl.BlockSpec((N, D), lambda b: (0, 0)),   # pos_embed ignores batch
        ],
        out_specs=pl.BlockSpec((1, N, D), lambda b: (b, 0, 0)),
        compiler_params=pltpu.CompilerParams(
            dimension_semantics=("parallel",), vmem_limit_bytes=_VMEM_LIMIT),
    )(patches, w, bias2d, pos2d)


# ----------------------------------------------------------------------------
# Multi-head self-attention: all heads of one batch item per grid step.
# Per-head slices are taken directly from the packed (N, 3D) QKV ref and each
# head's output is stored directly into its o_ref columns (no concatenate).
# The softmax scale is pre-folded into the QKV projection weights.
# ----------------------------------------------------------------------------
def _mha_kernel(qkv_ref, o_ref, *, num_heads):
    D = o_ref.shape[-1]
    dh = D // num_heads
    # TODO(synk): for large (N, D) a flash-style KV/query tiling (grid over
    # heads + KV tiles) is needed to bound VMEM on v7x; full-block here.
    for h in range(num_heads):                       # static unroll over heads
        q = qkv_ref[0, :, h * dh:(h + 1) * dh]               # (N, dh) bf16
        k = qkv_ref[0, :, D + h * dh:D + (h + 1) * dh]
        v = qkv_ref[0, :, 2 * D + h * dh:2 * D + (h + 1) * dh]
        s = jax.lax.dot_general(q, k, (((1,), (1,)), ((), ())),
                                preferred_element_type=jnp.float32)
        m = jnp.max(s, axis=-1, keepdims=True)
        p = jnp.exp(s - m)
        denom = jnp.sum(p, axis=-1, keepdims=True)
        o = jnp.dot(p.astype(v.dtype), v, preferred_element_type=jnp.float32)
        o = o * pl.reciprocal(denom, approx=True)
        o_ref[0, :, h * dh:(h + 1) * dh] = o.astype(o_ref.dtype)


def multihead_attention(qkv, num_heads):
    B, N, threeD = qkv.shape
    D = threeD // 3
    return pl.pallas_call(
        functools.partial(_mha_kernel, num_heads=num_heads),
        out_shape=jax.ShapeDtypeStruct((B, N, D), jnp.bfloat16),
        grid=(B,),
        in_specs=[pl.BlockSpec((1, N, threeD), lambda b: (b, 0, 0))],
        out_specs=pl.BlockSpec((1, N, D), lambda b: (b, 0, 0)),
        compiler_params=pltpu.CompilerParams(
            dimension_semantics=("parallel",), vmem_limit_bytes=_VMEM_LIMIT),
    )(qkv)


# ----------------------------------------------------------------------------
# Attention-pooling (classifier) cross-attention: 1 query, packed K/V, whole
# batch in a single kernel call (no per-batch grid of tiny steps).
# ----------------------------------------------------------------------------
def _pool_attn_kernel(q_ref, kv_ref, o_ref, *, num_heads, batch):
    D = o_ref.shape[-1]
    dh = D // num_heads
    for b in range(batch):
        for h in range(num_heads):
            qh = q_ref[b, :, h * dh:(h + 1) * dh]              # (1, dh), scale folded
            kh = kv_ref[b, :, h * dh:(h + 1) * dh]             # (N, dh)
            vh = kv_ref[b, :, D + h * dh:D + (h + 1) * dh]     # (N, dh)
            s = jax.lax.dot_general(qh, kh, (((1,), (1,)), ((), ())),
                                    preferred_element_type=jnp.float32)
            m = jnp.max(s, axis=-1, keepdims=True)
            p = jnp.exp(s - m)
            denom = jnp.sum(p, axis=-1, keepdims=True)
            o = jnp.dot(p.astype(vh.dtype), vh,
                        preferred_element_type=jnp.float32)
            o = o * pl.reciprocal(denom, approx=True)
            o_ref[b, :, h * dh:(h + 1) * dh] = o.astype(o_ref.dtype)


def pool_attention(q, kv, num_heads):
    B, Nq, D = q.shape
    return pl.pallas_call(
        functools.partial(_pool_attn_kernel, num_heads=num_heads, batch=B),
        out_shape=jax.ShapeDtypeStruct((B, Nq, D), jnp.bfloat16),
    )(q, kv)


# ----------------------------------------------------------------------------
# Model (glue around the kernels) — tokens flow as bf16 (B*N, D)
# ----------------------------------------------------------------------------
def transformer_block(p, x2, B, N, num_heads):
    D = x2.shape[-1]
    # LN1 fused into the QKV projection (scale pre-folded into qkv_w/qkv_b).
    qkv = ln_matmul_bias(x2, p["ln1_g"], p["ln1_b"], p["qkv_w"], p["qkv_b"])
    attn = multihead_attention(qkv.reshape(B, N, 3 * D), num_heads)
    x2 = matmul_bias(attn.reshape(B * N, D), p["proj_w"], p["proj_b"],
                     residual=x2)
    # LN2 fused into fc1 (+GELU); fc2 with residual add fused in.
    h = ln_matmul_bias(x2, p["ln2_g"], p["ln2_b"], p["fc1_w"], p["fc1_b"],
                       activation="gelu")
    x2 = matmul_bias(h, p["fc2_w"], p["fc2_b"], residual=x2)
    return x2


def attention_pooling_classifier(cls_p, x2, norm_g, norm_b, B, N, num_heads):
    """AIM-style AttentionPoolingClassifier, num_queries=1.

    Encoder final LayerNorm is fused into the packed k/v projection; the
    BatchNorm1d rescale is folded into the projection weights; the attention
    scale is folded into the query (cls token).
    """
    D = x2.shape[-1]
    kv = ln_matmul_bias(x2, norm_g, norm_b, cls_p["kv_w"], cls_p["kv_b"])
    kv = kv.reshape(B, N, 2 * D)

    q = jnp.broadcast_to(cls_p["q"], (B, 1, D))
    o = pool_attention(q, kv, num_heads)               # (B, 1, D)
    x_cls = o.reshape(B, D)                            # mean over 1 query == identity

    logits = matmul_bias(x_cls, cls_p["head_w"], cls_p["head_b"],
                         out_dtype=jnp.float32)
    return logits, x_cls


def vit_forward(params, x, *, patch, num_heads):
    B, C, H, W = x.shape
    nH, nW = H // patch, W // patch
    N = nH * nW
    D = params["patch_w"].shape[1]

    # Conv2d(kernel=stride=patch) == patchify + matmul.  Flatten order matches
    # PyTorch conv weight (D, C, ph, pw): per-patch vector ordered (C, ph, pw).
    patches = x.astype(jnp.bfloat16).reshape(B, C, nH, patch, nW, patch)
    patches = patches.transpose(0, 2, 4, 1, 3, 5).reshape(B, N, C * patch * patch)
    tokens = patch_embed(patches, params["patch_w"], params["patch_b"],
                         params["pos_embed"])          # bias + pos_embed fused
    x2 = tokens.reshape(B * N, D)

    for blk in params["blocks"]:
        x2 = transformer_block(blk, x2, B, N, num_heads)

    logits, _x_cls = attention_pooling_classifier(
        params["cls"], x2, params["norm_g"], params["norm_b"], B, N, num_heads)
    return logits


# ----------------------------------------------------------------------------
# One-time parameter preparation: bf16 casts, bias reshapes, scale/BN folds,
# packed classifier k/v weights.  Done once, outside the jitted forward.
# ----------------------------------------------------------------------------
def prepare_params(params, *, num_heads):
    D = params["patch_w"].shape[1]
    dh = D // num_heads
    scale = dh ** -0.5
    # BatchNorm1d(affine=False, eps=1e-6) in eval mode with default running
    # stats (mean=0, var=1) -> pure rescale folded into the k/v weights.
    # TODO(synk): training-mode / non-default running stats are not reproduced.
    bn_c = (1.0 + 1e-6) ** -0.5

    def row(v):
        return v.reshape(1, -1).astype(jnp.float32)

    # Fold the attention softmax scale into the q-columns of the QKV projection.
    q_scale = jnp.concatenate([jnp.full((D,), scale, jnp.float32),
                               jnp.ones((2 * D,), jnp.float32)])

    blocks = []
    for b in params["blocks"]:
        blocks.append({
            "ln1_g": row(b["ln1_g"]), "ln1_b": row(b["ln1_b"]),
            "qkv_w": (b["qkv_w"] * q_scale[None, :]).astype(jnp.bfloat16),
            "qkv_b": row(b["qkv_b"] * q_scale),
            "proj_w": b["proj_w"].astype(jnp.bfloat16), "proj_b": row(b["proj_b"]),
            "ln2_g": row(b["ln2_g"]), "ln2_b": row(b["ln2_b"]),
            "fc1_w": b["fc1_w"].astype(jnp.bfloat16), "fc1_b": row(b["fc1_b"]),
            "fc2_w": b["fc2_w"].astype(jnp.bfloat16), "fc2_b": row(b["fc2_b"]),
        })

    cls = params["cls"]
    kv_w = jnp.concatenate([cls["k_w"], cls["v_w"]], axis=1) * bn_c   # (D, 2D)
    kv_b = jnp.concatenate([cls["k_b"], cls["v_b"]])                  # (2D,)

    return {
        "patch_w": params["patch_w"].astype(jnp.bfloat16),
        "patch_b": row(params["patch_b"]),
        "pos_embed": params["pos_embed"][0].astype(jnp.float32),      # (N, D)
        "blocks": blocks,
        "norm_g": row(params["norm_g"]), "norm_b": row(params["norm_b"]),
        "cls": {
            "kv_w": kv_w.astype(jnp.bfloat16), "kv_b": row(kv_b),
            "q": (cls["cls_token"] * scale).astype(jnp.bfloat16),     # (1,1,D)
            "head_w": cls["head_w"].astype(jnp.bfloat16),
            "head_b": row(cls["head_b"]),
        },
    }


# ----------------------------------------------------------------------------
# Deterministic parameter construction (PyTorch-like fp32 "checkpoint")
# ----------------------------------------------------------------------------
def init_params(key, *, in_chans, patch, embed_dim, depth, num_heads,
                mlp_ratio, num_classes, num_patches):
    keys = iter(jax.random.split(key, 8 * depth + 16))

    def w(shape):
        return jax.random.normal(next(keys), shape, jnp.float32) * 0.02

    def zeros(shape):
        return jnp.zeros(shape, jnp.float32)

    def ones(shape):
        return jnp.ones(shape, jnp.float32)

    hidden = embed_dim * mlp_ratio
    blocks = []
    for _ in range(depth):
        blocks.append({
            "ln1_g": ones((embed_dim,)), "ln1_b": zeros((embed_dim,)),
            "qkv_w": w((embed_dim, 3 * embed_dim)), "qkv_b": zeros((3 * embed_dim,)),
            "proj_w": w((embed_dim, embed_dim)), "proj_b": zeros((embed_dim,)),
            "ln2_g": ones((embed_dim,)), "ln2_b": zeros((embed_dim,)),
            "fc1_w": w((embed_dim, hidden)), "fc1_b": zeros((hidden,)),
            "fc2_w": w((hidden, embed_dim)), "fc2_b": zeros((embed_dim,)),
        })

    return {
        "patch_w": w((in_chans * patch * patch, embed_dim)),
        "patch_b": zeros((embed_dim,)),
        "pos_embed": w((1, num_patches, embed_dim)),
        "blocks": blocks,
        "norm_g": ones((embed_dim,)), "norm_b": zeros((embed_dim,)),
        "cls": {
            "k_w": w((embed_dim, embed_dim)), "k_b": zeros((embed_dim,)),  # qkv_bias=True
            "v_w": w((embed_dim, embed_dim)), "v_b": zeros((embed_dim,)),
            "cls_token": w((1, 1, embed_dim)),
            "head_w": w((embed_dim, num_classes)), "head_b": zeros((num_classes,)),
        },
    }


# ----------------------------------------------------------------------------
if __name__ == "__main__":
    # Small, ViT-consistent config.
    B, C, H, W = 2, 3, 16, 16
    PATCH = 4
    EMBED_DIM = 32
    DEPTH = 2
    NUM_HEADS = 4
    MLP_RATIO = 4
    NUM_CLASSES = 16
    N_PATCHES = (H // PATCH) * (W // PATCH)   # 16 tokens

    root = jax.random.PRNGKey(0)
    k_params, k_x = jax.random.split(root)

    raw_params = init_params(
        k_params, in_chans=C, patch=PATCH, embed_dim=EMBED_DIM, depth=DEPTH,
        num_heads=NUM_HEADS, mlp_ratio=MLP_RATIO, num_classes=NUM_CLASSES,
        num_patches=N_PATCHES)
    params = prepare_params(raw_params, num_heads=NUM_HEADS)   # one-time folds/casts

    x = jax.random.normal(k_x, (B, C, H, W), jnp.float32)

    fwd = jax.jit(functools.partial(vit_forward, patch=PATCH, num_heads=NUM_HEADS))
    logits = fwd(params, x)
    jax.block_until_ready(logits)

    assert logits.shape == (B, NUM_CLASSES), logits.shape
    assert bool(jnp.all(jnp.isfinite(logits)))
    print("KERNEL_OK")
</pallas_src>

<mosaic_0001>
module attributes {stable_mosaic.version = 11 : i64} {
  func.func @_patch_embed_kernel(%arg0: i32, %arg1: memref<1x16x48xbf16, #tpu.memory_space<vmem>>, %arg2: memref<48x32xbf16, #tpu.memory_space<vmem>>, %arg3: memref<1x32xf32, #tpu.memory_space<vmem>>, %arg4: memref<16x32xf32, #tpu.memory_space<vmem>>, %arg5: memref<1x16x32xbf16, #tpu.memory_space<vmem>>) attributes {dimension_semantics = [#tpu.dimension_semantics<parallel>], iteration_bounds = array<i64: 2>, scalar_prefetch = 0 : i64, scratch_operands = 0 : i64, tpu.core_type = #tpu.core_type<tc>, window_params = [{transform_indices = @transform_0, window_bounds = array<i64: 1, 16, 48>}, {pipeline_mode = #tpu.pipeline_mode<synchronous>, transform_indices = @transform_1, window_bounds = array<i64: 48, 32>}, {pipeline_mode = #tpu.pipeline_mode<synchronous>, transform_indices = @transform_2, window_bounds = array<i64: 1, 32>}, {pipeline_mode = #tpu.pipeline_mode<synchronous>, transform_indices = @transform_3, window_bounds = array<i64: 16, 32>}, {transform_indices = @transform_4, window_bounds = array<i64: 1, 16, 32>}]} {
    %c0 = arith.constant 0 : index
    %c0_0 = arith.constant 0 : index
    %c0_1 = arith.constant 0 : index
    %0 = vector.load %arg1[%c0, %c0_0, %c0_1] : memref<1x16x48xbf16, #tpu.memory_space<vmem>>, vector<1x16x48xbf16>
    %1 = vector.shape_cast %0 : vector<1x16x48xbf16> to vector<16x48xbf16>
    %c0_2 = arith.constant 0 : index
    %c0_3 = arith.constant 0 : index
    %2 = vector.load %arg2[%c0_2, %c0_3] : memref<48x32xbf16, #tpu.memory_space<vmem>>, vector<48x32xbf16>
    %cst = arith.constant dense<0.000000e+00> : vector<16x32xf32>
    %3 = tpu.matmul %1, %2, %cst {dimension_numbers = #tpu.dot_dimension_numbers<[1], [0], [0], [1], [0, 0, 1, 1], [], []>} : vector<16x48xbf16>, vector<48x32xbf16>, vector<16x32xf32> -> vector<16x32xf32>
    %c0_4 = arith.constant 0 : index
    %c0_5 = arith.constant 0 : index
    %4 = vector.load %arg3[%c0_4, %c0_5] : memref<1x32xf32, #tpu.memory_space<vmem>>, vector<1x32xf32>
    %5 = vector.broadcast %4 : vector<1x32xf32> to vector<16x32xf32>
    %6 = arith.addf %3, %5 : vector<16x32xf32>
    %c0_6 = arith.constant 0 : index
    %c0_7 = arith.constant 0 : index
    %7 = vector.load %arg4[%c0_6, %c0_7] : memref<16x32xf32, #tpu.memory_space<vmem>>, vector<16x32xf32>
    %8 = arith.addf %6, %7 : vector<16x32xf32>
    %9 = arith.truncf %8 : vector<16x32xf32> to vector<16x32xbf16>
    %c0_8 = arith.constant 0 : index
    %c0_9 = arith.constant 0 : index
    %c0_10 = arith.constant 0 : index
    %10 = vector.load %arg5[%c0_8, %c0_9, %c0_10] : memref<1x16x32xbf16, #tpu.memory_space<vmem>>, vector<1x16x32xbf16>
    %11 = vector.shape_cast %10 : vector<1x16x32xbf16> to vector<16x32xbf16>
    %12 = vector.shape_cast %9 : vector<16x32xbf16> to vector<1x16x32xbf16>
    tpu.vector_store %arg5[%c0_8, %c0_9, %c0_10], %12 {strides = array<i32>} : memref<1x16x32xbf16, #tpu.memory_space<vmem>>, vector<1x16x32xbf16>,
    return
  }
  func.func @transform_0(%arg0: i32) -> (i32, i32, i32) {
    %c0_i32 = arith.constant 0 : i32
    %c0_i32_0 = arith.constant 0 : i32
    %c0_i32_1 = arith.constant 0 : i32
    return %arg0, %c0_i32, %c0_i32_0 : i32, i32, i32
  }
  func.func @transform_1(%arg0: i32) -> (i32, i32) {
    %c0_i32 = arith.constant 0 : i32
    %c0_i32_0 = arith.constant 0 : i32
    %c0_i32_1 = arith.constant 0 : i32
    return %c0_i32, %c0_i32_0 : i32, i32
  }
  func.func @transform_2(%arg0: i32) -> (i32, i32) {
    %c0_i32 = arith.constant 0 : i32
    %c0_i32_0 = arith.constant 0 : i32
    %c0_i32_1 = arith.constant 0 : i32
    return %c0_i32, %c0_i32_0 : i32, i32
  }
  func.func @transform_3(%arg0: i32) -> (i32, i32) {
    %c0_i32 = arith.constant 0 : i32
    %c0_i32_0 = arith.constant 0 : i32
    %c0_i32_1 = arith.constant 0 : i32
    return %c0_i32, %c0_i32_0 : i32, i32
  }
  func.func @transform_4(%arg0: i32) -> (i32, i32, i32) {
    %c0_i32 = arith.constant 0 : i32
    %c0_i32_0 = arith.constant 0 : i32
    %c0_i32_1 = arith.constant 0 : i32
    return %arg0, %c0_i32, %c0_i32_0 : i32, i32, i32
  }
}

module attributes {stable_mosaic.version = 11 : i64} {
  func.func @_ln_matmul_bias_kernel(%arg0: i32, %arg1: i32, %arg2: memref<32x32xbf16, #tpu.memory_space<vmem>>, %arg3: memref<1x32xf32, #tpu.memory_space<vmem>>, %arg4: memref<1x32xf32, #tpu.memory_space<vmem>>, %arg5: memref<32x96xbf16, #tpu.memory_space<vmem>>, %arg6: memref<1x96xf32, #tpu.memory_space<vmem>>, %arg7: memref<32x96xbf16, #tpu.memory_space<vmem>>, %arg8: memref<32x32xbf16, #tpu.memory_space<vmem>>) attributes {dimension_semantics = [#tpu.dimension_semantics<parallel>, #tpu.dimension_semantics<arbitrary>], iteration_bounds = array<i64: 1, 1>, scalar_prefetch = 0 : i64, scratch_operands = 1 : i64, tpu.core_type = #tpu.core_type<tc>, window_params = [{transform_indices = @transform_0, window_bounds = array<i64: 32, 32>}, {pipeline_mode = #tpu.pipeline_mode<synchronous>, transform_indices = @transform_1, window_bounds = array<i64: 1, 32>}, {pipeline_mode = #tpu.pipeline_mode<synchronous>, transform_indices = @transform_2, window_bounds = array<i64: 1, 32>}, {transform_indices = @transform_3, window_bounds = array<i64: 32, 96>}, {transform_indices = @transform_4, window_bounds = array<i64: 1, 96>}, {transform_indices = @transform_5, window_bounds = array<i64: 32, 96>}]} {
    %c0_i32 = arith.constant 0 : i32
    %0 = arith.cmpi eq, %arg1, %c0_i32 : i32
    %1 = arith.extui %0 : i1 to i32
    %c0_i32_0 = arith.constant 0 : i32
    %2 = arith.cmpi ne, %1, %c0_i32_0 : i32
    scf.if %2 {
      %c0_8 = arith.constant 0 : index
      %c0_9 = arith.constant 0 : index
      %11 = vector.load %arg2[%c0_8, %c0_9] : memref<32x32xbf16, #tpu.memory_space<vmem>>, vector<32x32xbf16>
      %12 = arith.extf %11 : vector<32x32xbf16> to vector<32x32xf32>
      %cst_10 = arith.constant dense<0.000000e+00> : vector<32xf32>
      %13 = vector.multi_reduction <add>, %12, %cst_10 [1] : vector<32x32xf32> to vector<32xf32>
      %14 = vector.shape_cast %13 : vector<32xf32> to vector<32x1xf32>
      %cst_11 = arith.constant 3.200000e+01 : f32
      %15 = vector.broadcast %cst_11 : f32 to vector<32x1xf32>
      %16 = arith.divf %14, %15 : vector<32x1xf32>
      %17 = vector.broadcast %16 : vector<32x1xf32> to vector<32x32xf32>
      %18 = arith.subf %12, %17 : vector<32x32xf32>
      %19 = arith.mulf %18, %18 : vector<32x32xf32>
      %cst_12 = arith.constant dense<0.000000e+00> : vector<32xf32>
      %20 = vector.multi_reduction <add>, %19, %cst_12 [1] : vector<32x32xf32> to vector<32xf32>
      %21 = vector.shape_cast %20 : vector<32xf32> to vector<32x1xf32>
      %cst_13 = arith.constant 3.200000e+01 : f32
      %22 = vector.broadcast %cst_13 : f32 to vector<32x1xf32>
      %23 = arith.divf %21, %22 : vector<32x1xf32>
      %24 = vector.broadcast %16 : vector<32x1xf32> to vector<32x32xf32>
      %25 = arith.subf %12, %24 : vector<32x32xf32>
      %cst_14 = arith.constant 9.99999997E-7 : f32
      %26 = vector.broadcast %cst_14 : f32 to vector<32x1xf32>
      %27 = arith.addf %23, %26 : vector<32x1xf32>
      %28 = math.rsqrt %27 : vector<32x1xf32>
      %29 = vector.broadcast %28 : vector<32x1xf32> to vector<32x32xf32>
      %30 = arith.mulf %25, %29 : vector<32x32xf32>
      %c0_15 = arith.constant 0 : index
      %c0_16 = arith.constant 0 : index
      %31 = vector.load %arg3[%c0_15, %c0_16] : memref<1x32xf32, #tpu.memory_space<vmem>>, vector<1x32xf32>
      %32 = vector.broadcast %31 : vector<1x32xf32> to vector<32x32xf32>
      %33 = arith.mulf %30, %32 : vector<32x32xf32>
      %c0_17 = arith.constant 0 : index
      %c0_18 = arith.constant 0 : index
      %34 = vector.load %arg4[%c0_17, %c0_18] : memref<1x32xf32, #tpu.memory_space<vmem>>, vector<1x32xf32>
      %35 = vector.broadcast %34 : vector<1x32xf32> to vector<32x32xf32>
      %36 = arith.addf %33, %35 : vector<32x32xf32>
      %37 = arith.truncf %36 : vector<32x32xf32> to vector<32x32xbf16>
      %c0_19 = arith.constant 0 : index
      %c0_20 = arith.constant 0 : index
      %38 = vector.load %arg8[%c0_19, %c0_20] : memref<32x32xbf16, #tpu.memory_space<vmem>>, vector<32x32xbf16>
      tpu.vector_store %arg8[%c0_19, %c0_20], %37 {strides = array<i32>} : memref<32x32xbf16, #tpu.memory_space<vmem>>, vector<32x32xbf16>,
    } else {
    }
    %c0 = arith.constant 0 : index
    %c0_1 = arith.constant 0 : index
    %3 = vector.load %arg8[%c0, %c0_1] : memref<32x32xbf16, #tpu.memory_space<vmem>>, vector<32x32xbf16>
    %c0_2 = arith.constant 0 : index
    %c0_3 = arith.constant 0 : index
    %4 = vector.load %arg5[%c0_2, %c0_3] : memref<32x96xbf16, #tpu.memory_space<vmem>>, vector<32x96xbf16>
    %cst = arith.constant dense<0.000000e+00> : vector<32x96xf32>
    %5 = tpu.matmul %3, %4, %cst {dimension_numbers = #tpu.dot_dimension_numbers<[1], [0], [0], [1], [0, 0, 1, 1], [], []>} : vector<32x32xbf16>, vector<32x96xbf16>, vector<32x96xf32> -> vector<32x96xf32>
    %c0_4 = arith.constant 0 : index
    %c0_5 = arith.constant 0 : index
    %6 = vector.load %arg6[%c0_4, %c0_5] : memref<1x96xf32, #tpu.memory_space<vmem>>, vector<1x96xf32>
    %7 = vector.broadcast %6 : vector<1x96xf32> to vector<32x96xf32>
    %8 = arith.addf %5, %7 : vector<32x96xf32>
    %9 = arith.truncf %8 : vector<32x96xf32> to vector<32x96xbf16>
    %c0_6 = arith.constant 0 : index
    %c0_7 = arith.constant 0 : index
    %10 = vector.load %arg7[%c0_6, %c0_7] : memref<32x96xbf16, #tpu.memory_space<vmem>>, vector<32x96xbf16>
    tpu.vector_store %arg7[%c0_6, %c0_7], %9 {strides = array<i32>} : memref<32x96xbf16, #tpu.memory_space<vmem>>, vector<32x96xbf16>,
    return
  }
  func.func @transform_0(%arg0: i32, %arg1: i32) -> (i32, i32) {
    %c0_i32 = arith.constant 0 : i32
    %c0_i32_0 = arith.constant 0 : i32
    return %arg0, %c0_i32 : i32, i32
  }
  func.func @transform_1(%arg0: i32, %arg1: i32) -> (i32, i32) {
    %c0_i32 = arith.constant 0 : i32
    %c0_i32_0 = arith.constant 0 : i32
    %c0_i32_1 = arith.constant 0 : i32
    return %c0_i32, %c0_i32_0 : i32, i32
  }
  func.func @transform_2(%arg0: i32, %arg1: i32) -> (i32, i32) {
    %c0_i32 = arith.constant 0 : i32
    %c0_i32_0 = arith.constant 0 : i32
    %c0_i32_1 = arith.constant 0 : i32
    return %c0_i32, %c0_i32_0 : i32, i32
  }
  func.func @transform_3(%arg0: i32, %arg1: i32) -> (i32, i32) {
    %c0_i32 = arith.constant 0 : i32
    %c0_i32_0 = arith.constant 0 : i32
    return %c0_i32, %arg1 : i32, i32
  }
  func.func @transform_4(%arg0: i32, %arg1: i32) -> (i32, i32) {
    %c0_i32 = arith.constant 0 : i32
    %c0_i32_0 = arith.constant 0 : i32
    return %c0_i32, %arg1 : i32, i32
  }
  func.func @transform_5(%arg0: i32, %arg1: i32) -> (i32, i32) {
    %c0_i32 = arith.constant 0 : i32
    return %arg0, %arg1 : i32, i32
  }
}

module attributes {stable_mosaic.version = 11 : i64} {
  func.func @_mha_kernel(%arg0: i32, %arg1: memref<1x16x96xbf16, #tpu.memory_space<vmem>>, %arg2: memref<1x16x32xbf16, #tpu.memory_space<vmem>>) attributes {dimension_semantics = [#tpu.dimension_semantics<parallel>], iteration_bounds = array<i64: 2>, scalar_prefetch = 0 : i64, scratch_operands = 0 : i64, tpu.core_type = #tpu.core_type<tc>, window_params = [{transform_indices = @transform_0, window_bounds = array<i64: 1, 16, 96>}, {transform_indices = @transform_1, window_bounds = array<i64: 1, 16, 32>}]} {
    %c0 = arith.constant 0 : index
    %c0_0 = arith.constant 0 : index
    %c0_1 = arith.constant 0 : index
    %0 = vector.load %arg1[%c0, %c0_0, %c0_1] : memref<1x16x96xbf16, #tpu.memory_space<vmem>>, vector<1x16x8xbf16>
    %1 = vector.shape_cast %0 : vector<1x16x8xbf16> to vector<16x8xbf16>
    %c0_2 = arith.constant 0 : index
    %c0_3 = arith.constant 0 : index
    %c32 = arith.constant 32 : index
    %2 = vector.load %arg1[%c0_2, %c0_3, %c32] : memref<1x16x96xbf16, #tpu.memory_space<vmem>>, vector<1x16x8xbf16>
    %3 = vector.shape_cast %2 : vector<1x16x8xbf16> to vector<16x8xbf16>
    %c0_4 = arith.constant 0 : index
    %c0_5 = arith.constant 0 : index
    %c64 = arith.constant 64 : index
    %4 = vector.load %arg1[%c0_4, %c0_5, %c64] : memref<1x16x96xbf16, #tpu.memory_space<vmem>>, vector<1x16x8xbf16>
    %5 = vector.shape_cast %4 : vector<1x16x8xbf16> to vector<16x8xbf16>
    %cst = arith.constant dense<0.000000e+00> : vector<16x16xf32>
    %6 = tpu.matmul %1, %3, %cst {dimension_numbers = #tpu.dot_dimension_numbers<[1], [1], [0], [0], [0, 0, 1, 0], [], []>} : vector<16x8xbf16>, vector<16x8xbf16>, vector<16x16xf32> -> vector<16x16xf32>
    %cst_6 = arith.constant dense<0xFF800000> : vector<16xf32>
    %7 = vector.multi_reduction <maximumf>, %6, %cst_6 [1] : vector<16x16xf32> to vector<16xf32>
    %8 = vector.shape_cast %7 : vector<16xf32> to vector<16x1xf32>
    %9 = vector.broadcast %8 : vector<16x1xf32> to vector<16x16xf32>
    %10 = arith.subf %6, %9 : vector<16x16xf32>
    %11 = math.exp %10 : vector<16x16xf32>
    %cst_7 = arith.constant dense<0.000000e+00> : vector<16xf32>
    %12 = vector.multi_reduction <add>, %11, %cst_7 [1] : vector<16x16xf32> to vector<16xf32>
    %13 = vector.shape_cast %12 : vector<16xf32> to vector<16x1xf32>
    %14 = arith.truncf %11 : vector<16x16xf32> to vector<16x16xbf16>
    %cst_8 = arith.constant dense<0.000000e+00> : vector<16x8xf32>
    %15 = tpu.matmul %14, %5, %cst_8 {dimension_numbers = #tpu.dot_dimension_numbers<[1], [0], [0], [1], [0, 0, 1, 1], [], []>} : vector<16x16xbf16>, vector<16x8xbf16>, vector<16x8xf32> -> vector<16x8xf32>
    %16 = tpu.reciprocal %13 {approx = true} : vector<16x1xf32> -> vector<16x1xf32>
    %17 = vector.broadcast %16 : vector<16x1xf32> to vector<16x8xf32>
    %18 = arith.mulf %15, %17 : vector<16x8xf32>
    %19 = arith.truncf %18 : vector<16x8xf32> to vector<16x8xbf16>
    %c0_9 = arith.constant 0 : index
    %c0_10 = arith.constant 0 : index
    %c0_11 = arith.constant 0 : index
    %20 = vector.load %arg2[%c0_9, %c0_10, %c0_11] : memref<1x16x32xbf16, #tpu.memory_space<vmem>>, vector<1x16x8xbf16>
    %21 = vector.shape_cast %20 : vector<1x16x8xbf16> to vector<16x8xbf16>
    %22 = vector.shape_cast %19 : vector<16x8xbf16> to vector<1x16x8xbf16>
    tpu.vector_store %arg2[%c0_9, %c0_10, %c0_11], %22 {strides = array<i32>} : memref<1x16x32xbf16, #tpu.memory_space<vmem>>, vector<1x16x8xbf16>,
    %c0_12 = arith.constant 0 : index
    %c0_13 = arith.constant 0 : index
    %c8 = arith.constant 8 : index
    %23 = vector.load %arg1[%c0_12, %c0_13, %c8] : memref<1x16x96xbf16, #tpu.memory_space<vmem>>, vector<1x16x8xbf16>
    %24 = vector.shape_cast %23 : vector<1x16x8xbf16> to vector<16x8xbf16>
    %c0_14 = arith.constant 0 : index
    %c0_15 = arith.constant 0 : index
    %c40 = arith.constant 40 : index
    %25 = vector.load %arg1[%c0_14, %c0_15, %c40] : memref<1x16x96xbf16, #tpu.memory_space<vmem>>, vector<1x16x8xbf16>
    %26 = vector.shape_cast %25 : vector<1x16x8xbf16> to vector<16x8xbf16>
    %c0_16 = arith.constant 0 : index
    %c0_17 = arith.constant 0 : index
    %c72 = arith.constant 72 : index
    %27 = vector.load %arg1[%c0_16, %c0_17, %c72] : memref<1x16x96xbf16, #tpu.memory_space<vmem>>, vector<1x16x8xbf16>
    %28 = vector.shape_cast %27 : vector<1x16x8xbf16> to vector<16x8xbf16>
    %cst_18 = arith.constant dense<0.000000e+00> : vector<16x16xf32>
    %29 = tpu.matmul %24, %26, %cst_18 {dimension_numbers = #tpu.dot_dimension_numbers<[1], [1], [0], [0], [0, 0, 1, 0], [], []>} : vector<16x8xbf16>, vector<16x8xbf16>, vector<16x16xf32> -> vector<16x16xf32>
    %cst_19 = arith.constant dense<0xFF800000> : vector<16xf32>
    %30 = vector.multi_reduction <maximumf>, %29, %cst_19 [1] : vector<16x16xf32> to vector<16xf32>
    %31 = vector.shape_cast %30 : vector<16xf32> to vector<16x1xf32>
    %32 = vector.broadcast %31 : vector<16x1xf32> to vector<16x16xf32>
    %33 = arith.subf %29, %32 : vector<16x16xf32>
    %34 = math.exp %33 : vector<16x16xf32>
    %cst_20 = arith.constant dense<0.000000e+00> : vector<16xf32>
    %35 = vector.multi_reduction <add>, %34, %cst_20 [1] : vector<16x16xf32> to vector<16xf32>
    %36 = vector.shape_cast %35 : vector<16xf32> to vector<16x1xf32>
    %37 = arith.truncf %34 : vector<16x16xf32> to vector<16x16xbf16>
    %cst_21 = arith.constant dense<0.000000e+00> : vector<16x8xf32>
    %38 = tpu.matmul %37, %28, %cst_21 {dimension_numbers = #tpu.dot_dimension_numbers<[1], [0], [0], [1], [0, 0, 1, 1], [], []>} : vector<16x16xbf16>, vector<16x8xbf16>, vector<16x8xf32> -> vector<16x8xf32>
    %39 = tpu.reciprocal %36 {approx = true} : vector<16x1xf32> -> vector<16x1xf32>
    %40 = vector.broadcast %39 : vector<16x1xf32> to vector<16x8xf32>
    %41 = arith.mulf %38, %40 : vector<16x8xf32>
    %42 = arith.truncf %41 : vector<16x8xf32> to vector<16x8xbf16>
    %c0_22 = arith.constant 0 : index
    %c0_23 = arith.constant 0 : index
    %c8_24 = arith.constant 8 : index
    %43 = vector.load %arg2[%c0_22, %c0_23, %c8_24] : memref<1x16x32xbf16, #tpu.memory_space<vmem>>, vector<1x16x8xbf16>
    %44 = vector.shape_cast %43 : vector<1x16x8xbf16> to vector<16x8xbf16>
    %45 = vector.shape_cast %42 : vector<16x8xbf16> to vector<1x16x8xbf16>
    tpu.vector_store %arg2[%c0_22, %c0_23, %c8_24], %45 {strides = array<i32>} : memref<1x16x32xbf16, #tpu.memory_space<vmem>>, vector<1x16x8xbf16>,
    %c0_25 = arith.constant 0 : index
    %c0_26 = arith.constant 0 : index
    %c16 = arith.constant 16 : index
    %46 = vector.load %arg1[%c0_25, %c0_26, %c16] : memref<1x16x96xbf16, #tpu.memory_space<vmem>>, vector<1x16x8xbf16>
    %47 = vector.shape_cast %46 : vector<1x16x8xbf16> to vector<16x8xbf16>
    %c0_27 = arith.constant 0 : index
    %c0_28 = arith.constant 0 : index
    %c48 = arith.constant 48 : index
    %48 = vector.load %arg1[%c0_27, %c0_28, %c48] : memref<1x16x96xbf16, #tpu.memory_space<vmem>>, vector<1x16x8xbf16>
    %49 = vector.shape_cast %48 : vector<1x16x8xbf16> to vector<16x8xbf16>
    %c0_29 = arith.constant 0 : index
    %c0_30 = arith.constant 0 : index
    %c80 = arith.constant 80 : index
    %50 = vector.load %arg1[%c0_29, %c0_30, %c80] : memref<1x16x96xbf16, #tpu.memory_space<vmem>>, vector<1x16x8xbf16>
    %51 = vector.shape_cast %50 : vector<1x16x8xbf16> to vector<16x8xbf16>
    %cst_31 = arith.constant dense<0.000000e+00> : vector<16x16xf32>
    %52 = tpu.matmul %47, %49, %cst_31 {dimension_numbers = #tpu.dot_dimension_numbers<[1], [1], [0], [0], [0, 0, 1, 0], [], []>} : vector<16x8xbf16>, vector<16x8xbf16>, vector<16x16xf32> -> vector<16x16xf32>
    %cst_32 = arith.constant dense<0xFF800000> : vector<16xf32>
    %53 = vector.multi_reduction <maximumf>, %52, %cst_32 [1] : vector<16x16xf32> to vector<16xf32>
    %54 = vector.shape_cast %53 : vector<16xf32> to vector<16x1xf32>
    %55 = vector.broadcast %54 : vector<16x1xf32> to vector<16x16xf32>
    %56 = arith.subf %52, %55 : vector<16x16xf32>
    %57 = math.exp %56 : vector<16x16xf32>
    %cst_33 = arith.constant dense<0.000000e+00> : vector<16xf32>
    %58 = vector.multi_reduction <add>, %57, %cst_33 [1] : vector<16x16xf32> to vector<16xf32>
    %59 = vector.shape_cast %58 : vector<16xf32> to vector<16x1xf32>
    %60 = arith.truncf %57 : vector<16x16xf32> to vector<16x16xbf16>
    %cst_34 = arith.constant dense<0.000000e+00> : vector<16x8xf32>
    %61 = tpu.matmul %60, %51, %cst_34 {dimension_numbers = #tpu.dot_dimension_numbers<[1], [0], [0], [1], [0, 0, 1, 1], [], []>} : vector<16x16xbf16>, vector<16x8xbf16>, vector<16x8xf32> -> vector<16x8xf32>
    %62 = tpu.reciprocal %59 {approx = true} : vector<16x1xf32> -> vector<16x1xf32>
    %63 = vector.broadcast %62 : vector<16x1xf32> to vector<16x8xf32>
    %64 = arith.mulf %61, %63 : vector<16x8xf32>
    %65 = arith.truncf %64 : vector<16x8xf32> to vector<16x8xbf16>
    %c0_35 = arith.constant 0 : index
    %c0_36 = arith.constant 0 : index
    %c16_37 = arith.constant 16 : index
    %66 = vector.load %arg2[%c0_35, %c0_36, %c16_37] : memref<1x16x32xbf16, #tpu.memory_space<vmem>>, vector<1x16x8xbf16>
    %67 = vector.shape_cast %66 : vector<1x16x8xbf16> to vector<16x8xbf16>
    %68 = vector.shape_cast %65 : vector<16x8xbf16> to vector<1x16x8xbf16>
    tpu.vector_store %arg2[%c0_35, %c0_36, %c16_37], %68 {strides = array<i32>} : memref<1x16x32xbf16, #tpu.memory_space<vmem>>, vector<1x16x8xbf16>,
    %c0_38 = arith.constant 0 : index
    %c0_39 = arith.constant 0 : index
    %c24 = arith.constant 24 : index
    %69 = vector.load %arg1[%c0_38, %c0_39, %c24] : memref<1x16x96xbf16, #tpu.memory_space<vmem>>, vector<1x16x8xbf16>
    %70 = vector.shape_cast %69 : vector<1x16x8xbf16> to vector<16x8xbf16>
    %c0_40 = arith.constant 0 : index
    %c0_41 = arith.constant 0 : index
    %c56 = arith.constant 56 : index
    %71 = vector.load %arg1[%c0_40, %c0_41, %c56] : memref<1x16x96xbf16, #tpu.memory_space<vmem>>, vector<1x16x8xbf16>
    %72 = vector.shape_cast %71 : vector<1x16x8xbf16> to vector<16x8xbf16>
    %c0_42 = arith.constant 0 : index
    %c0_43 = arith.constant 0 : index
    %c88 = arith.constant 88 : index
    %73 = vector.load %arg1[%c0_42, %c0_43, %c88] : memref<1x16x96xbf16, #tpu.memory_space<vmem>>, vector<1x16x8xbf16>
    %74 = vector.shape_cast %73 : vector<1x16x8xbf16> to vector<16x8xbf16>
    %cst_44 = arith.constant dense<0.000000e+00> : vector<16x16xf32>
    %75 = tpu.matmul %70, %72, %cst_44 {dimension_numbers = #tpu.dot_dimension_numbers<[1], [1], [0], [0], [0, 0, 1, 0], [], []>} : vector<16x8xbf16>, vector<16x8xbf16>, vector<16x16xf32> -> vector<16x16xf32>
    %cst_45 = arith.constant dense<0xFF800000> : vector<16xf32>
    %76 = vector.multi_reduction <maximumf>, %75, %cst_45 [1] : vector<16x16xf32> to vector<16xf32>
    %77 = vector.shape_cast %76 : vector<16xf32> to vector<16x1xf32>
    %78 = vector.broadcast %77 : vector<16x1xf32> to vector<16x16xf32>
    %79 = arith.subf %75, %78 : vector<16x16xf32>
    %80 = math.exp %79 : vector<16x16xf32>
    %cst_46 = arith.constant dense<0.000000e+00> : vector<16xf32>
    %81 = vector.multi_reduction <add>, %80, %cst_46 [1] : vector<16x16xf32> to vector<16xf32>
    %82 = vector.shape_cast %81 : vector<16xf32> to vector<16x1xf32>
    %83 = arith.truncf %80 : vector<16x16xf32> to vector<16x16xbf16>
    %cst_47 = arith.constant dense<0.000000e+00> : vector<16x8xf32>
    %84 = tpu.matmul %83, %74, %cst_47 {dimension_numbers = #tpu.dot_dimension_numbers<[1], [0], [0], [1], [0, 0, 1, 1], [], []>} : vector<16x16xbf16>, vector<16x8xbf16>, vector<16x8xf32> -> vector<16x8xf32>
    %85 = tpu.reciprocal %82 {approx = true} : vector<16x1xf32> -> vector<16x1xf32>
    %86 = vector.broadcast %85 : vector<16x1xf32> to vector<16x8xf32>
    %87 = arith.mulf %84, %86 : vector<16x8xf32>
    %88 = arith.truncf %87 : vector<16x8xf32> to vector<16x8xbf16>
    %c0_48 = arith.constant 0 : index
    %c0_49 = arith.constant 0 : index
    %c24_50 = arith.constant 24 : index
    %89 = vector.load %arg2[%c0_48, %c0_49, %c24_50] : memref<1x16x32xbf16, #tpu.memory_space<vmem>>, vector<1x16x8xbf16>
    %90 = vector.shape_cast %89 : vector<1x16x8xbf16> to vector<16x8xbf16>
    %91 = vector.shape_cast %88 : vector<16x8xbf16> to vector<1x16x8xbf16>
    tpu.vector_store %arg2[%c0_48, %c0_49, %c24_50], %91 {strides = array<i32>} : memref<1x16x32xbf16, #tpu.memory_space<vmem>>, vector<1x16x8xbf16>,
    return
  }
  func.func @transform_0(%arg0: i32) -> (i32, i32, i32) {
    %c0_i32 = arith.constant 0 : i32
    %c0_i32_0 = arith.constant 0 : i32
    %c0_i32_1 = arith.constant 0 : i32
    return %arg0, %c0_i32, %c0_i32_0 : i32, i32, i32
  }
  func.func @transform_1(%arg0: i32) -> (i32, i32, i32) {
    %c0_i32 = arith.constant 0 : i32
    %c0_i32_0 = arith.constant 0 : i32
    %c0_i32_1 = arith.constant 0 : i32
    return %arg0, %c0_i32, %c0_i32_0 : i32, i32, i32
  }
}

module attributes {stable_mosaic.version = 11 : i64} {
  func.func @_matmul_bias_kernel(%arg0: i32, %arg1: i32, %arg2: i32, %arg3: memref<32x32xbf16, #tpu.memory_space<vmem>>, %arg4: memref<32x32xbf16, #tpu.memory_space<vmem>>, %arg5: memref<1x32xf32, #tpu.memory_space<vmem>>, %arg6: memref<32x32xbf16, #tpu.memory_space<vmem>>, %arg7: memref<32x32xbf16, #tpu.memory_space<vmem>>, %arg8: memref<32x32xf32, #tpu.memory_space<vmem>>) attributes {dimension_semantics = [#tpu.dimension_semantics<parallel>, #tpu.dimension_semantics<parallel>, #tpu.dimension_semantics<arbitrary>], iteration_bounds = array<i64: 1, 1, 1>, scalar_prefetch = 0 : i64, scratch_operands = 1 : i64, tpu.core_type = #tpu.core_type<tc>, window_params = [{transform_indices = @transform_0, window_bounds = array<i64: 32, 32>}, {transform_indices = @transform_1, window_bounds = array<i64: 32, 32>}, {transform_indices = @transform_2, window_bounds = array<i64: 1, 32>}, {transform_indices = @transform_3, window_bounds = array<i64: 32, 32>}, {transform_indices = @transform_4, window_bounds = array<i64: 32, 32>}]} {
    %c0_i32 = arith.constant 0 : i32
    %0 = arith.cmpi eq, %arg2, %c0_i32 : i32
    %1 = arith.extui %0 : i1 to i32
    %c0_i32_0 = arith.constant 0 : i32
    %2 = arith.cmpi ne, %1, %c0_i32_0 : i32
    scf.if %2 {
      %cst_10 = arith.constant 0.000000e+00 : f32
      %12 = vector.broadcast %cst_10 : f32 to vector<32x32xf32>
      %c0_11 = arith.constant 0 : index
      %c0_12 = arith.constant 0 : index
      %13 = vector.load %arg8[%c0_11, %c0_12] : memref<32x32xf32, #tpu.memory_space<vmem>>, vector<32x32xf32>
      tpu.vector_store %arg8[%c0_11, %c0_12], %12 {strides = array<i32>} : memref<32x32xf32, #tpu.memory_space<vmem>>, vector<32x32xf32>,
    } else {
    }
    %c0 = arith.constant 0 : index
    %c0_1 = arith.constant 0 : index
    %3 = vector.load %arg8[%c0, %c0_1] : memref<32x32xf32, #tpu.memory_space<vmem>>, vector<32x32xf32>
    %c0_2 = arith.constant 0 : index
    %c0_3 = arith.constant 0 : index
    %4 = vector.load %arg3[%c0_2, %c0_3] : memref<32x32xbf16, #tpu.memory_space<vmem>>, vector<32x32xbf16>
    %c0_4 = arith.constant 0 : index
    %c0_5 = arith.constant 0 : index
    %5 = vector.load %arg4[%c0_4, %c0_5] : memref<32x32xbf16, #tpu.memory_space<vmem>>, vector<32x32xbf16>
    %cst = arith.constant dense<0.000000e+00> : vector<32x32xf32>
    %6 = tpu.matmul %4, %5, %cst {dimension_numbers = #tpu.dot_dimension_numbers<[1], [0], [0], [1], [0, 0, 1, 1], [], []>} : vector<32x32xbf16>, vector<32x32xbf16>, vector<32x32xf32> -> vector<32x32xf32>
    %7 = arith.addf %3, %6 : vector<32x32xf32>
    %c0_6 = arith.constant 0 : index
    %c0_7 = arith.constant 0 : index
    %8 = vector.load %arg8[%c0_6, %c0_7] : memref<32x32xf32, #tpu.memory_space<vmem>>, vector<32x32xf32>
    tpu.vector_store %arg8[%c0_6, %c0_7], %7 {strides = array<i32>} : memref<32x32xf32, #tpu.memory_space<vmem>>, vector<32x32xf32>,
    %c0_i32_8 = arith.constant 0 : i32
    %9 = arith.cmpi eq, %arg2, %c0_i32_8 : i32
    %10 = arith.extui %9 : i1 to i32
    %c0_i32_9 = arith.constant 0 : i32
    %11 = arith.cmpi ne, %10, %c0_i32_9 : i32
    scf.if %11 {
      %c0_10 = arith.constant 0 : index
      %c0_11 = arith.constant 0 : index
      %12 = vector.load %arg8[%c0_10, %c0_11] : memref<32x32xf32, #tpu.memory_space<vmem>>, vector<32x32xf32>
      %c0_12 = arith.constant 0 : index
      %c0_13 = arith.constant 0 : index
      %13 = vector.load %arg5[%c0_12, %c0_13] : memref<1x32xf32, #tpu.memory_space<vmem>>, vector<1x32xf32>
      %14 = vector.broadcast %13 : vector<1x32xf32> to vector<32x32xf32>
      %15 = arith.addf %12, %14 : vector<32x32xf32>
      %c0_14 = arith.constant 0 : index
      %c0_15 = arith.constant 0 : index
      %16 = vector.load %arg6[%c0_14, %c0_15] : memref<32x32xbf16, #tpu.memory_space<vmem>>, vector<32x32xbf16>
      %17 = arith.extf %16 : vector<32x32xbf16> to vector<32x32xf32>
      %18 = arith.addf %15, %17 : vector<32x32xf32>
      %19 = arith.truncf %18 : vector<32x32xf32> to vector<32x32xbf16>
      %c0_16 = arith.constant 0 : index
      %c0_17 = arith.constant 0 : index
      %20 = vector.load %arg7[%c0_16, %c0_17] : memref<32x32xbf16, #tpu.memory_space<vmem>>, vector<32x32xbf16>
      tpu.vector_store %arg7[%c0_16, %c0_17], %19 {strides = array<i32>} : memref<32x32xbf16, #tpu.memory_space<vmem>>, vector<32x32xbf16>,
    } else {
    }
    return
  }
  func.func @transform_0(%arg0: i32, %arg1: i32, %arg2: i32) -> (i32, i32) {
    %c0_i32 = arith.constant 0 : i32
    return %arg0, %arg2 : i32, i32
  }
  func.func @transform_1(%arg0: i32, %arg1: i32, %arg2: i32) -> (i32, i32) {
    %c0_i32 = arith.constant 0 : i32
    return %arg2, %arg1 : i32, i32
  }
  func.func @transform_2(%arg0: i32, %arg1: i32, %arg2: i32) -> (i32, i32) {
    %c0_i32 = arith.constant 0 : i32
    %c0_i32_0 = arith.constant 0 : i32
    return %c0_i32, %arg1 : i32, i32
  }
  func.func @transform_3(%arg0: i32, %arg1: i32, %arg2: i32) -> (i32, i32) {
    %c0_i32 = arith.constant 0 : i32
    return %arg0, %arg1 : i32, i32
  }
  func.func @transform_4(%arg0: i32, %arg1: i32, %arg2: i32) -> (i32, i32) {
    %c0_i32 = arith.constant 0 : i32
    return %arg0, %arg1 : i32, i32
  }
}

module attributes {stable_mosaic.version = 11 : i64} {
  func.func @_ln_matmul_bias_kernel(%arg0: i32, %arg1: i32, %arg2: memref<32x32xbf16, #tpu.memory_space<vmem>>, %arg3: memref<1x32xf32, #tpu.memory_space<vmem>>, %arg4: memref<1x32xf32, #tpu.memory_space<vmem>>, %arg5: memref<32x128xbf16, #tpu.memory_space<vmem>>, %arg6: memref<1x128xf32, #tpu.memory_space<vmem>>, %arg7: memref<32x128xbf16, #tpu.memory_space<vmem>>, %arg8: memref<32x32xbf16, #tpu.memory_space<vmem>>) attributes {dimension_semantics = [#tpu.dimension_semantics<parallel>, #tpu.dimension_semantics<arbitrary>], iteration_bounds = array<i64: 1, 1>, scalar_prefetch = 0 : i64, scratch_operands = 1 : i64, tpu.core_type = #tpu.core_type<tc>, window_params = [{transform_indices = @transform_0, window_bounds = array<i64: 32, 32>}, {pipeline_mode = #tpu.pipeline_mode<synchronous>, transform_indices = @transform_1, window_bounds = array<i64: 1, 32>}, {pipeline_mode = #tpu.pipeline_mode<synchronous>, transform_indices = @transform_2, window_bounds = array<i64: 1, 32>}, {transform_indices = @transform_3, window_bounds = array<i64: 32, 128>}, {transform_indices = @transform_4, window_bounds = array<i64: 1, 128>}, {transform_indices = @transform_5, window_bounds = array<i64: 32, 128>}]} {
    %c0_i32 = arith.constant 0 : i32
    %0 = arith.cmpi eq, %arg1, %c0_i32 : i32
    %1 = arith.extui %0 : i1 to i32
    %c0_i32_0 = arith.constant 0 : i32
    %2 = arith.cmpi ne, %1, %c0_i32_0 : i32
    scf.if %2 {
      %c0_12 = arith.constant 0 : index
      %c0_13 = arith.constant 0 : index
      %24 = vector.load %arg2[%c0_12, %c0_13] : memref<32x32xbf16, #tpu.memory_space<vmem>>, vector<32x32xbf16>
      %25 = arith.extf %24 : vector<32x32xbf16> to vector<32x32xf32>
      %cst_14 = arith.constant dense<0.000000e+00> : vector<32xf32>
      %26 = vector.multi_reduction <add>, %25, %cst_14 [1] : vector<32x32xf32> to vector<32xf32>
      %27 = vector.shape_cast %26 : vector<32xf32> to vector<32x1xf32>
      %cst_15 = arith.constant 3.200000e+01 : f32
      %28 = vector.broadcast %cst_15 : f32 to vector<32x1xf32>
      %29 = arith.divf %27, %28 : vector<32x1xf32>
      %30 = vector.broadcast %29 : vector<32x1xf32> to vector<32x32xf32>
      %31 = arith.subf %25, %30 : vector<32x32xf32>
      %32 = arith.mulf %31, %31 : vector<32x32xf32>
      %cst_16 = arith.constant dense<0.000000e+00> : vector<32xf32>
      %33 = vector.multi_reduction <add>, %32, %cst_16 [1] : vector<32x32xf32> to vector<32xf32>
      %34 = vector.shape_cast %33 : vector<32xf32> to vector<32x1xf32>
      %cst_17 = arith.constant 3.200000e+01 : f32
      %35 = vector.broadcast %cst_17 : f32 to vector<32x1xf32>
      %36 = arith.divf %34, %35 : vector<32x1xf32>
      %37 = vector.broadcast %29 : vector<32x1xf32> to vector<32x32xf32>
      %38 = arith.subf %25, %37 : vector<32x32xf32>
      %cst_18 = arith.constant 9.99999997E-7 : f32
      %39 = vector.broadcast %cst_18 : f32 to vector<32x1xf32>
      %40 = arith.addf %36, %39 : vector<32x1xf32>
      %41 = math.rsqrt %40 : vector<32x1xf32>
      %42 = vector.broadcast %41 : vector<32x1xf32> to vector<32x32xf32>
      %43 = arith.mulf %38, %42 : vector<32x32xf32>
      %c0_19 = arith.constant 0 : index
      %c0_20 = arith.constant 0 : index
      %44 = vector.load %arg3[%c0_19, %c0_20] : memref<1x32xf32, #tpu.memory_space<vmem>>, vector<1x32xf32>
      %45 = vector.broadcast %44 : vector<1x32xf32> to vector<32x32xf32>
      %46 = arith.mulf %43, %45 : vector<32x32xf32>
      %c0_21 = arith.constant 0 : index
      %c0_22 = arith.constant 0 : index
      %47 = vector.load %arg4[%c0_21, %c0_22] : memref<1x32xf32, #tpu.memory_space<vmem>>, vector<1x32xf32>
      %48 = vector.broadcast %47 : vector<1x32xf32> to vector<32x32xf32>
      %49 = arith.addf %46, %48 : vector<32x32xf32>
      %50 = arith.truncf %49 : vector<32x32xf32> to vector<32x32xbf16>
      %c0_23 = arith.constant 0 : index
      %c0_24 = arith.constant 0 : index
      %51 = vector.load %arg8[%c0_23, %c0_24] : memref<32x32xbf16, #tpu.memory_space<vmem>>, vector<32x32xbf16>
      tpu.vector_store %arg8[%c0_23, %c0_24], %50 {strides = array<i32>} : memref<32x32xbf16, #tpu.memory_space<vmem>>, vector<32x32xbf16>,
    } else {
    }
    %c0 = arith.constant 0 : index
    %c0_1 = arith.constant 0 : index
    %3 = vector.load %arg8[%c0, %c0_1] : memref<32x32xbf16, #tpu.memory_space<vmem>>, vector<32x32xbf16>
    %c0_2 = arith.constant 0 : index
    %c0_3 = arith.constant 0 : index
    %4 = vector.load %arg5[%c0_2, %c0_3] : memref<32x128xbf16, #tpu.memory_space<vmem>>, vector<32x128xbf16>
    %cst = arith.constant dense<0.000000e+00> : vector<32x128xf32>
    %5 = tpu.matmul %3, %4, %cst {dimension_numbers = #tpu.dot_dimension_numbers<[1], [0], [0], [1], [0, 0, 1, 1], [], []>} : vector<32x32xbf16>, vector<32x128xbf16>, vector<32x128xf32> -> vector<32x128xf32>
    %c0_4 = arith.constant 0 : index
    %c0_5 = arith.constant 0 : index
    %6 = vector.load %arg6[%c0_4, %c0_5] : memref<1x128xf32, #tpu.memory_space<vmem>>, vector<1x128xf32>
    %7 = vector.broadcast %6 : vector<1x128xf32> to vector<32x128xf32>
    %8 = arith.addf %5, %7 : vector<32x128xf32>
    %9 = arith.mulf %8, %8 : vector<32x128xf32>
    %10 = arith.mulf %8, %9 : vector<32x128xf32>
    %cst_6 = arith.constant 4.471500e-02 : f32
    %11 = vector.broadcast %cst_6 : f32 to vector<32x128xf32>
    %12 = arith.mulf %11, %10 : vector<32x128xf32>
    %13 = arith.addf %8, %12 : vector<32x128xf32>
    %cst_7 = arith.constant 0.797884583 : f32
    %14 = vector.broadcast %cst_7 : f32 to vector<32x128xf32>
    %15 = arith.mulf %14, %13 : vector<32x128xf32>
    %16 = math.tanh %15 : vector<32x128xf32>
    %cst_8 = arith.constant 1.000000e+00 : f32
    %17 = vector.broadcast %cst_8 : f32 to vector<32x128xf32>
    %18 = arith.addf %17, %16 : vector<32x128xf32>
    %cst_9 = arith.constant 5.000000e-01 : f32
    %19 = vector.broadcast %cst_9 : f32 to vector<32x128xf32>
    %20 = arith.mulf %19, %18 : vector<32x128xf32>
    %21 = arith.mulf %8, %20 : vector<32x128xf32>
    %22 = arith.truncf %21 : vector<32x128xf32> to vector<32x128xbf16>
    %c0_10 = arith.constant 0 : index
    %c0_11 = arith.constant 0 : index
    %23 = vector.load %arg7[%c0_10, %c0_11] : memref<32x128xbf16, #tpu.memory_space<vmem>>, vector<32x128xbf16>
    tpu.vector_store %arg7[%c0_10, %c0_11], %22 {strides = array<i32>} : memref<32x128xbf16, #tpu.memory_space<vmem>>, vector<32x128xbf16>,
    return
  }
  func.func @transform_0(%arg0: i32, %arg1: i32) -> (i32, i32) {
    %c0_i32 = arith.constant 0 : i32
    %c0_i32_0 = arith.constant 0 : i32
    return %arg0, %c0_i32 : i32, i32
  }
  func.func @transform_1(%arg0: i32, %arg1: i32) -> (i32, i32) {
    %c0_i32 = arith.constant 0 : i32
    %c0_i32_0 = arith.constant 0 : i32
    %c0_i32_1 = arith.constant 0 : i32
    return %c0_i32, %c0_i32_0 : i32, i32
  }
  func.func @transform_2(%arg0: i32, %arg1: i32) -> (i32, i32) {
    %c0_i32 = arith.constant 0 : i32
    %c0_i32_0 = arith.constant 0 : i32
    %c0_i32_1 = arith.constant 0 : i32
    return %c0_i32, %c0_i32_0 : i32, i32
  }
  func.func @transform_3(%arg0: i32, %arg1: i32) -> (i32, i32) {
    %c0_i32 = arith.constant 0 : i32
    %c0_i32_0 = arith.constant 0 : i32
    return %c0_i32, %arg1 : i32, i32
  }
  func.func @transform_4(%arg0: i32, %arg1: i32) -> (i32, i32) {
    %c0_i32 = arith.constant 0 : i32
    %c0_i32_0 = arith.constant 0 : i32
    return %c0_i32, %arg1 : i32, i32
  }
  func.func @transform_5(%arg0: i32, %arg1: i32) -> (i32, i32) {
    %c0_i32 = arith.constant 0 : i32
    return %arg0, %arg1 : i32, i32
  }
}

module attributes {stable_mosaic.version = 11 : i64} {
  func.func @_matmul_bias_kernel(%arg0: i32, %arg1: i32, %arg2: i32, %arg3: memref<32x128xbf16, #tpu.memory_space<vmem>>, %arg4: memref<128x32xbf16, #tpu.memory_space<vmem>>, %arg5: memref<1x32xf32, #tpu.memory_space<vmem>>, %arg6: memref<32x32xbf16, #tpu.memory_space<vmem>>, %arg7: memref<32x32xbf16, #tpu.memory_space<vmem>>, %arg8: memref<32x32xf32, #tpu.memory_space<vmem>>) attributes {dimension_semantics = [#tpu.dimension_semantics<parallel>, #tpu.dimension_semantics<parallel>, #tpu.dimension_semantics<arbitrary>], iteration_bounds = array<i64: 1, 1, 1>, scalar_prefetch = 0 : i64, scratch_operands = 1 : i64, tpu.core_type = #tpu.core_type<tc>, window_params = [{transform_indices = @transform_0, window_bounds = array<i64: 32, 128>}, {transform_indices = @transform_1, window_bounds = array<i64: 128, 32>}, {transform_indices = @transform_2, window_bounds = array<i64: 1, 32>}, {transform_indices = @transform_3, window_bounds = array<i64: 32, 32>}, {transform_indices = @transform_4, window_bounds = array<i64: 32, 32>}]} {
    %c0_i32 = arith.constant 0 : i32
    %0 = arith.cmpi eq, %arg2, %c0_i32 : i32
    %1 = arith.extui %0 : i1 to i32
    %c0_i32_0 = arith.constant 0 : i32
    %2 = arith.cmpi ne, %1, %c0_i32_0 : i32
    scf.if %2 {
      %cst_10 = arith.constant 0.000000e+00 : f32
      %12 = vector.broadcast %cst_10 : f32 to vector<32x32xf32>
      %c0_11 = arith.constant 0 : index
      %c0_12 = arith.constant 0 : index
      %13 = vector.load %arg8[%c0_11, %c0_12] : memref<32x32xf32, #tpu.memory_space<vmem>>, vector<32x32xf32>
      tpu.vector_store %arg8[%c0_11, %c0_12], %12 {strides = array<i32>} : memref<32x32xf32, #tpu.memory_space<vmem>>, vector<32x32xf32>,
    } else {
    }
    %c0 = arith.constant 0 : index
    %c0_1 = arith.constant 0 : index
    %3 = vector.load %arg8[%c0, %c0_1] : memref<32x32xf32, #tpu.memory_space<vmem>>, vector<32x32xf32>
    %c0_2 = arith.constant 0 : index
    %c0_3 = arith.constant 0 : index
    %4 = vector.load %arg3[%c0_2, %c0_3] : memref<32x128xbf16, #tpu.memory_space<vmem>>, vector<32x128xbf16>
    %c0_4 = arith.constant 0 : index
    %c0_5 = arith.constant 0 : index
    %5 = vector.load %arg4[%c0_4, %c0_5] : memref<128x32xbf16, #tpu.memory_space<vmem>>, vector<128x32xbf16>
    %cst = arith.constant dense<0.000000e+00> : vector<32x32xf32>
    %6 = tpu.matmul %4, %5, %cst {dimension_numbers = #tpu.dot_dimension_numbers<[1], [0], [0], [1], [0, 0, 1, 1], [], []>} : vector<32x128xbf16>, vector<128x32xbf16>, vector<32x32xf32> -> vector<32x32xf32>
    %7 = arith.addf %3, %6 : vector<32x32xf32>
    %c0_6 = arith.constant 0 : index
    %c0_7 = arith.constant 0 : index
    %8 = vector.load %arg8[%c0_6, %c0_7] : memref<32x32xf32, #tpu.memory_space<vmem>>, vector<32x32xf32>
    tpu.vector_store %arg8[%c0_6, %c0_7], %7 {strides = array<i32>} : memref<32x32xf32, #tpu.memory_space<vmem>>, vector<32x32xf32>,
    %c0_i32_8 = arith.constant 0 : i32
    %9 = arith.cmpi eq, %arg2, %c0_i32_8 : i32
    %10 = arith.extui %9 : i1 to i32
    %c0_i32_9 = arith.constant 0 : i32
    %11 = arith.cmpi ne, %10, %c0_i32_9 : i32
    scf.if %11 {
      %c0_10 = arith.constant 0 : index
      %c0_11 = arith.constant 0 : index
      %12 = vector.load %arg8[%c0_10, %c0_11] : memref<32x32xf32, #tpu.memory_space<vmem>>, vector<32x32xf32>
      %c0_12 = arith.constant 0 : index
      %c0_13 = arith.constant 0 : index
      %13 = vector.load %arg5[%c0_12, %c0_13] : memref<1x32xf32, #tpu.memory_space<vmem>>, vector<1x32xf32>
      %14 = vector.broadcast %13 : vector<1x32xf32> to vector<32x32xf32>
      %15 = arith.addf %12, %14 : vector<32x32xf32>
      %c0_14 = arith.constant 0 : index
      %c0_15 = arith.constant 0 : index
      %16 = vector.load %arg6[%c0_14, %c0_15] : memref<32x32xbf16, #tpu.memory_space<vmem>>, vector<32x32xbf16>
      %17 = arith.extf %16 : vector<32x32xbf16> to vector<32x32xf32>
      %18 = arith.addf %15, %17 : vector<32x32xf32>
      %19 = arith.truncf %18 : vector<32x32xf32> to vector<32x32xbf16>
      %c0_16 = arith.constant 0 : index
      %c0_17 = arith.constant 0 : index
      %20 = vector.load %arg7[%c0_16, %c0_17] : memref<32x32xbf16, #tpu.memory_space<vmem>>, vector<32x32xbf16>
      tpu.vector_store %arg7[%c0_16, %c0_17], %19 {strides = array<i32>} : memref<32x32xbf16, #tpu.memory_space<vmem>>, vector<32x32xbf16>,
    } else {
    }
    return
  }
  func.func @transform_0(%arg0: i32, %arg1: i32, %arg2: i32) -> (i32, i32) {
    %c0_i32 = arith.constant 0 : i32
    return %arg0, %arg2 : i32, i32
  }
  func.func @transform_1(%arg0: i32, %arg1: i32, %arg2: i32) -> (i32, i32) {
    %c0_i32 = arith.constant 0 : i32
    return %arg2, %arg1 : i32, i32
  }
  func.func @transform_2(%arg0: i32, %arg1: i32, %arg2: i32) -> (i32, i32) {
    %c0_i32 = arith.constant 0 : i32
    %c0_i32_0 = arith.constant 0 : i32
    return %c0_i32, %arg1 : i32, i32
  }
  func.func @transform_3(%arg0: i32, %arg1: i32, %arg2: i32) -> (i32, i32) {
    %c0_i32 = arith.constant 0 : i32
    return %arg0, %arg1 : i32, i32
  }
  func.func @transform_4(%arg0: i32, %arg1: i32, %arg2: i32) -> (i32, i32) {
    %c0_i32 = arith.constant 0 : i32
    return %arg0, %arg1 : i32, i32
  }
}

module attributes {stable_mosaic.version = 11 : i64} {
  func.func @_ln_matmul_bias_kernel(%arg0: i32, %arg1: i32, %arg2: memref<32x32xbf16, #tpu.memory_space<vmem>>, %arg3: memref<1x32xf32, #tpu.memory_space<vmem>>, %arg4: memref<1x32xf32, #tpu.memory_space<vmem>>, %arg5: memref<32x64xbf16, #tpu.memory_space<vmem>>, %arg6: memref<1x64xf32, #tpu.memory_space<vmem>>, %arg7: memref<32x64xbf16, #tpu.memory_space<vmem>>, %arg8: memref<32x32xbf16, #tpu.memory_space<vmem>>) attributes {dimension_semantics = [#tpu.dimension_semantics<parallel>, #tpu.dimension_semantics<arbitrary>], iteration_bounds = array<i64: 1, 1>, scalar_prefetch = 0 : i64, scratch_operands = 1 : i64, tpu.core_type = #tpu.core_type<tc>, window_params = [{transform_indices = @transform_0, window_bounds = array<i64: 32, 32>}, {pipeline_mode = #tpu.pipeline_mode<synchronous>, transform_indices = @transform_1, window_bounds = array<i64: 1, 32>}, {pipeline_mode = #tpu.pipeline_mode<synchronous>, transform_indices = @transform_2, window_bounds = array<i64: 1, 32>}, {transform_indices = @transform_3, window_bounds = array<i64: 32, 64>}, {transform_indices = @transform_4, window_bounds = array<i64: 1, 64>}, {transform_indices = @transform_5, window_bounds = array<i64: 32, 64>}]} {
    %c0_i32 = arith.constant 0 : i32
    %0 = arith.cmpi eq, %arg1, %c0_i32 : i32
    %1 = arith.extui %0 : i1 to i32
    %c0_i32_0 = arith.constant 0 : i32
    %2 = arith.cmpi ne, %1, %c0_i32_0 : i32
    scf.if %2 {
      %c0_8 = arith.constant 0 : index
      %c0_9 = arith.constant 0 : index
      %11 = vector.load %arg2[%c0_8, %c0_9] : memref<32x32xbf16, #tpu.memory_space<vmem>>, vector<32x32xbf16>
      %12 = arith.extf %11 : vector<32x32xbf16> to vector<32x32xf32>
      %cst_10 = arith.constant dense<0.000000e+00> : vector<32xf32>
      %13 = vector.multi_reduction <add>, %12, %cst_10 [1] : vector<32x32xf32> to vector<32xf32>
      %14 = vector.shape_cast %13 : vector<32xf32> to vector<32x1xf32>
      %cst_11 = arith.constant 3.200000e+01 : f32
      %15 = vector.broadcast %cst_11 : f32 to vector<32x1xf32>
      %16 = arith.divf %14, %15 : vector<32x1xf32>
      %17 = vector.broadcast %16 : vector<32x1xf32> to vector<32x32xf32>
      %18 = arith.subf %12, %17 : vector<32x32xf32>
      %19 = arith.mulf %18, %18 : vector<32x32xf32>
      %cst_12 = arith.constant dense<0.000000e+00> : vector<32xf32>
      %20 = vector.multi_reduction <add>, %19, %cst_12 [1] : vector<32x32xf32> to vector<32xf32>
      %21 = vector.shape_cast %20 : vector<32xf32> to vector<32x1xf32>
      %cst_13 = arith.constant 3.200000e+01 : f32
      %22 = vector.broadcast %cst_13 : f32 to vector<32x1xf32>
      %23 = arith.divf %21, %22 : vector<32x1xf32>
      %24 = vector.broadcast %16 : vector<32x1xf32> to vector<32x32xf32>
      %25 = arith.subf %12, %24 : vector<32x32xf32>
      %cst_14 = arith.constant 9.99999997E-7 : f32
      %26 = vector.broadcast %cst_14 : f32 to vector<32x1xf32>
      %27 = arith.addf %23, %26 : vector<32x1xf32>
      %28 = math.rsqrt %27 : vector<32x1xf32>
      %29 = vector.broadcast %28 : vector<32x1xf32> to vector<32x32xf32>
      %30 = arith.mulf %25, %29 : vector<32x32xf32>
      %c0_15 = arith.constant 0 : index
      %c0_16 = arith.constant 0 : index
      %31 = vector.load %arg3[%c0_15, %c0_16] : memref<1x32xf32, #tpu.memory_space<vmem>>, vector<1x32xf32>
      %32 = vector.broadcast %31 : vector<1x32xf32> to vector<32x32xf32>
      %33 = arith.mulf %30, %32 : vector<32x32xf32>
      %c0_17 = arith.constant 0 : index
      %c0_18 = arith.constant 0 : index
      %34 = vector.load %arg4[%c0_17, %c0_18] : memref<1x32xf32, #tpu.memory_space<vmem>>, vector<1x32xf32>
      %35 = vector.broadcast %34 : vector<1x32xf32> to vector<32x32xf32>
      %36 = arith.addf %33, %35 : vector<32x32xf32>
      %37 = arith.truncf %36 : vector<32x32xf32> to vector<32x32xbf16>
      %c0_19 = arith.constant 0 : index
      %c0_20 = arith.constant 0 : index
      %38 = vector.load %arg8[%c0_19, %c0_20] : memref<32x32xbf16, #tpu.memory_space<vmem>>, vector<32x32xbf16>
      tpu.vector_store %arg8[%c0_19, %c0_20], %37 {strides = array<i32>} : memref<32x32xbf16, #tpu.memory_space<vmem>>, vector<32x32xbf16>,
    } else {
    }
    %c0 = arith.constant 0 : index
    %c0_1 = arith.constant 0 : index
    %3 = vector.load %arg8[%c0, %c0_1] : memref<32x32xbf16, #tpu.memory_space<vmem>>, vector<32x32xbf16>
    %c0_2 = arith.constant 0 : index
    %c0_3 = arith.constant 0 : index
    %4 = vector.load %arg5[%c0_2, %c0_3] : memref<32x64xbf16, #tpu.memory_space<vmem>>, vector<32x64xbf16>
    %cst = arith.constant dense<0.000000e+00> : vector<32x64xf32>
    %5 = tpu.matmul %3, %4, %cst {dimension_numbers = #tpu.dot_dimension_numbers<[1], [0], [0], [1], [0, 0, 1, 1], [], []>} : vector<32x32xbf16>, vector<32x64xbf16>, vector<32x64xf32> -> vector<32x64xf32>
    %c0_4 = arith.constant 0 : index
    %c0_5 = arith.constant 0 : index
    %6 = vector.load %arg6[%c0_4, %c0_5] : memref<1x64xf32, #tpu.memory_space<vmem>>, vector<1x64xf32>
    %7 = vector.broadcast %6 : vector<1x64xf32> to vector<32x64xf32>
    %8 = arith.addf %5, %7 : vector<32x64xf32>
    %9 = arith.truncf %8 : vector<32x64xf32> to vector<32x64xbf16>
    %c0_6 = arith.constant 0 : index
    %c0_7 = arith.constant 0 : index
    %10 = vector.load %arg7[%c0_6, %c0_7] : memref<32x64xbf16, #tpu.memory_space<vmem>>, vector<32x64xbf16>
    tpu.vector_store %arg7[%c0_6, %c0_7], %9 {strides = array<i32>} : memref<32x64xbf16, #tpu.memory_space<vmem>>, vector<32x64xbf16>,
    return
  }
  func.func @transform_0(%arg0: i32, %arg1: i32) -> (i32, i32) {
    %c0_i32 = arith.constant 0 : i32
    %c0_i32_0 = arith.constant 0 : i32
    return %arg0, %c0_i32 : i32, i32
  }
  func.func @transform_1(%arg0: i32, %arg1: i32) -> (i32, i32) {
    %c0_i32 = arith.constant 0 : i32
    %c0_i32_0 = arith.constant 0 : i32
    %c0_i32_1 = arith.constant 0 : i32
    return %c0_i32, %c0_i32_0 : i32, i32
  }
  func.func @transform_2(%arg0: i32, %arg1: i32) -> (i32, i32) {
    %c0_i32 = arith.constant 0 : i32
    %c0_i32_0 = arith.constant 0 : i32
    %c0_i32_1 = arith.constant 0 : i32
    return %c0_i32, %c0_i32_0 : i32, i32
  }
  func.func @transform_3(%arg0: i32, %arg1: i32) -> (i32, i32) {
    %c0_i32 = arith.constant 0 : i32
    %c0_i32_0 = arith.constant 0 : i32
    return %c0_i32, %arg1 : i32, i32
  }
  func.func @transform_4(%arg0: i32, %arg1: i32) -> (i32, i32) {
    %c0_i32 = arith.constant 0 : i32
    %c0_i32_0 = arith.constant 0 : i32
    return %c0_i32, %arg1 : i32, i32
  }
  func.func @transform_5(%arg0: i32, %arg1: i32) -> (i32, i32) {
    %c0_i32 = arith.constant 0 : i32
    return %arg0, %arg1 : i32, i32
  }
}

module attributes {stable_mosaic.version = 11 : i64} {
  func.func @_pool_attn_kernel(%arg0: memref<2x1x32xbf16, #tpu.memory_space<vmem>>, %arg1: memref<2x16x64xbf16, #tpu.memory_space<vmem>>, %arg2: memref<2x1x32xbf16, #tpu.memory_space<vmem>>) attributes {dimension_semantics = [], scalar_prefetch = 0 : i64, scratch_operands = 0 : i64, tpu.core_type = #tpu.core_type<tc>} {
    %c0 = arith.constant 0 : index
    %c0_0 = arith.constant 0 : index
    %c0_1 = arith.constant 0 : index
    %0 = vector.load %arg0[%c0, %c0_0, %c0_1] : memref<2x1x32xbf16, #tpu.memory_space<vmem>>, vector<1x1x8xbf16>
    %1 = vector.shape_cast %0 : vector<1x1x8xbf16> to vector<1x8xbf16>
    %c0_2 = arith.constant 0 : index
    %c0_3 = arith.constant 0 : index
    %c0_4 = arith.constant 0 : index
    %2 = vector.load %arg1[%c0_2, %c0_3, %c0_4] : memref<2x16x64xbf16, #tpu.memory_space<vmem>>, vector<1x16x8xbf16>
    %3 = vector.shape_cast %2 : vector<1x16x8xbf16> to vector<16x8xbf16>
    %c0_5 = arith.constant 0 : index
    %c0_6 = arith.constant 0 : index
    %c32 = arith.constant 32 : index
    %4 = vector.load %arg1[%c0_5, %c0_6, %c32] : memref<2x16x64xbf16, #tpu.memory_space<vmem>>, vector<1x16x8xbf16>
    %5 = vector.shape_cast %4 : vector<1x16x8xbf16> to vector<16x8xbf16>
    %cst = arith.constant dense<0.000000e+00> : vector<1x16xf32>
    %6 = tpu.matmul %1, %3, %cst {dimension_numbers = #tpu.dot_dimension_numbers<[1], [1], [0], [0], [0, 0, 1, 0], [], []>} : vector<1x8xbf16>, vector<16x8xbf16>, vector<1x16xf32> -> vector<1x16xf32>
    %cst_7 = arith.constant dense<0xFF800000> : vector<1xf32>
    %7 = vector.multi_reduction <maximumf>, %6, %cst_7 [1] : vector<1x16xf32> to vector<1xf32>
    %8 = vector.shape_cast %7 : vector<1xf32> to vector<1x1xf32>
    %9 = vector.broadcast %8 : vector<1x1xf32> to vector<1x16xf32>
    %10 = arith.subf %6, %9 : vector<1x16xf32>
    %11 = math.exp %10 : vector<1x16xf32>
    %cst_8 = arith.constant dense<0.000000e+00> : vector<1xf32>
    %12 = vector.multi_reduction <add>, %11, %cst_8 [1] : vector<1x16xf32> to vector<1xf32>
    %13 = vector.shape_cast %12 : vector<1xf32> to vector<1x1xf32>
    %14 = arith.truncf %11 : vector<1x16xf32> to vector<1x16xbf16>
    %cst_9 = arith.constant dense<0.000000e+00> : vector<1x8xf32>
    %15 = tpu.matmul %14, %5, %cst_9 {dimension_numbers = #tpu.dot_dimension_numbers<[1], [0], [0], [1], [0, 0, 1, 1], [], []>} : vector<1x16xbf16>, vector<16x8xbf16>, vector<1x8xf32> -> vector<1x8xf32>
    %16 = tpu.reciprocal %13 {approx = true} : vector<1x1xf32> -> vector<1x1xf32>
    %17 = vector.broadcast %16 : vector<1x1xf32> to vector<1x8xf32>
    %18 = arith.mulf %15, %17 : vector<1x8xf32>
    %19 = arith.truncf %18 : vector<1x8xf32> to vector<1x8xbf16>
    %c0_10 = arith.constant 0 : index
    %c0_11 = arith.constant 0 : index
    %c0_12 = arith.constant 0 : index
    %20 = vector.load %arg2[%c0_10, %c0_11, %c0_12] : memref<2x1x32xbf16, #tpu.memory_space<vmem>>, vector<1x1x8xbf16>
    %21 = vector.shape_cast %20 : vector<1x1x8xbf16> to vector<1x8xbf16>
    %22 = vector.shape_cast %19 : vector<1x8xbf16> to vector<1x1x8xbf16>
    tpu.vector_store %arg2[%c0_10, %c0_11, %c0_12], %22 {strides = array<i32>} : memref<2x1x32xbf16, #tpu.memory_space<vmem>>, vector<1x1x8xbf16>,
    %c0_13 = arith.constant 0 : index
    %c0_14 = arith.constant 0 : index
    %c8 = arith.constant 8 : index
    %23 = vector.load %arg0[%c0_13, %c0_14, %c8] : memref<2x1x32xbf16, #tpu.memory_space<vmem>>, vector<1x1x8xbf16>
    %24 = vector.shape_cast %23 : vector<1x1x8xbf16> to vector<1x8xbf16>
    %c0_15 = arith.constant 0 : index
    %c0_16 = arith.constant 0 : index
    %c8_17 = arith.constant 8 : index
    %25 = vector.load %arg1[%c0_15, %c0_16, %c8_17] : memref<2x16x64xbf16, #tpu.memory_space<vmem>>, vector<1x16x8xbf16>
    %26 = vector.shape_cast %25 : vector<1x16x8xbf16> to vector<16x8xbf16>
    %c0_18 = arith.constant 0 : index
    %c0_19 = arith.constant 0 : index
    %c40 = arith.constant 40 : index
    %27 = vector.load %arg1[%c0_18, %c0_19, %c40] : memref<2x16x64xbf16, #tpu.memory_space<vmem>>, vector<1x16x8xbf16>
    %28 = vector.shape_cast %27 : vector<1x16x8xbf16> to vector<16x8xbf16>
    %cst_20 = arith.constant dense<0.000000e+00> : vector<1x16xf32>
    %29 = tpu.matmul %24, %26, %cst_20 {dimension_numbers = #tpu.dot_dimension_numbers<[1], [1], [0], [0], [0, 0, 1, 0], [], []>} : vector<1x8xbf16>, vector<16x8xbf16>, vector<1x16xf32> -> vector<1x16xf32>
    %cst_21 = arith.constant dense<0xFF800000> : vector<1xf32>
    %30 = vector.multi_reduction <maximumf>, %29, %cst_21 [1] : vector<1x16xf32> to vector<1xf32>
    %31 = vector.shape_cast %30 : vector<1xf32> to vector<1x1xf32>
    %32 = vector.broadcast %31 : vector<1x1xf32> to vector<1x16xf32>
    %33 = arith.subf %29, %32 : vector<1x16xf32>
    %34 = math.exp %33 : vector<1x16xf32>
    %cst_22 = arith.constant dense<0.000000e+00> : vector<1xf32>
    %35 = vector.multi_reduction <add>, %34, %cst_22 [1] : vector<1x16xf32> to vector<1xf32>
    %36 = vector.shape_cast %35 : vector<1xf32> to vector<1x1xf32>
    %37 = arith.truncf %34 : vector<1x16xf32> to vector<1x16xbf16>
    %cst_23 = arith.constant dense<0.000000e+00> : vector<1x8xf32>
    %38 = tpu.matmul %37, %28, %cst_23 {dimension_numbers = #tpu.dot_dimension_numbers<[1], [0], [0], [1], [0, 0, 1, 1], [], []>} : vector<1x16xbf16>, vector<16x8xbf16>, vector<1x8xf32> -> vector<1x8xf32>
    %39 = tpu.reciprocal %36 {approx = true} : vector<1x1xf32> -> vector<1x1xf32>
    %40 = vector.broadcast %39 : vector<1x1xf32> to vector<1x8xf32>
    %41 = arith.mulf %38, %40 : vector<1x8xf32>
    %42 = arith.truncf %41 : vector<1x8xf32> to vector<1x8xbf16>
    %c0_24 = arith.constant 0 : index
    %c0_25 = arith.constant 0 : index
    %c8_26 = arith.constant 8 : index
    %43 = vector.load %arg2[%c0_24, %c0_25, %c8_26] : memref<2x1x32xbf16, #tpu.memory_space<vmem>>, vector<1x1x8xbf16>
    %44 = vector.shape_cast %43 : vector<1x1x8xbf16> to vector<1x8xbf16>
    %45 = vector.shape_cast %42 : vector<1x8xbf16> to vector<1x1x8xbf16>
    tpu.vector_store %arg2[%c0_24, %c0_25, %c8_26], %45 {strides = array<i32>} : memref<2x1x32xbf16, #tpu.memory_space<vmem>>, vector<1x1x8xbf16>,
    %c0_27 = arith.constant 0 : index
    %c0_28 = arith.constant 0 : index
    %c16 = arith.constant 16 : index
    %46 = vector.load %arg0[%c0_27, %c0_28, %c16] : memref<2x1x32xbf16, #tpu.memory_space<vmem>>, vector<1x1x8xbf16>
    %47 = vector.shape_cast %46 : vector<1x1x8xbf16> to vector<1x8xbf16>
    %c0_29 = arith.constant 0 : index
    %c0_30 = arith.constant 0 : index
    %c16_31 = arith.constant 16 : index
    %48 = vector.load %arg1[%c0_29, %c0_30, %c16_31] : memref<2x16x64xbf16, #tpu.memory_space<vmem>>, vector<1x16x8xbf16>
    %49 = vector.shape_cast %48 : vector<1x16x8xbf16> to vector<16x8xbf16>
    %c0_32 = arith.constant 0 : index
    %c0_33 = arith.constant 0 : index
    %c48 = arith.constant 48 : index
    %50 = vector.load %arg1[%c0_32, %c0_33, %c48] : memref<2x16x64xbf16, #tpu.memory_space<vmem>>, vector<1x16x8xbf16>
    %51 = vector.shape_cast %50 : vector<1x16x8xbf16> to vector<16x8xbf16>
    %cst_34 = arith.constant dense<0.000000e+00> : vector<1x16xf32>
    %52 = tpu.matmul %47, %49, %cst_34 {dimension_numbers = #tpu.dot_dimension_numbers<[1], [1], [0], [0], [0, 0, 1, 0], [], []>} : vector<1x8xbf16>, vector<16x8xbf16>, vector<1x16xf32> -> vector<1x16xf32>
    %cst_35 = arith.constant dense<0xFF800000> : vector<1xf32>
    %53 = vector.multi_reduction <maximumf>, %52, %cst_35 [1] : vector<1x16xf32> to vector<1xf32>
    %54 = vector.shape_cast %53 : vector<1xf32> to vector<1x1xf32>
    %55 = vector.broadcast %54 : vector<1x1xf32> to vector<1x16xf32>
    %56 = arith.subf %52, %55 : vector<1x16xf32>
    %57 = math.exp %56 : vector<1x16xf32>
    %cst_36 = arith.constant dense<0.000000e+00> : vector<1xf32>
    %58 = vector.multi_reduction <add>, %57, %cst_36 [1] : vector<1x16xf32> to vector<1xf32>
    %59 = vector.shape_cast %58 : vector<1xf32> to vector<1x1xf32>
    %60 = arith.truncf %57 : vector<1x16xf32> to vector<1x16xbf16>
    %cst_37 = arith.constant dense<0.000000e+00> : vector<1x8xf32>
    %61 = tpu.matmul %60, %51, %cst_37 {dimension_numbers = #tpu.dot_dimension_numbers<[1], [0], [0], [1], [0, 0, 1, 1], [], []>} : vector<1x16xbf16>, vector<16x8xbf16>, vector<1x8xf32> -> vector<1x8xf32>
    %62 = tpu.reciprocal %59 {approx = true} : vector<1x1xf32> -> vector<1x1xf32>
    %63 = vector.broadcast %62 : vector<1x1xf32> to vector<1x8xf32>
    %64 = arith.mulf %61, %63 : vector<1x8xf32>
    %65 = arith.truncf %64 : vector<1x8xf32> to vector<1x8xbf16>
    %c0_38 = arith.constant 0 : index
    %c0_39 = arith.constant 0 : index
    %c16_40 = arith.constant 16 : index
    %66 = vector.load %arg2[%c0_38, %c0_39, %c16_40] : memref<2x1x32xbf16, #tpu.memory_space<vmem>>, vector<1x1x8xbf16>
    %67 = vector.shape_cast %66 : vector<1x1x8xbf16> to vector<1x8xbf16>
    %68 = vector.shape_cast %65 : vector<1x8xbf16> to vector<1x1x8xbf16>
    tpu.vector_store %arg2[%c0_38, %c0_39, %c16_40], %68 {strides = array<i32>} : memref<2x1x32xbf16, #tpu.memory_space<vmem>>, vector<1x1x8xbf16>,
    %c0_41 = arith.constant 0 : index
    %c0_42 = arith.constant 0 : index
    %c24 = arith.constant 24 : index
    %69 = vector.load %arg0[%c0_41, %c0_42, %c24] : memref<2x1x32xbf16, #tpu.memory_space<vmem>>, vector<1x1x8xbf16>
    %70 = vector.shape_cast %69 : vector<1x1x8xbf16> to vector<1x8xbf16>
    %c0_43 = arith.constant 0 : index
    %c0_44 = arith.constant 0 : index
    %c24_45 = arith.constant 24 : index
    %71 = vector.load %arg1[%c0_43, %c0_44, %c24_45] : memref<2x16x64xbf16, #tpu.memory_space<vmem>>, vector<1x16x8xbf16>
    %72 = vector.shape_cast %71 : vector<1x16x8xbf16> to vector<16x8xbf16>
    %c0_46 = arith.constant 0 : index
    %c0_47 = arith.constant 0 : index
    %c56 = arith.constant 56 : index
    %73 = vector.load %arg1[%c0_46, %c0_47, %c56] : memref<2x16x64xbf16, #tpu.memory_space<vmem>>, vector<1x16x8xbf16>
    %74 = vector.shape_cast %73 : vector<1x16x8xbf16> to vector<16x8xbf16>
    %cst_48 = arith.constant dense<0.000000e+00> : vector<1x16xf32>
    %75 = tpu.matmul %70, %72, %cst_48 {dimension_numbers = #tpu.dot_dimension_numbers<[1], [1], [0], [0], [0, 0, 1, 0], [], []>} : vector<1x8xbf16>, vector<16x8xbf16>, vector<1x16xf32> -> vector<1x16xf32>
    %cst_49 = arith.constant dense<0xFF800000> : vector<1xf32>
    %76 = vector.multi_reduction <maximumf>, %75, %cst_49 [1] : vector<1x16xf32> to vector<1xf32>
    %77 = vector.shape_cast %76 : vector<1xf32> to vector<1x1xf32>
    %78 = vector.broadcast %77 : vector<1x1xf32> to vector<1x16xf32>
    %79 = arith.subf %75, %78 : vector<1x16xf32>
    %80 = math.exp %79 : vector<1x16xf32>
    %cst_50 = arith.constant dense<0.000000e+00> : vector<1xf32>
    %81 = vector.multi_reduction <add>, %80, %cst_50 [1] : vector<1x16xf32> to vector<1xf32>
    %82 = vector.shape_cast %81 : vector<1xf32> to vector<1x1xf32>
    %83 = arith.truncf %80 : vector<1x16xf32> to vector<1x16xbf16>
    %cst_51 = arith.constant dense<0.000000e+00> : vector<1x8xf32>
    %84 = tpu.matmul %83, %74, %cst_51 {dimension_numbers = #tpu.dot_dimension_numbers<[1], [0], [0], [1], [0, 0, 1, 1], [], []>} : vector<1x16xbf16>, vector<16x8xbf16>, vector<1x8xf32> -> vector<1x8xf32>
    %85 = tpu.reciprocal %82 {approx = true} : vector<1x1xf32> -> vector<1x1xf32>
    %86 = vector.broadcast %85 : vector<1x1xf32> to vector<1x8xf32>
    %87 = arith.mulf %84, %86 : vector<1x8xf32>
    %88 = arith.truncf %87 : vector<1x8xf32> to vector<1x8xbf16>
    %c0_52 = arith.constant 0 : index
    %c0_53 = arith.constant 0 : index
    %c24_54 = arith.constant 24 : index
    %89 = vector.load %arg2[%c0_52, %c0_53, %c24_54] : memref<2x1x32xbf16, #tpu.memory_space<vmem>>, vector<1x1x8xbf16>
    %90 = vector.shape_cast %89 : vector<1x1x8xbf16> to vector<1x8xbf16>
    %91 = vector.shape_cast %88 : vector<1x8xbf16> to vector<1x1x8xbf16>
    tpu.vector_store %arg2[%c0_52, %c0_53, %c24_54], %91 {strides = array<i32>} : memref<2x1x32xbf16, #tpu.memory_space<vmem>>, vector<1x1x8xbf16>,
    %c1 = arith.constant 1 : index
    %c0_55 = arith.constant 0 : index
    %c0_56 = arith.constant 0 : index
    %92 = vector.load %arg0[%c1, %c0_55, %c0_56] : memref<2x1x32xbf16, #tpu.memory_space<vmem>>, vector<1x1x8xbf16>
    %93 = vector.shape_cast %92 : vector<1x1x8xbf16> to vector<1x8xbf16>
    %c1_57 = arith.constant 1 : index
    %c0_58 = arith.constant 0 : index
    %c0_59 = arith.constant 0 : index
    %94 = vector.load %arg1[%c1_57, %c0_58, %c0_59] : memref<2x16x64xbf16, #tpu.memory_space<vmem>>, vector<1x16x8xbf16>
    %95 = vector.shape_cast %94 : vector<1x16x8xbf16> to vector<16x8xbf16>
    %c1_60 = arith.constant 1 : index
    %c0_61 = arith.constant 0 : index
    %c32_62 = arith.constant 32 : index
    %96 = vector.load %arg1[%c1_60, %c0_61, %c32_62] : memref<2x16x64xbf16, #tpu.memory_space<vmem>>, vector<1x16x8xbf16>
    %97 = vector.shape_cast %96 : vector<1x16x8xbf16> to vector<16x8xbf16>
    %cst_63 = arith.constant dense<0.000000e+00> : vector<1x16xf32>
    %98 = tpu.matmul %93, %95, %cst_63 {dimension_numbers = #tpu.dot_dimension_numbers<[1], [1], [0], [0], [0, 0, 1, 0], [], []>} : vector<1x8xbf16>, vector<16x8xbf16>, vector<1x16xf32> -> vector<1x16xf32>
    %cst_64 = arith.constant dense<0xFF800000> : vector<1xf32>
    %99 = vector.multi_reduction <maximumf>, %98, %cst_64 [1] : vector<1x16xf32> to vector<1xf32>
    %100 = vector.shape_cast %99 : vector<1xf32> to vector<1x1xf32>
    %101 = vector.broadcast %100 : vector<1x1xf32> to vector<1x16xf32>
    %102 = arith.subf %98, %101 : vector<1x16xf32>
    %103 = math.exp %102 : vector<1x16xf32>
    %cst_65 = arith.constant dense<0.000000e+00> : vector<1xf32>
    %104 = vector.multi_reduction <add>, %103, %cst_65 [1] : vector<1x16xf32> to vector<1xf32>
    %105 = vector.shape_cast %104 : vector<1xf32> to vector<1x1xf32>
    %106 = arith.truncf %103 : vector<1x16xf32> to vector<1x16xbf16>
    %cst_66 = arith.constant dense<0.000000e+00> : vector<1x8xf32>
    %107 = tpu.matmul %106, %97, %cst_66 {dimension_numbers = #tpu.dot_dimension_numbers<[1], [0], [0], [1], [0, 0, 1, 1], [], []>} : vector<1x16xbf16>, vector<16x8xbf16>, vector<1x8xf32> -> vector<1x8xf32>
    %108 = tpu.reciprocal %105 {approx = true} : vector<1x1xf32> -> vector<1x1xf32>
    %109 = vector.broadcast %108 : vector<1x1xf32> to vector<1x8xf32>
    %110 = arith.mulf %107, %109 : vector<1x8xf32>
    %111 = arith.truncf %110 : vector<1x8xf32> to vector<1x8xbf16>
    %c1_67 = arith.constant 1 : index
    %c0_68 = arith.constant 0 : index
    %c0_69 = arith.constant 0 : index
    %112 = vector.load %arg2[%c1_67, %c0_68, %c0_69] : memref<2x1x32xbf16, #tpu.memory_space<vmem>>, vector<1x1x8xbf16>
    %113 = vector.shape_cast %112 : vector<1x1x8xbf16> to vector<1x8xbf16>
    %114 = vector.shape_cast %111 : vector<1x8xbf16> to vector<1x1x8xbf16>
    tpu.vector_store %arg2[%c1_67, %c0_68, %c0_69], %114 {strides = array<i32>} : memref<2x1x32xbf16, #tpu.memory_space<vmem>>, vector<1x1x8xbf16>,
    %c1_70 = arith.constant 1 : index
    %c0_71 = arith.constant 0 : index
    %c8_72 = arith.constant 8 : index
    %115 = vector.load %arg0[%c1_70, %c0_71, %c8_72] : memref<2x1x32xbf16, #tpu.memory_space<vmem>>, vector<1x1x8xbf16>
    %116 = vector.shape_cast %115 : vector<1x1x8xbf16> to vector<1x8xbf16>
    %c1_73 = arith.constant 1 : index
    %c0_74 = arith.constant 0 : index
    %c8_75 = arith.constant 8 : index
    %117 = vector.load %arg1[%c1_73, %c0_74, %c8_75] : memref<2x16x64xbf16, #tpu.memory_space<vmem>>, vector<1x16x8xbf16>
    %118 = vector.shape_cast %117 : vector<1x16x8xbf16> to vector<16x8xbf16>
    %c1_76 = arith.constant 1 : index
    %c0_77 = arith.constant 0 : index
    %c40_78 = arith.constant 40 : index
    %119 = vector.load %arg1[%c1_76, %c0_77, %c40_78] : memref<2x16x64xbf16, #tpu.memory_space<vmem>>, vector<1x16x8xbf16>
    %120 = vector.shape_cast %119 : vector<1x16x8xbf16> to vector<16x8xbf16>
    %cst_79 = arith.constant dense<0.000000e+00> : vector<1x16xf32>
    %121 = tpu.matmul %116, %118, %cst_79 {dimension_numbers = #tpu.dot_dimension_numbers<[1], [1], [0], [0], [0, 0, 1, 0], [], []>} : vector<1x8xbf16>, vector<16x8xbf16>, vector<1x16xf32> -> vector<1x16xf32>
    %cst_80 = arith.constant dense<0xFF800000> : vector<1xf32>
    %122 = vector.multi_reduction <maximumf>, %121, %cst_80 [1] : vector<1x16xf32> to vector<1xf32>
    %123 = vector.shape_cast %122 : vector<1xf32> to vector<1x1xf32>
    %124 = vector.broadcast %123 : vector<1x1xf32> to vector<1x16xf32>
    %125 = arith.subf %121, %124 : vector<1x16xf32>
    %126 = math.exp %125 : vector<1x16xf32>
    %cst_81 = arith.constant dense<0.000000e+00> : vector<1xf32>
    %127 = vector.multi_reduction <add>, %126, %cst_81 [1] : vector<1x16xf32> to vector<1xf32>
    %128 = vector.shape_cast %127 : vector<1xf32> to vector<1x1xf32>
    %129 = arith.truncf %126 : vector<1x16xf32> to vector<1x16xbf16>
    %cst_82 = arith.constant dense<0.000000e+00> : vector<1x8xf32>
    %130 = tpu.matmul %129, %120, %cst_82 {dimension_numbers = #tpu.dot_dimension_numbers<[1], [0], [0], [1], [0, 0, 1, 1], [], []>} : vector<1x16xbf16>, vector<16x8xbf16>, vector<1x8xf32> -> vector<1x8xf32>
    %131 = tpu.reciprocal %128 {approx = true} : vector<1x1xf32> -> vector<1x1xf32>
    %132 = vector.broadcast %131 : vector<1x1xf32> to vector<1x8xf32>
    %133 = arith.mulf %130, %132 : vector<1x8xf32>
    %134 = arith.truncf %133 : vector<1x8xf32> to vector<1x8xbf16>
    %c1_83 = arith.constant 1 : index
    %c0_84 = arith.constant 0 : index
    %c8_85 = arith.constant 8 : index
    %135 = vector.load %arg2[%c1_83, %c0_84, %c8_85] : memref<2x1x32xbf16, #tpu.memory_space<vmem>>, vector<1x1x8xbf16>
    %136 = vector.shape_cast %135 : vector<1x1x8xbf16> to vector<1x8xbf16>
    %137 = vector.shape_cast %134 : vector<1x8xbf16> to vector<1x1x8xbf16>
    tpu.vector_store %arg2[%c1_83, %c0_84, %c8_85], %137 {strides = array<i32>} : memref<2x1x32xbf16, #tpu.memory_space<vmem>>, vector<1x1x8xbf16>,
    %c1_86 = arith.constant 1 : index
    %c0_87 = arith.constant 0 : index
    %c16_88 = arith.constant 16 : index
    %138 = vector.load %arg0[%c1_86, %c0_87, %c16_88] : memref<2x1x32xbf16, #tpu.memory_space<vmem>>, vector<1x1x8xbf16>
    %139 = vector.shape_cast %138 : vector<1x1x8xbf16> to vector<1x8xbf16>
    %c1_89 = arith.constant 1 : index
    %c0_90 = arith.constant 0 : index
    %c16_91 = arith.constant 16 : index
    %140 = vector.load %arg1[%c1_89, %c0_90, %c16_91] : memref<2x16x64xbf16, #tpu.memory_space<vmem>>, vector<1x16x8xbf16>
    %141 = vector.shape_cast %140 : vector<1x16x8xbf16> to vector<16x8xbf16>
    %c1_92 = arith.constant 1 : index
    %c0_93 = arith.constant 0 : index
    %c48_94 = arith.constant 48 : index
    %142 = vector.load %arg1[%c1_92, %c0_93, %c48_94] : memref<2x16x64xbf16, #tpu.memory_space<vmem>>, vector<1x16x8xbf16>
    %143 = vector.shape_cast %142 : vector<1x16x8xbf16> to vector<16x8xbf16>
    %cst_95 = arith.constant dense<0.000000e+00> : vector<1x16xf32>
    %144 = tpu.matmul %139, %141, %cst_95 {dimension_numbers = #tpu.dot_dimension_numbers<[1], [1], [0], [0], [0, 0, 1, 0], [], []>} : vector<1x8xbf16>, vector<16x8xbf16>, vector<1x16xf32> -> vector<1x16xf32>
    %cst_96 = arith.constant dense<0xFF800000> : vector<1xf32>
    %145 = vector.multi_reduction <maximumf>, %144, %cst_96 [1] : vector<1x16xf32> to vector<1xf32>
    %146 = vector.shape_cast %145 : vector<1xf32> to vector<1x1xf32>
    %147 = vector.broadcast %146 : vector<1x1xf32> to vector<1x16xf32>
    %148 = arith.subf %144, %147 : vector<1x16xf32>
    %149 = math.exp %148 : vector<1x16xf32>
    %cst_97 = arith.constant dense<0.000000e+00> : vector<1xf32>
    %150 = vector.multi_reduction <add>, %149, %cst_97 [1] : vector<1x16xf32> to vector<1xf32>
    %151 = vector.shape_cast %150 : vector<1xf32> to vector<1x1xf32>
    %152 = arith.truncf %149 : vector<1x16xf32> to vector<1x16xbf16>
    %cst_98 = arith.constant dense<0.000000e+00> : vector<1x8xf32>
    %153 = tpu.matmul %152, %143, %cst_98 {dimension_numbers = #tpu.dot_dimension_numbers<[1], [0], [0], [1], [0, 0, 1, 1], [], []>} : vector<1x16xbf16>, vector<16x8xbf16>, vector<1x8xf32> -> vector<1x8xf32>
    %154 = tpu.reciprocal %151 {approx = true} : vector<1x1xf32> -> vector<1x1xf32>
    %155 = vector.broadcast %154 : vector<1x1xf32> to vector<1x8xf32>
    %156 = arith.mulf %153, %155 : vector<1x8xf32>
    %157 = arith.truncf %156 : vector<1x8xf32> to vector<1x8xbf16>
    %c1_99 = arith.constant 1 : index
    %c0_100 = arith.constant 0 : index
    %c16_101 = arith.constant 16 : index
    %158 = vector.load %arg2[%c1_99, %c0_100, %c16_101] : memref<2x1x32xbf16, #tpu.memory_space<vmem>>, vector<1x1x8xbf16>
    %159 = vector.shape_cast %158 : vector<1x1x8xbf16> to vector<1x8xbf16>
    %160 = vector.shape_cast %157 : vector<1x8xbf16> to vector<1x1x8xbf16>
    tpu.vector_store %arg2[%c1_99, %c0_100, %c16_101], %160 {strides = array<i32>} : memref<2x1x32xbf16, #tpu.memory_space<vmem>>, vector<1x1x8xbf16>,
    %c1_102 = arith.constant 1 : index
    %c0_103 = arith.constant 0 : index
    %c24_104 = arith.constant 24 : index
    %161 = vector.load %arg0[%c1_102, %c0_103, %c24_104] : memref<2x1x32xbf16, #tpu.memory_space<vmem>>, vector<1x1x8xbf16>
    %162 = vector.shape_cast %161 : vector<1x1x8xbf16> to vector<1x8xbf16>
    %c1_105 = arith.constant 1 : index
    %c0_106 = arith.constant 0 : index
    %c24_107 = arith.constant 24 : index
    %163 = vector.load %arg1[%c1_105, %c0_106, %c24_107] : memref<2x16x64xbf16, #tpu.memory_space<vmem>>, vector<1x16x8xbf16>
    %164 = vector.shape_cast %163 : vector<1x16x8xbf16> to vector<16x8xbf16>
    %c1_108 = arith.constant 1 : index
    %c0_109 = arith.constant 0 : index
    %c56_110 = arith.constant 56 : index
    %165 = vector.load %arg1[%c1_108, %c0_109, %c56_110] : memref<2x16x64xbf16, #tpu.memory_space<vmem>>, vector<1x16x8xbf16>
    %166 = vector.shape_cast %165 : vector<1x16x8xbf16> to vector<16x8xbf16>
    %cst_111 = arith.constant dense<0.000000e+00> : vector<1x16xf32>
    %167 = tpu.matmul %162, %164, %cst_111 {dimension_numbers = #tpu.dot_dimension_numbers<[1], [1], [0], [0], [0, 0, 1, 0], [], []>} : vector<1x8xbf16>, vector<16x8xbf16>, vector<1x16xf32> -> vector<1x16xf32>
    %cst_112 = arith.constant dense<0xFF800000> : vector<1xf32>
    %168 = vector.multi_reduction <maximumf>, %167, %cst_112 [1] : vector<1x16xf32> to vector<1xf32>
    %169 = vector.shape_cast %168 : vector<1xf32> to vector<1x1xf32>
    %170 = vector.broadcast %169 : vector<1x1xf32> to vector<1x16xf32>
    %171 = arith.subf %167, %170 : vector<1x16xf32>
    %172 = math.exp %171 : vector<1x16xf32>
    %cst_113 = arith.constant dense<0.000000e+00> : vector<1xf32>
    %173 = vector.multi_reduction <add>, %172, %cst_113 [1] : vector<1x16xf32> to vector<1xf32>
    %174 = vector.shape_cast %173 : vector<1xf32> to vector<1x1xf32>
    %175 = arith.truncf %172 : vector<1x16xf32> to vector<1x16xbf16>
    %cst_114 = arith.constant dense<0.000000e+00> : vector<1x8xf32>
    %176 = tpu.matmul %175, %166, %cst_114 {dimension_numbers = #tpu.dot_dimension_numbers<[1], [0], [0], [1], [0, 0, 1, 1], [], []>} : vector<1x16xbf16>, vector<16x8xbf16>, vector<1x8xf32> -> vector<1x8xf32>
    %177 = tpu.reciprocal %174 {approx = true} : vector<1x1xf32> -> vector<1x1xf32>
    %178 = vector.broadcast %177 : vector<1x1xf32> to vector<1x8xf32>
    %179 = arith.mulf %176, %178 : vector<1x8xf32>
    %180 = arith.truncf %179 : vector<1x8xf32> to vector<1x8xbf16>
    %c1_115 = arith.constant 1 : index
    %c0_116 = arith.constant 0 : index
    %c24_117 = arith.constant 24 : index
    %181 = vector.load %arg2[%c1_115, %c0_116, %c24_117] : memref<2x1x32xbf16, #tpu.memory_space<vmem>>, vector<1x1x8xbf16>
    %182 = vector.shape_cast %181 : vector<1x1x8xbf16> to vector<1x8xbf16>
    %183 = vector.shape_cast %180 : vector<1x8xbf16> to vector<1x1x8xbf16>
    tpu.vector_store %arg2[%c1_115, %c0_116, %c24_117], %183 {strides = array<i32>} : memref<2x1x32xbf16, #tpu.memory_space<vmem>>, vector<1x1x8xbf16>,
    return
  }
}

module attributes {stable_mosaic.version = 11 : i64} {
  func.func @_matmul_bias_kernel(%arg0: i32, %arg1: i32, %arg2: i32, %arg3: memref<2x32xbf16, #tpu.memory_space<vmem>>, %arg4: memref<32x16xbf16, #tpu.memory_space<vmem>>, %arg5: memref<1x16xf32, #tpu.memory_space<vmem>>, %arg6: memref<2x16xf32, #tpu.memory_space<vmem>>, %arg7: memref<2x16xf32, #tpu.memory_space<vmem>>) attributes {dimension_semantics = [#tpu.dimension_semantics<parallel>, #tpu.dimension_semantics<parallel>, #tpu.dimension_semantics<arbitrary>], iteration_bounds = array<i64: 1, 1, 1>, scalar_prefetch = 0 : i64, scratch_operands = 1 : i64, tpu.core_type = #tpu.core_type<tc>, window_params = [{transform_indices = @transform_0, window_bounds = array<i64: 2, 32>}, {transform_indices = @transform_1, window_bounds = array<i64: 32, 16>}, {transform_indices = @transform_2, window_bounds = array<i64: 1, 16>}, {transform_indices = @transform_3, window_bounds = array<i64: 2, 16>}]} {
    %c0_i32 = arith.constant 0 : i32
    %0 = arith.cmpi eq, %arg2, %c0_i32 : i32
    %1 = arith.extui %0 : i1 to i32
    %c0_i32_0 = arith.constant 0 : i32
    %2 = arith.cmpi ne, %1, %c0_i32_0 : i32
    scf.if %2 {
      %cst_10 = arith.constant 0.000000e+00 : f32
      %12 = vector.broadcast %cst_10 : f32 to vector<2x16xf32>
      %c0_11 = arith.constant 0 : index
      %c0_12 = arith.constant 0 : index
      %13 = vector.load %arg7[%c0_11, %c0_12] : memref<2x16xf32, #tpu.memory_space<vmem>>, vector<2x16xf32>
      tpu.vector_store %arg7[%c0_11, %c0_12], %12 {strides = array<i32>} : memref<2x16xf32, #tpu.memory_space<vmem>>, vector<2x16xf32>,
    } else {
    }
    %c0 = arith.constant 0 : index
    %c0_1 = arith.constant 0 : index
    %3 = vector.load %arg7[%c0, %c0_1] : memref<2x16xf32, #tpu.memory_space<vmem>>, vector<2x16xf32>
    %c0_2 = arith.constant 0 : index
    %c0_3 = arith.constant 0 : index
    %4 = vector.load %arg3[%c0_2, %c0_3] : memref<2x32xbf16, #tpu.memory_space<vmem>>, vector<2x32xbf16>
    %c0_4 = arith.constant 0 : index
    %c0_5 = arith.constant 0 : index
    %5 = vector.load %arg4[%c0_4, %c0_5] : memref<32x16xbf16, #tpu.memory_space<vmem>>, vector<32x16xbf16>
    %cst = arith.constant dense<0.000000e+00> : vector<2x16xf32>
    %6 = tpu.matmul %4, %5, %cst {dimension_numbers = #tpu.dot_dimension_numbers<[1], [0], [0], [1], [0, 0, 1, 1], [], []>} : vector<2x32xbf16>, vector<32x16xbf16>, vector<2x16xf32> -> vector<2x16xf32>
    %7 = arith.addf %3, %6 : vector<2x16xf32>
    %c0_6 = arith.constant 0 : index
    %c0_7 = arith.constant 0 : index
    %8 = vector.load %arg7[%c0_6, %c0_7] : memref<2x16xf32, #tpu.memory_space<vmem>>, vector<2x16xf32>
    tpu.vector_store %arg7[%c0_6, %c0_7], %7 {strides = array<i32>} : memref<2x16xf32, #tpu.memory_space<vmem>>, vector<2x16xf32>,
    %c0_i32_8 = arith.constant 0 : i32
    %9 = arith.cmpi eq, %arg2, %c0_i32_8 : i32
    %10 = arith.extui %9 : i1 to i32
    %c0_i32_9 = arith.constant 0 : i32
    %11 = arith.cmpi ne, %10, %c0_i32_9 : i32
    scf.if %11 {
      %c0_10 = arith.constant 0 : index
      %c0_11 = arith.constant 0 : index
      %12 = vector.load %arg7[%c0_10, %c0_11] : memref<2x16xf32, #tpu.memory_space<vmem>>, vector<2x16xf32>
      %c0_12 = arith.constant 0 : index
      %c0_13 = arith.constant 0 : index
      %13 = vector.load %arg5[%c0_12, %c0_13] : memref<1x16xf32, #tpu.memory_space<vmem>>, vector<1x16xf32>
      %14 = vector.broadcast %13 : vector<1x16xf32> to vector<2x16xf32>
      %15 = arith.addf %12, %14 : vector<2x16xf32>
      %c0_14 = arith.constant 0 : index
      %c0_15 = arith.constant 0 : index
      %16 = vector.load %arg6[%c0_14, %c0_15] : memref<2x16xf32, #tpu.memory_space<vmem>>, vector<2x16xf32>
      tpu.vector_store %arg6[%c0_14, %c0_15], %15 {strides = array<i32>} : memref<2x16xf32, #tpu.memory_space<vmem>>, vector<2x16xf32>,
    } else {
    }
    return
  }
  func.func @transform_0(%arg0: i32, %arg1: i32, %arg2: i32) -> (i32, i32) {
    %c0_i32 = arith.constant 0 : i32
    return %arg0, %arg2 : i32, i32
  }
  func.func @transform_1(%arg0: i32, %arg1: i32, %arg2: i32) -> (i32, i32) {
    %c0_i32 = arith.constant 0 : i32
    return %arg2, %arg1 : i32, i32
  }
  func.func @transform_2(%arg0: i32, %arg1: i32, %arg2: i32) -> (i32, i32) {
    %c0_i32 = arith.constant 0 : i32
    %c0_i32_0 = arith.constant 0 : i32
    return %c0_i32, %arg1 : i32, i32
  }
  func.func @transform_3(%arg0: i32, %arg1: i32, %arg2: i32) -> (i32, i32) {
    %c0_i32 = arith.constant 0 : i32
    return %arg0, %arg1 : i32, i32
  }
}

</mosaic_0001>

<llo_original>
// kernel: vit_forward.17
$region0: #{vit_forward.17}
  #allocation0 [shape = 'u32[]', space=smem, size = 0x4, offset = 0x4, fixed_abs, tag = 'smem constant byte address 0x4 - core index']
  #allocation1 [shape = 'u32[72,128]{1,0:T(1,128)}', space=vmem, size = 0x9000, scoped, tag = 'internal scratch']
  #allocation2 [shape = 'f32[32,32]{1,0:T(8,128)}', space=vmem, size = 0x4000, scoped, tag = 'scratch operand']
  %s0 = inlined_call_operand.vmem [shape: bf16[32,32], index: 0, kind: input, shape index: {}]
  %s1 = inlined_call_operand.vmem [shape: bf16[32,32], index: 1, kind: input, shape index: {}]
  %s2 = inlined_call_operand.vmem [shape: f32[1,32], index: 2, kind: input, shape index: {}]
  %s3 = inlined_call_operand.vmem [shape: bf16[32,32], index: 3, kind: input, shape index: {}]
  %s4 = inlined_call_operand.vmem [shape: bf16[32,32], index: 4, kind: output, shape index: {}]
  %s5 = sld [smem:[#allocation0]]
  $region34: #{vit_forward.17} parent=0
    _
  %s7 = ssub.s32 1, %s5
  %s8 = scalar_select 0, %s7, %s5
  // Predicated region
  $region2: #{vit_forward.17} parent=0 // pred_check
    _
  $region3: #{vit_forward.17} parent=0 // pred_check_branch
    %10 = sbr.rel (0) target = $region5
  $region4: #{vit_forward.17} parent=0 // pred_region
    _
  $region5: #{vit_forward.17} parent=0 // pred_fallthru
    _
  // Predicated region
  $region6: #{vit_forward.17} parent=0 // pred_check
    _
  $region7: #{vit_forward.17} parent=0 // pred_check_branch
    %12 = sbr.rel (0) target = $region9
  $region8: #{vit_forward.17} parent=0 // pred_region
    _
  $region9: #{vit_forward.17} parent=0 // pred_fallthru
    _
  // Predicated region
  $region10: #{vit_forward.17} parent=0 // pred_check
    _
  $region11: #{vit_forward.17} parent=0 // pred_check_branch
    %14 = sbr.rel (0) target = $region13
  $region12: #{vit_forward.17} parent=0 // pred_region
    _
  $region13: #{vit_forward.17} parent=0 // pred_fallthru
    _
  // Predicated region
  $region14: #{vit_forward.17} parent=0 // pred_check
    _
  $region15: #{vit_forward.17} parent=0 // pred_check_branch
    %16 = sbr.rel (0) target = $region17
  $region16: #{vit_forward.17} parent=0 // pred_region
    _
  $region17: #{vit_forward.17} parent=0 // pred_fallthru
    _
  %p18 = scmp.eq.s32.totalorder 0, 0
  // Predicated region
  $region18: #{vit_forward.17} parent=0 // pred_check
    %p19 = pneg %p18
  $region19: #{vit_forward.17} parent=0 // pred_check_branch
    %21 = sbr.rel (%p19) target = $region21
  $region20: #{vit_forward.17} parent=0 // pred_region
    %vm22 = vcmask 261120
    %23 = vst.msk [vmem:[#allocation2] sm:$0xff] %vm22, 0.0
    %24 = vst.msk [vmem:[#allocation2 + $0x8] sm:$0xff] %vm22, 0.0
    %25 = vst.msk [vmem:[#allocation2 + $0x10] sm:$0xff] %vm22, 0.0
    %26 = vst.msk [vmem:[#allocation2 + $0x18] sm:$0xff] %vm22, 0.0
  $region21: #{vit_forward.17} parent=0 // pred_fallthru
    _
  %v27 = vld [vmem:[#allocation2] sm:$0xff]
  %v28 = vld [vmem:[#allocation2 + $0x8] sm:$0xff]
  %v29 = vld [vmem:[#allocation2 + $0x10] sm:$0xff]
  %v30 = vld [vmem:[#allocation2 + $0x18] sm:$0xff]
  %v31 = vld [vmem:[%s0] sm:$0xf]
  %v32 = vld [vmem:[%s0 + $0x4] sm:$0xf]
  %v33 = vld [vmem:[%s0 + $0x8] sm:$0xf]
  %v34 = vld [vmem:[%s0 + $0xc] sm:$0xf]
  %v35 = vld [vmem:[%s1] sm:$0xf]
  %v36 = vld [vmem:[%s1 + $0x4] sm:$0xf]
  %v37 = vld [vmem:[%s1 + $0x8] sm:$0xf]
  %v38 = vld [vmem:[%s1 + $0xc] sm:$0xf]
  %v43 = vunpack.c.l.b16 %v31
  %v44 = vunpack.c.l.b16 %v32
  %v45 = vunpack.c.l.b16 %v33
  %v46 = vunpack.c.l.b16 %v34
  %v47 = vpack.c.b16 %v44, %v43
  %v48 = vpack.c.b16 %v46, %v45
  %v53 = vunpack.c.l.b16 %v35
  %v54 = vunpack.c.l.b16 %v36
  %v55 = vunpack.c.l.b16 %v37
  %v56 = vunpack.c.l.b16 %v38
  %v57 = vpack.c.b16 %v54, %v53
  %v58 = vpack.c.b16 %v56, %v55
  %vm61 = vcmask 261120
  %v63 = vsel %vm61, %v47, 0
  %v66 = vsel %vm61, %v48, 0
  %68 = vmatpush.bf16.msra.mxu0 0
  %69 = vmatpush.bf16.msra.mxu0 0
  %70 = vmatpush.bf16.msra.mxu0 0
  %71 = vmatpush.bf16.msra.mxu0 0
  %72 = vmatpush.bf16.msra.mxu0 0
  %73 = vmatpush.bf16.msra.mxu0 0
  %74 = vmatpush.bf16.msra.mxu0 %v58
  %75 = vmatpush.bf16.msra.mxu0 %v57
  %76 = vmatmul.bf16.gmra.mxu0 %v63
  %v77 = vpop.f32.mrf.mxu0
  %v78 = vadd.f32 0.0, %v77
  %v79 = vpop.f32.mrf.mxu0
  %v80 = vadd.f32 0.0, %v79
  %81 = vmatmul.bf16.gmra.mxu0 %v66
  %v82 = vpop.f32.mrf.mxu0
  %v83 = vadd.f32 0.0, %v82
  %v84 = vpop.f32.mrf.mxu0
  %v85 = vadd.f32 0.0, %v84
  %86 = vdwg.mxu0
  %v87 = vadd.f32 %v27, %v78
  %v88 = vadd.f32 %v28, %v80
  %v89 = vadd.f32 %v29, %v83
  %v90 = vadd.f32 %v30, %v85
  %91 = vst.msk [vmem:[#allocation2] sm:$0xff] %vm61, %v87
  %92 = vst.msk [vmem:[#allocation2 + $0x8] sm:$0xff] %vm61, %v88
  %93 = vst.msk [vmem:[#allocation2 + $0x10] sm:$0xff] %vm61, %v89
  %94 = vst.msk [vmem:[#allocation2 + $0x18] sm:$0xff] %vm61, %v90
  // Predicated region
  $region22: #{vit_forward.17} parent=0 // pred_check
    %p95 = pneg %p18
  $region23: #{vit_forward.17} parent=0 // pred_check_branch
    %97 = sbr.rel (%p95) target = $region25
  $region24: #{vit_forward.17} parent=0 // pred_region
    %v98 = vld [vmem:[#allocation2] sm:$0xff]
    %v99 = vld [vmem:[#allocation2 + $0x8] sm:$0xff]
    %v100 = vld [vmem:[#allocation2 + $0x10] sm:$0xff]
    %v101 = vld [vmem:[#allocation2 + $0x18] sm:$0xff]
    %v102 = vld [vmem:[%s2] sm:$0x1]
    %v104 = vperm.slane %v102, 0
    %v106 = vadd.f32 %v98, %v104
    %v107 = vadd.f32 %v99, %v104
    %v108 = vadd.f32 %v100, %v104
    %v109 = vadd.f32 %v101, %v104
    %v110 = vld [vmem:[%s3] sm:$0xf]
    %v111 = vld [vmem:[%s3 + $0x4] sm:$0xf]
    %v112 = vld [vmem:[%s3 + $0x8] sm:$0xf]
    %v113 = vld [vmem:[%s3 + $0xc] sm:$0xf]
    %v114 = vunpack.c.l.bf16 %v110
    %v115 = vunpack.c.l.bf16 %v111
    %v116 = vunpack.c.l.bf16 %v112
    %v117 = vunpack.c.l.bf16 %v113
    %v118 = vadd.f32 %v106, %v114
    %v119 = vadd.f32 %v107, %v115
    %v120 = vadd.f32 %v108, %v116
    %v121 = vadd.f32 %v109, %v117
    %v122 = vpack.c.bf16 %v118, %v118
    %v123 = vpack.c.bf16 %v119, %v119
    %v124 = vpack.c.bf16 %v120, %v120
    %v125 = vpack.c.bf16 %v121, %v121
    %vm126 = vcmask 257024
    %127 = vst.msk [vmem:[%s4] sm:$0xf] %vm126, %v122
    %128 = vst.msk [vmem:[%s4 + $0x4] sm:$0xf] %vm126, %v123
    %129 = vst.msk [vmem:[%s4 + $0x8] sm:$0xf] %vm126, %v124
    %130 = vst.msk [vmem:[%s4 + $0xc] sm:$0xf] %vm126, %v125
  $region25: #{vit_forward.17} parent=0 // pred_fallthru
    _
  // Predicated region
  $region26: #{vit_forward.17} parent=0 // pred_check
    _
  $region27: #{vit_forward.17} parent=0 // pred_check_branch
    %132 = sbr.rel (0) target = $region29
  $region28: #{vit_forward.17} parent=0 // pred_region
    _
  $region29: #{vit_forward.17} parent=0 // pred_fallthru
    _
  // Predicated region
  $region30: #{vit_forward.17} parent=0 // pred_check
    _
  $region31: #{vit_forward.17} parent=0 // pred_check_branch
    %134 = sbr.rel (0) target = $region33
  $region32: #{vit_forward.17} parent=0 // pred_region
    _
  $region33: #{vit_forward.17} parent=0 // pred_fallthru
    _

// kernel: vit_forward.14
$region0: #{vit_forward.14}
  #allocation0 [shape = 'u32[]', space=smem, size = 0x4, offset = 0x4, fixed_abs, tag = 'smem constant byte address 0x4 - core index']
  #allocation1 [shape = 'u32[72,128]{1,0:T(1,128)}', space=vmem, size = 0x9000, scoped, tag = 'internal scratch']
  %s0 = inlined_call_operand.vmem [shape: bf16[2,16,48], index: 0, kind: input, shape index: {}]
  %s1 = inlined_call_operand.vmem [shape: bf16[48,32], index: 1, kind: input, shape index: {}]
  %s2 = inlined_call_operand.vmem [shape: f32[1,32], index: 2, kind: input, shape index: {}]
  %s3 = inlined_call_operand.vmem [shape: f32[16,32], index: 3, kind: input, shape index: {}]
  %s4 = inlined_call_operand.vmem [shape: bf16[2,16,32], index: 4, kind: output, shape index: {}]
  %s5 = sld [smem:[#allocation0]]
  $region49: #{vit_forward.14} parent=0
    _
  %s7 = ssub.s32 1, %s5
  %s8 = scalar_select 0, %s7, %s5
  loop: start=0, step=1, limit=4
  $region2: #{vit_forward.14} parent=0 // loop_pre_header
    _
  $region3: #{vit_forward.14} parent=0 // loop_header
    %s10 = sphi 0, %s14
    %p11 = scmp.ge.s32.totalorder %s10, 4
    %s20 = sphi 0, %s22
    %s23 = sphi 0, %s20
    %s24 = sphi 0, %s23
    %s40 = sphi 0, %s24
    %s44 = sphi 0, %s44
    %s46 = sphi 0, %s44
    %s47 = sphi 0, %s46
    %s61 = sphi 0, %s47
    %s65 = sphi 0, %s65
    %s67 = sphi 0, %s65
    %s68 = sphi 0, %s67
    %s82 = sphi 0, %s68
    %s86 = sphi 0, %s86
    %s88 = sphi 0, %s86
    %s89 = sphi 0, %s88
    %s103 = sphi 0, %s89
    %s109 = sphi 0, %s111
    %s112 = sphi 0, %s109
    %s113 = sphi 0, %s112
    %s129 = sphi 0, %s113
  $region4: #{vit_forward.14} parent=0 // loop_header_branch
    %13 = sbr.rel (%p11) target = $region8
  $region5: #{vit_forward.14} parent=0 // loop_body
    %s15 = ssub.s32 %s10, 1
    %s16 = ssub.s32 %s10, 2
    %s17 = sadd.s32 %s10, 1
    %s18 = ssub.s32 %s10, %s17
    %p19 = scmp.eq.s32.totalorder %s18, 0
    %s21 = sadd.s32 %s20, 1
    %s22 = scalar_select %p19, %s20, %s21
    %p25 = pneg %p19
    %p26 = scmp.eq.s32.totalorder %s10, 1
    %p27 = por %p25, %p26
    %p28 = scmp.ne.s32.totalorder %s20, %s23
    %p29 = scmp.eq.s32.totalorder %s10, 0
    %p30 = por %p28, %p29
    %p31 = scmp.ne.s32.totalorder %s20, %s23
    %p32 = scmp.eq.s32.totalorder %s15, 1
    %p33 = por %p31, %p32
    %p34 = scmp.ne.s32.totalorder %s23, %s24
    %p35 = scmp.eq.s32.totalorder %s15, 0
    %p36 = por %p34, %p35
    %p37 = scmp.ne.s32.totalorder %s23, %s24
    %p38 = scmp.eq.s32.totalorder %s16, 1
    %p39 = por %p37, %p38
    %p41 = scmp.ne.s32.totalorder %s24, %s40
    %p42 = scmp.eq.s32.totalorder %s16, 0
    %p43 = por %p41, %p42
    %s45 = sadd.s32 %s44, 1
    %p48 = scmp.eq.s32.totalorder %s10, 1
    %p49 = scmp.ne.s32.totalorder %s44, %s46
    %p50 = scmp.eq.s32.totalorder %s10, 0
    %p51 = por %p49, %p50
    %p52 = scmp.ne.s32.totalorder %s44, %s46
    %p53 = scmp.eq.s32.totalorder %s15, 1
    %p54 = por %p52, %p53
    %p55 = scmp.ne.s32.totalorder %s46, %s47
    %p56 = scmp.eq.s32.totalorder %s15, 0
    %p57 = por %p55, %p56
    %p58 = scmp.ne.s32.totalorder %s46, %s47
    %p59 = scmp.eq.s32.totalorder %s16, 1
    %p60 = por %p58, %p59
    %p62 = scmp.ne.s32.totalorder %s47, %s61
    %p63 = scmp.eq.s32.totalorder %s16, 0
    %p64 = por %p62, %p63
    %s66 = sadd.s32 %s65, 1
    %p69 = scmp.eq.s32.totalorder %s10, 1
    %p70 = scmp.ne.s32.totalorder %s65, %s67
    %p71 = scmp.eq.s32.totalorder %s10, 0
    %p72 = por %p70, %p71
    %p73 = scmp.ne.s32.totalorder %s65, %s67
    %p74 = scmp.eq.s32.totalorder %s15, 1
    %p75 = por %p73, %p74
    %p76 = scmp.ne.s32.totalorder %s67, %s68
    %p77 = scmp.eq.s32.totalorder %s15, 0
    %p78 = por %p76, %p77
    %p79 = scmp.ne.s32.totalorder %s67, %s68
    %p80 = scmp.eq.s32.totalorder %s16, 1
    %p81 = por %p79, %p80
    %p83 = scmp.ne.s32.totalorder %s68, %s82
    %p84 = scmp.eq.s32.totalorder %s16, 0
    %p85 = por %p83, %p84
    %s87 = sadd.s32 %s86, 1
    %p90 = scmp.eq.s32.totalorder %s10, 1
    %p91 = scmp.ne.s32.totalorder %s86, %s88
    %p92 = scmp.eq.s32.totalorder %s10, 0
    %p93 = por %p91, %p92
    %p94 = scmp.ne.s32.totalorder %s86, %s88
    %p95 = scmp.eq.s32.totalorder %s15, 1
    %p96 = por %p94, %p95
    %p97 = scmp.ne.s32.totalorder %s88, %s89
    %p98 = scmp.eq.s32.totalorder %s15, 0
    %p99 = por %p97, %p98
    %p100 = scmp.ne.s32.totalorder %s88, %s89
    %p101 = scmp.eq.s32.totalorder %s16, 1
    %p102 = por %p100, %p101
    %p104 = scmp.ne.s32.totalorder %s89, %s103
    %p105 = scmp.eq.s32.totalorder %s16, 0
    %p106 = por %p104, %p105
    %s107 = ssub.s32 %s10, %s17
    %p108 = scmp.eq.s32.totalorder %s107, 0
    %s110 = sadd.s32 %s109, 1
    %s111 = scalar_select %p108, %s109, %s110
    %p114 = pneg %p108
    %p115 = scmp.eq.s32.totalorder %s10, 1
    %p116 = por %p114, %p115
    %p117 = scmp.ne.s32.totalorder %s109, %s112
    %p118 = scmp.eq.s32.totalorder %s10, 0
    %p119 = por %p117, %p118
    %p120 = scmp.ne.s32.totalorder %s109, %s112
    %p121 = scmp.eq.s32.totalorder %s15, 1
    %p122 = por %p120, %p121
    %p123 = scmp.ne.s32.totalorder %s112, %s113
    %p124 = scmp.eq.s32.totalorder %s15, 0
    %p125 = por %p123, %p124
    %p126 = scmp.ne.s32.totalorder %s112, %s113
    %p127 = scmp.eq.s32.totalorder %s16, 1
    %p128 = por %p126, %p127
    %p130 = scmp.ne.s32.totalorder %s113, %s129
    %p131 = scmp.eq.s32.totalorder %s16, 0
    %p132 = por %p130, %p131
    %p133 = scmp.le.s32.totalorder 1, %s10
    %p134 = scmp.lt.s32.totalorder %s10, 3
    %p135 = pnand %p133, %p134
    %p136 = pneg %p135
    // Predicated region
    $region9: #{vit_forward.14} parent=5 // pred_check
      _
    $region10: #{vit_forward.14} parent=5 // pred_check_branch
      %138 = sbr.rel (%p135) target = $region12
    $region11: #{vit_forward.14} parent=5 // pred_region
      %s139 = ssub.s32 %s10, 1
      // Predicated region
      $region13: #{vit_forward.14} parent=11 // pred_check
        %p140 = pneg %p57
      $region14: #{vit_forward.14} parent=11 // pred_check_branch
        %142 = sbr.rel (%p140) target = $region16
      $region15: #{vit_forward.14} parent=11 // pred_region
        _
      $region16: #{vit_forward.14} parent=11 // pred_fallthru
        _
      // Predicated region
      $region17: #{vit_forward.14} parent=11 // pred_check
        %p143 = pneg %p78
      $region18: #{vit_forward.14} parent=11 // pred_check_branch
        %145 = sbr.rel (%p143) target = $region20
      $region19: #{vit_forward.14} parent=11 // pred_region
        _
      $region20: #{vit_forward.14} parent=11 // pred_fallthru
        _
      // Predicated region
      $region21: #{vit_forward.14} parent=11 // pred_check
        %p146 = pneg %p99
      $region22: #{vit_forward.14} parent=11 // pred_check_branch
        %148 = sbr.rel (%p146) target = $region24
      $region23: #{vit_forward.14} parent=11 // pred_region
        _
      $region24: #{vit_forward.14} parent=11 // pred_fallthru
        _
    $region12: #{vit_forward.14} parent=5 // pred_fallthru
      _
    %p149 = scmp.lt.s32.totalorder %s10, 2
    // Predicated region
    $region25: #{vit_forward.14} parent=5 // pred_check
      %p150 = pneg %p149
    $region26: #{vit_forward.14} parent=5 // pred_check_branch
      %152 = sbr.rel (%p150) target = $region28
    $region27: #{vit_forward.14} parent=5 // pred_region
      // Predicated region
      $region29: #{vit_forward.14} parent=27 // pred_check
        %p153 = pneg %p30
      $region30: #{vit_forward.14} parent=27 // pred_check_branch
        %155 = sbr.rel (%p153) target = $region32
      $region31: #{vit_forward.14} parent=27 // pred_region
        %p156 = scmp.lt.s32.totalorder %s10, 1
        %s157 = scalar_select %p156, %s10, 1
        %s158 = smul.addr %s157, 2
        %s159 = smul.addr %s158, 4
        %s160 = scalar_lea.vmem %s0, %s159
      $region32: #{vit_forward.14} parent=27 // pred_fallthru
        _
    $region28: #{vit_forward.14} parent=5 // pred_fallthru
      _
    %p161 = scmp.le.s32.totalorder 1, %s10
    %p162 = scmp.lt.s32.totalorder %s10, 3
    %p163 = pnand %p161, %p162
    %p164 = pneg %p163
    // Predicated region
    $region33: #{vit_forward.14} parent=5 // pred_check
      _
    $region34: #{vit_forward.14} parent=5 // pred_check_branch
      %166 = sbr.rel (%p163) target = $region36
    $region35: #{vit_forward.14} parent=5 // pred_region
      %s167 = ssub.s32 %s10, 1
      %p168 = scmp.lt.s32.totalorder %s15, 1
      %s169 = scalar_select %p168, %s15, 1
      %s170 = smul.addr %s169, 2
      %s171 = smul.addr %s170, 4
      %s172 = scalar_lea.vmem %s0, %s171
      %p173 = pneg %p36
      %p174 = pneg %p33
      %p175 = pneg %p57
      %p176 = pneg %p54
      %p177 = pneg %p78
      %p178 = pneg %p75
      %p179 = pneg %p99
      %p180 = pneg %p96
      %p181 = pneg %p125
      %p182 = pneg %p122
      %p183 = scmp.lt.s32.totalorder %s15, 1
      %s184 = scalar_select %p183, %s15, 1
      %s185 = smul.addr %s184, 2
      %s186 = smul.addr %s185, 4
      %s187 = scalar_lea.vmem %s4, %s186
      %p188 = scmp.lt.s32.totalorder %s15, 1
      %s189 = scalar_select %p188, %s15, 1
      %s190 = smul.addr %s189, 2
      %s191 = smul.addr %s190, 4
      %s192 = scalar_lea.vmem %s0, %s191
      %p193 = scmp.lt.s32.totalorder %s15, 1
      %s194 = scalar_select %p193, %s15, 1
      %s195 = smul.addr %s194, 2
      %s196 = smul.addr %s195, 4
      %s197 = scalar_lea.vmem %s4, %s196
      %v199 = vld [vmem:[%s192] sm:$0xf]
      %v200 = vld [vmem:[%s192 + $0x4] sm:$0xf]
      %v201 = vld [vmem:[%s1] sm:$0xf]
      %v202 = vld [vmem:[%s1 + $0x4] sm:$0xf]
      %v203 = vld [vmem:[%s1 + $0x8] sm:$0xf]
      %v204 = vld [vmem:[%s1 + $0xc] sm:$0xf]
      %v205 = vld [vmem:[%s1 + $0x10] sm:$0xf]
      %v206 = vld [vmem:[%s1 + $0x14] sm:$0xf]
      %v207 = vld [vmem:[%s2] sm:$0x1]
      %v209 = vperm.slane %v207, 0
      %v213 = vunpack.c.l.b16 %v199
      %v214 = vunpack.c.l.b16 %v200
      %v215 = vpack.c.b16 %v214, %v213
      %v222 = vunpack.c.l.b16 %v201
      %v223 = vunpack.c.l.b16 %v202
      %v224 = vunpack.c.l.b16 %v203
      %v225 = vunpack.c.l.b16 %v204
      %v226 = vunpack.c.l.b16 %v205
      %v227 = vunpack.c.l.b16 %v206
      %v228 = vpack.c.b16 %v223, %v222
      %v229 = vpack.c.b16 %v225, %v224
      %v230 = vpack.c.b16 %v227, %v226
      %vm234 = vcmask 392192
      %v236 = vsel %vm234, %v215, 0
      %238 = vmatpush.bf16.msra.mxu0 0
      %239 = vmatpush.bf16.msra.mxu0 0
      %240 = vmatpush.bf16.msra.mxu0 0
      %241 = vmatpush.bf16.msra.mxu0 0
      %242 = vmatpush.bf16.msra.mxu0 0
      %243 = vmatpush.bf16.msra.mxu0 %v230
      %244 = vmatpush.bf16.msra.mxu0 %v229
      %245 = vmatpush.bf16.msra.mxu0 %v228
      %246 = vmatmul.bf16.gmra.mxu0 %v236
      %v247 = vpop.f32.mrf.mxu0
      %v248 = vadd.f32 %v209, %v247
      %v249 = vpop.f32.mrf.mxu0
      %v250 = vadd.f32 %v209, %v249
      %251 = vdwg.mxu0
      %v252 = vld [vmem:[%s3] sm:$0xff]
      %v253 = vld [vmem:[%s3 + $0x8] sm:$0xff]
      %v254 = vadd.f32 %v248, %v252
      %v255 = vadd.f32 %v250, %v253
      %v256 = vpack.c.bf16 %v254, %v254
      %v257 = vpack.c.bf16 %v255, %v255
      %vm258 = vcmask 257024
      %259 = vst.msk [vmem:[%s197] sm:$0xf] %vm258, %v256
      %260 = vst.msk [vmem:[%s197 + $0x4] sm:$0xf] %vm258, %v257
      %p261 = scmp.lt.s32.totalorder %s15, 1
      %s262 = scalar_select %p261, %s15, 1
      %s263 = smul.addr %s262, 2
      %s264 = smul.addr %s263, 4
      %s265 = scalar_lea.vmem %s4, %s264
      // Predicated region
      $region37: #{vit_forward.14} parent=35 // pred_check
        %p266 = pneg %p122
      $region38: #{vit_forward.14} parent=35 // pred_check_branch
        %268 = sbr.rel (%p266) target = $region40
      $region39: #{vit_forward.14} parent=35 // pred_region
        _
      $region40: #{vit_forward.14} parent=35 // pred_fallthru
        _
    $region36: #{vit_forward.14} parent=5 // pred_fallthru
      _
    %p269 = scmp.le.s32.totalorder 2, %s10
    // Predicated region
    $region41: #{vit_forward.14} parent=5 // pred_check
      %p270 = pneg %p269
    $region42: #{vit_forward.14} parent=5 // pred_check_branch
      %272 = sbr.rel (%p270) target = $region44
    $region43: #{vit_forward.14} parent=5 // pred_region
      %s273 = ssub.s32 %s10, 2
      // Predicated region
      $region45: #{vit_forward.14} parent=43 // pred_check
        %p274 = pneg %p128
      $region46: #{vit_forward.14} parent=43 // pred_check_branch
        %276 = sbr.rel (%p274) target = $region48
      $region47: #{vit_forward.14} parent=43 // pred_region
        %p277 = scmp.lt.s32.totalorder %s16, 1
        %s278 = scalar_select %p277, %s16, 1
        %s279 = smul.addr %s278, 2
        %s280 = smul.addr %s279, 4
        %s281 = scalar_lea.vmem %s4, %s280
      $region48: #{vit_forward.14} parent=43 // pred_fallthru
        _
    $region44: #{vit_forward.14} parent=5 // pred_fallthru
      _
  $region6: #{vit_forward.14} parent=0 // loop_footer
    %s14 = sadd.s32 1, %s10
  $region7: #{vit_forward.14} parent=0 // loop_footer_branch
    %9 = sbr.rel target = $region3
  $region8: #{vit_forward.14} parent=0 // loop_exit
    _

// kernel: vit_forward.15
$region0: #{vit_forward.15}
  #allocation0 [shape = 'u32[]', space=smem, size = 0x4, offset = 0x4, fixed_abs, tag = 'smem constant byte address 0x4 - core index']
  #allocation1 [shape = 'u32[72,128]{1,0:T(1,128)}', space=vmem, size = 0x9000, scoped, tag = 'internal scratch']
  #allocation2 [shape = 'bf16[32,32]{1,0:T(8,128)(2,1)}', space=vmem, size = 0x2000, scoped, tag = 'scratch operand']
  %s0 = inlined_call_operand.vmem [shape: bf16[32,32], index: 0, kind: input, shape index: {}]
  %s1 = inlined_call_operand.vmem [shape: f32[1,32], index: 1, kind: input, shape index: {}]
  %s2 = inlined_call_operand.vmem [shape: f32[1,32], index: 2, kind: input, shape index: {}]
  %s3 = inlined_call_operand.vmem [shape: bf16[32,96], index: 3, kind: input, shape index: {}]
  %s4 = inlined_call_operand.vmem [shape: f32[1,96], index: 4, kind: input, shape index: {}]
  %s5 = inlined_call_operand.vmem [shape: bf16[32,96], index: 5, kind: output, shape index: {}]
  %s6 = sld [smem:[#allocation0]]
  $region34: #{vit_forward.15} parent=0
    _
  %s8 = ssub.s32 1, %s6
  %s9 = scalar_select 0, %s8, %s6
  // Predicated region
  $region2: #{vit_forward.15} parent=0 // pred_check
    _
  $region3: #{vit_forward.15} parent=0 // pred_check_branch
    %11 = sbr.rel (0) target = $region5
  $region4: #{vit_forward.15} parent=0 // pred_region
    _
  $region5: #{vit_forward.15} parent=0 // pred_fallthru
    _
  // Predicated region
  $region6: #{vit_forward.15} parent=0 // pred_check
    _
  $region7: #{vit_forward.15} parent=0 // pred_check_branch
    %13 = sbr.rel (0) target = $region9
  $region8: #{vit_forward.15} parent=0 // pred_region
    _
  $region9: #{vit_forward.15} parent=0 // pred_fallthru
    _
  // Predicated region
  $region10: #{vit_forward.15} parent=0 // pred_check
    _
  $region11: #{vit_forward.15} parent=0 // pred_check_branch
    %15 = sbr.rel (0) target = $region13
  $region12: #{vit_forward.15} parent=0 // pred_region
    _
  $region13: #{vit_forward.15} parent=0 // pred_fallthru
    _
  // Predicated region
  $region14: #{vit_forward.15} parent=0 // pred_check
    _
  $region15: #{vit_forward.15} parent=0 // pred_check_branch
    %17 = sbr.rel (0) target = $region17
  $region16: #{vit_forward.15} parent=0 // pred_region
    _
  $region17: #{vit_forward.15} parent=0 // pred_fallthru
    _
  // Predicated region
  $region18: #{vit_forward.15} parent=0 // pred_check
    _
  $region19: #{vit_forward.15} parent=0 // pred_check_branch
    %19 = sbr.rel (0) target = $region21
  $region20: #{vit_forward.15} parent=0 // pred_region
    _
  $region21: #{vit_forward.15} parent=0 // pred_fallthru
    _
  %p21 = scmp.eq.s32.totalorder 0, 0
  // Predicated region
  $region22: #{vit_forward.15} parent=0 // pred_check
    %p22 = pneg %p21
  $region23: #{vit_forward.15} parent=0 // pred_check_branch
    %24 = sbr.rel (%p22) target = $region25
  $region24: #{vit_forward.15} parent=0 // pred_region
    %v25 = vld [vmem:[%s0] sm:$0xf]
    %v26 = vld [vmem:[%s0 + $0x4] sm:$0xf]
    %v27 = vld [vmem:[%s0 + $0x8] sm:$0xf]
    %v28 = vld [vmem:[%s0 + $0xc] sm:$0xf]
    %v29 = vunpack.c.l.bf16 %v25
    %v30 = vunpack.c.l.bf16 %v26
    %v31 = vunpack.c.l.bf16 %v27
    %v32 = vunpack.c.l.bf16 %v28
    %vm33 = vcmask 261120
    %v34 = vsel %vm33, %v29, 0.0
    %35 = vadd.xlane.f32.xlu0 %v34
    %v36 = vpop.xlane.xlu0 %35
    %v37 = vsel %vm33, %v30, 0.0
    %38 = vadd.xlane.f32.xlu0 %v37
    %v39 = vpop.xlane.xlu0 %38
    %v40 = vsel %vm33, %v31, 0.0
    %41 = vadd.xlane.f32.xlu0 %v40
    %v42 = vpop.xlane.xlu0 %41
    %v43 = vsel %vm33, %v32, 0.0
    %44 = vadd.xlane.f32.xlu0 %v43
    %v45 = vpop.xlane.xlu0 %44
    %v46 = vrcp.pop 32.0
    %v47 = vmul.f32 32.0, %v46
    %v48 = vsub.f32 1.0, %v47
    %v49 = vmul.f32 %v46, %v48
    %v50 = vadd.f32 %v46, %v49
    %vm51 = vweird.f32 %v46
    %v52 = vsel %vm51, %v46, %v50
    %v53 = vmul.f32 %v36, %v52
    %v54 = vmul.f32 %v39, %v52
    %v55 = vmul.f32 %v42, %v52
    %v56 = vmul.f32 %v45, %v52
    %v57 = vsub.f32 %v29, %v53
    %v58 = vsub.f32 %v30, %v54
    %v59 = vsub.f32 %v31, %v55
    %v60 = vsub.f32 %v32, %v56
    %v61 = vmul.f32 %v57, %v57
    %v62 = vmul.f32 %v58, %v58
    %v63 = vmul.f32 %v59, %v59
    %v64 = vmul.f32 %v60, %v60
    %v65 = vsel %vm33, %v61, 0.0
    %66 = vadd.xlane.f32.xlu0 %v65
    %v67 = vpop.xlane.xlu0 %66
    %v68 = vsel %vm33, %v62, 0.0
    %69 = vadd.xlane.f32.xlu0 %v68
    %v70 = vpop.xlane.xlu0 %69
    %v71 = vsel %vm33, %v63, 0.0
    %72 = vadd.xlane.f32.xlu0 %v71
    %v73 = vpop.xlane.xlu0 %72
    %v74 = vsel %vm33, %v64, 0.0
    %75 = vadd.xlane.f32.xlu0 %v74
    %v76 = vpop.xlane.xlu0 %75
    %v77 = vmul.f32 %v67, %v52
    %v78 = vmul.f32 %v70, %v52
    %v79 = vmul.f32 %v73, %v52
    %v80 = vmul.f32 %v76, %v52
    %v81 = vadd.f32 %v77, 1e-06
    %v82 = vadd.f32 %v78, 1e-06
    %v83 = vadd.f32 %v79, 1e-06
    %v84 = vadd.f32 %v80, 1e-06
    %v85 = vrsqrt.pop %v81
    %v86 = vmul.f32 %v85, %v81
    %v87 = vmul.f32 %v86, %v85
    %v88 = vmul.f32 0.5, %v87
    %v89 = vsub.f32 1.5, %v88
    %v90 = vmul.f32 %v85, %v89
    %vm91 = vweird.f32 %v81
    %vm92 = vweird.f32 %v85
    %vm93 = vmor %vm91, %vm92
    %v94 = vsel %vm93, %v85, %v90
    %v95 = vrsqrt.pop %v82
    %v96 = vmul.f32 %v95, %v82
    %v97 = vmul.f32 %v96, %v95
    %v98 = vmul.f32 0.5, %v97
    %v99 = vsub.f32 1.5, %v98
    %v100 = vmul.f32 %v95, %v99
    %vm101 = vweird.f32 %v82
    %vm102 = vweird.f32 %v95
    %vm103 = vmor %vm101, %vm102
    %v104 = vsel %vm103, %v95, %v100
    %v105 = vrsqrt.pop %v83
    %v106 = vmul.f32 %v105, %v83
    %v107 = vmul.f32 %v106, %v105
    %v108 = vmul.f32 0.5, %v107
    %v109 = vsub.f32 1.5, %v108
    %v110 = vmul.f32 %v105, %v109
    %vm111 = vweird.f32 %v83
    %vm112 = vweird.f32 %v105
    %vm113 = vmor %vm111, %vm112
    %v114 = vsel %vm113, %v105, %v110
    %v115 = vrsqrt.pop %v84
    %v116 = vmul.f32 %v115, %v84
    %v117 = vmul.f32 %v116, %v115
    %v118 = vmul.f32 0.5, %v117
    %v119 = vsub.f32 1.5, %v118
    %v120 = vmul.f32 %v115, %v119
    %vm121 = vweird.f32 %v84
    %vm122 = vweird.f32 %v115
    %vm123 = vmor %vm121, %vm122
    %v124 = vsel %vm123, %v115, %v120
    %v125 = vmul.f32 %v57, %v94
    %v126 = vmul.f32 %v58, %v104
    %v127 = vmul.f32 %v59, %v114
    %v128 = vmul.f32 %v60, %v124
    %v129 = vld [vmem:[%s1] sm:$0x1]
    %v131 = vperm.slane %v129, 0
    %v133 = vmul.f32 %v125, %v131
    %v134 = vmul.f32 %v126, %v131
    %v135 = vmul.f32 %v127, %v131
    %v136 = vmul.f32 %v128, %v131
    %v137 = vld [vmem:[%s2] sm:$0x1]
    %v139 = vperm.slane %v137, 0
    %v141 = vadd.f32 %v133, %v139
    %v142 = vadd.f32 %v134, %v139
    %v143 = vadd.f32 %v135, %v139
    %v144 = vadd.f32 %v136, %v139
    %v145 = vpack.c.bf16 %v141, %v141
    %v146 = vpack.c.bf16 %v142, %v142
    %v147 = vpack.c.bf16 %v143, %v143
    %v148 = vpack.c.bf16 %v144, %v144
    %vm149 = vcmask 257024
    %150 = vst.msk [vmem:[#allocation2] sm:$0xf] %vm149, %v145
    %151 = vst.msk [vmem:[#allocation2 + $0x4] sm:$0xf] %vm149, %v146
    %152 = vst.msk [vmem:[#allocation2 + $0x8] sm:$0xf] %vm149, %v147
    %153 = vst.msk [vmem:[#allocation2 + $0xc] sm:$0xf] %vm149, %v148
  $region25: #{vit_forward.15} parent=0 // pred_fallthru
    _
  %v154 = vld [vmem:[#allocation2] sm:$0xf]
  %v155 = vld [vmem:[#allocation2 + $0x4] sm:$0xf]
  %v156 = vld [vmem:[#allocation2 + $0x8] sm:$0xf]
  %v157 = vld [vmem:[#allocation2 + $0xc] sm:$0xf]
  %v158 = vld [vmem:[%s3] sm:$0xf]
  %v159 = vld [vmem:[%s3 + $0x4] sm:$0xf]
  %v160 = vld [vmem:[%s3 + $0x8] sm:$0xf]
  %v161 = vld [vmem:[%s3 + $0xc] sm:$0xf]
  %v162 = vld [vmem:[%s4] sm:$0x1]
  %v164 = vperm.slane %v162, 0
  %v170 = vunpack.c.l.b16 %v154
  %v171 = vunpack.c.l.b16 %v155
  %v172 = vunpack.c.l.b16 %v156
  %v173 = vunpack.c.l.b16 %v157
  %v174 = vpack.c.b16 %v171, %v170
  %v175 = vpack.c.b16 %v173, %v172
  %v180 = vunpack.c.l.b16 %v158
  %v181 = vunpack.c.l.b16 %v159
  %v182 = vunpack.c.l.b16 %v160
  %v183 = vunpack.c.l.b16 %v161
  %v184 = vpack.c.b16 %v181, %v180
  %v185 = vpack.c.b16 %v183, %v182
  %vm188 = vcmask 261120
  %v190 = vsel %vm188, %v174, 0
  %v193 = vsel %vm188, %v175, 0
  %195 = vmatpush.bf16.msra.mxu0 0
  %196 = vmatpush.bf16.msra.mxu0 0
  %197 = vmatpush.bf16.msra.mxu0 0
  %198 = vmatpush.bf16.msra.mxu0 0
  %199 = vmatpush.bf16.msra.mxu0 0
  %200 = vmatpush.bf16.msra.mxu0 0
  %201 = vmatpush.bf16.msra.mxu0 %v185
  %202 = vmatpush.bf16.msra.mxu0 %v184
  %203 = vmatmul.bf16.gmra.mxu0 %v190
  %v204 = vpop.f32.mrf.mxu0
  %v205 = vadd.f32 %v164, %v204
  %v206 = vpop.f32.mrf.mxu0
  %v207 = vadd.f32 %v164, %v206
  %208 = vmatmul.bf16.gmra.mxu0 %v193
  %v209 = vpop.f32.mrf.mxu0
  %v210 = vadd.f32 %v164, %v209
  %v211 = vpop.f32.mrf.mxu0
  %v212 = vadd.f32 %v164, %v211
  %213 = vdwg.mxu0
  %v214 = vpack.c.bf16 %v205, %v205
  %v215 = vpack.c.bf16 %v207, %v207
  %v216 = vpack.c.bf16 %v210, %v210
  %v217 = vpack.c.bf16 %v212, %v212
  %vm218 = vcmask 781312
  %219 = vst.msk [vmem:[%s5] sm:$0xf] %vm218, %v214
  %220 = vst.msk [vmem:[%s5 + $0x4] sm:$0xf] %vm218, %v215
  %221 = vst.msk [vmem:[%s5 + $0x8] sm:$0xf] %vm218, %v216
  %222 = vst.msk [vmem:[%s5 + $0xc] sm:$0xf] %vm218, %v217
  // Predicated region
  $region26: #{vit_forward.15} parent=0 // pred_check
    _
  $region27: #{vit_forward.15} parent=0 // pred_check_branch
    %224 = sbr.rel (0) target = $region29
  $region28: #{vit_forward.15} parent=0 // pred_region
    _
  $region29: #{vit_forward.15} parent=0 // pred_fallthru
    _
  // Predicated region
  $region30: #{vit_forward.15} parent=0 // pred_check
    _
  $region31: #{vit_forward.15} parent=0 // pred_check_branch
    %226 = sbr.rel (0) target = $region33
  $region32: #{vit_forward.15} parent=0 // pred_region
    _
  $region33: #{vit_forward.15} parent=0 // pred_fallthru
    _

// kernel: vit_forward.16
$region0: #{vit_forward.16}
  #allocation0 [shape = 'u32[]', space=smem, size = 0x4, offset = 0x4, fixed_abs, tag = 'smem constant byte address 0x4 - core index']
  #allocation1 [shape = 'u32[72,128]{1,0:T(1,128)}', space=vmem, size = 0x9000, scoped, tag = 'internal scratch']
  %s0 = inlined_call_operand.vmem [shape: bf16[2,16,96], index: 0, kind: input, shape index: {}]
  %s1 = inlined_call_operand.vmem [shape: bf16[2,16,32], index: 1, kind: output, shape index: {}]
  %s2 = sld [smem:[#allocation0]]
  $region37: #{vit_forward.16} parent=0
    _
  %s4 = ssub.s32 1, %s2
  %s5 = scalar_select 0, %s4, %s2
  loop: start=0, step=1, limit=4
  $region2: #{vit_forward.16} parent=0 // loop_pre_header
    _
  $region3: #{vit_forward.16} parent=0 // loop_header
    %s7 = sphi 0, %s11
    %p8 = scmp.ge.s32.totalorder %s7, 4
    %s17 = sphi 0, %s19
    %s20 = sphi 0, %s17
    %s21 = sphi 0, %s20
    %s37 = sphi 0, %s21
    %s43 = sphi 0, %s45
    %s46 = sphi 0, %s43
    %s47 = sphi 0, %s46
    %s63 = sphi 0, %s47
  $region4: #{vit_forward.16} parent=0 // loop_header_branch
    %10 = sbr.rel (%p8) target = $region8
  $region5: #{vit_forward.16} parent=0 // loop_body
    %s12 = ssub.s32 %s7, 1
    %s13 = ssub.s32 %s7, 2
    %s14 = sadd.s32 %s7, 1
    %s15 = ssub.s32 %s7, %s14
    %p16 = scmp.eq.s32.totalorder %s15, 0
    %s18 = sadd.s32 %s17, 1
    %s19 = scalar_select %p16, %s17, %s18
    %p22 = pneg %p16
    %p23 = scmp.eq.s32.totalorder %s7, 1
    %p24 = por %p22, %p23
    %p25 = scmp.ne.s32.totalorder %s17, %s20
    %p26 = scmp.eq.s32.totalorder %s7, 0
    %p27 = por %p25, %p26
    %p28 = scmp.ne.s32.totalorder %s17, %s20
    %p29 = scmp.eq.s32.totalorder %s12, 1
    %p30 = por %p28, %p29
    %p31 = scmp.ne.s32.totalorder %s20, %s21
    %p32 = scmp.eq.s32.totalorder %s12, 0
    %p33 = por %p31, %p32
    %p34 = scmp.ne.s32.totalorder %s20, %s21
    %p35 = scmp.eq.s32.totalorder %s13, 1
    %p36 = por %p34, %p35
    %p38 = scmp.ne.s32.totalorder %s21, %s37
    %p39 = scmp.eq.s32.totalorder %s13, 0
    %p40 = por %p38, %p39
    %s41 = ssub.s32 %s7, %s14
    %p42 = scmp.eq.s32.totalorder %s41, 0
    %s44 = sadd.s32 %s43, 1
    %s45 = scalar_select %p42, %s43, %s44
    %p48 = pneg %p42
    %p49 = scmp.eq.s32.totalorder %s7, 1
    %p50 = por %p48, %p49
    %p51 = scmp.ne.s32.totalorder %s43, %s46
    %p52 = scmp.eq.s32.totalorder %s7, 0
    %p53 = por %p51, %p52
    %p54 = scmp.ne.s32.totalorder %s43, %s46
    %p55 = scmp.eq.s32.totalorder %s12, 1
    %p56 = por %p54, %p55
    %p57 = scmp.ne.s32.totalorder %s46, %s47
    %p58 = scmp.eq.s32.totalorder %s12, 0
    %p59 = por %p57, %p58
    %p60 = scmp.ne.s32.totalorder %s46, %s47
    %p61 = scmp.eq.s32.totalorder %s13, 1
    %p62 = por %p60, %p61
    %p64 = scmp.ne.s32.totalorder %s47, %s63
    %p65 = scmp.eq.s32.totalorder %s13, 0
    %p66 = por %p64, %p65
    %p67 = scmp.le.s32.totalorder 1, %s7
    %p68 = scmp.lt.s32.totalorder %s7, 3
    %p69 = pnand %p67, %p68
    %p70 = pneg %p69
    // Predicated region
    $region9: #{vit_forward.16} parent=5 // pred_check
      _
    $region10: #{vit_forward.16} parent=5 // pred_check_branch
      %72 = sbr.rel (%p69) target = $region12
    $region11: #{vit_forward.16} parent=5 // pred_region
      %s73 = ssub.s32 %s7, 1
    $region12: #{vit_forward.16} parent=5 // pred_fallthru
      _
    %p74 = scmp.lt.s32.totalorder %s7, 2
    // Predicated region
    $region13: #{vit_forward.16} parent=5 // pred_check
      %p75 = pneg %p74
    $region14: #{vit_forward.16} parent=5 // pred_check_branch
      %77 = sbr.rel (%p75) target = $region16
    $region15: #{vit_forward.16} parent=5 // pred_region
      // Predicated region
      $region17: #{vit_forward.16} parent=15 // pred_check
        %p78 = pneg %p27
      $region18: #{vit_forward.16} parent=15 // pred_check_branch
        %80 = sbr.rel (%p78) target = $region20
      $region19: #{vit_forward.16} parent=15 // pred_region
        %p81 = scmp.lt.s32.totalorder %s7, 1
        %s82 = scalar_select %p81, %s7, 1
        %s83 = smul.addr %s82, 2
        %s84 = smul.addr %s83, 4
        %s85 = scalar_lea.vmem %s0, %s84
      $region20: #{vit_forward.16} parent=15 // pred_fallthru
        _
    $region16: #{vit_forward.16} parent=5 // pred_fallthru
      _
    %p86 = scmp.le.s32.totalorder 1, %s7
    %p87 = scmp.lt.s32.totalorder %s7, 3
    %p88 = pnand %p86, %p87
    %p89 = pneg %p88
    // Predicated region
    $region21: #{vit_forward.16} parent=5 // pred_check
      _
    $region22: #{vit_forward.16} parent=5 // pred_check_branch
      %91 = sbr.rel (%p88) target = $region24
    $region23: #{vit_forward.16} parent=5 // pred_region
      %s92 = ssub.s32 %s7, 1
      %p93 = scmp.lt.s32.totalorder %s12, 1
      %s94 = scalar_select %p93, %s12, 1
      %s95 = smul.addr %s94, 2
      %s96 = smul.addr %s95, 4
      %s97 = scalar_lea.vmem %s0, %s96
      %p98 = pneg %p33
      %p99 = pneg %p30
      %p100 = pneg %p59
      %p101 = pneg %p56
      %p102 = scmp.lt.s32.totalorder %s12, 1
      %s103 = scalar_select %p102, %s12, 1
      %s104 = smul.addr %s103, 2
      %s105 = smul.addr %s104, 4
      %s106 = scalar_lea.vmem %s1, %s105
      %p107 = scmp.lt.s32.totalorder %s12, 1
      %s108 = scalar_select %p107, %s12, 1
      %s109 = smul.addr %s108, 2
      %s110 = smul.addr %s109, 4
      %s111 = scalar_lea.vmem %s0, %s110
      %p112 = scmp.lt.s32.totalorder %s12, 1
      %s113 = scalar_select %p112, %s12, 1
      %s114 = smul.addr %s113, 2
      %s115 = smul.addr %s114, 4
      %s116 = scalar_lea.vmem %s1, %s115
      %v118 = vld [vmem:[%s111] sm:$0xf]
      %v119 = vld [vmem:[%s111 + $0x4] sm:$0xf]
      %v122 = vunpack.c.l.b16 %v118
      %v123 = vunpack.c.l.b16 %v119
      %v124 = vpack.c.b16 %v123, %v122
      %125 = vrot.lane.b32.xlu0 %v124, 96
      %v126 = vpop.permute.xlu0 %125
      %vm127 = vcmask 64512
      %v129 = vsel %vm127, %v124, 0
      %v132 = vsel %vm127, %v126, 0
      %134 = vmatpush.bf16.xpose.msra.mxu0 0
      %135 = vmatpush.bf16.xpose.msra.mxu0 0
      %136 = vmatpush.bf16.xpose.msra.mxu0 0
      %137 = vmatpush.bf16.xpose.msra.mxu0 0
      %138 = vmatpush.bf16.xpose.msra.mxu0 0
      %139 = vmatpush.bf16.xpose.msra.mxu0 0
      %140 = vmatpush.bf16.xpose.msra.mxu0 0
      %141 = vmatpush.bf16.xpose.msra.mxu0 %v132
      %142 = vmatmul.bf16.gmra.mxu0 %v129
      %v143 = vpop.f32.mrf.mxu0
      %v144 = vadd.f32 0.0, %v143
      %v145 = vpop.f32.mrf.mxu0
      %v146 = vadd.f32 0.0, %v145
      %147 = vdwg.mxu0
      %vm148 = vcmask 130048
      %v149 = vsel %vm148, %v144, -inf
      %150 = vmax.xlane.f32.xlu0 %v149
      %v151 = vpop.xlane.xlu0 %150
      %v152 = vsel %vm148, %v146, -inf
      %153 = vmax.xlane.f32.xlu0 %v152
      %v154 = vpop.xlane.xlu0 %153
      %v155 = vsub.f32 %v144, %v151
      %v156 = vsub.f32 %v146, %v154
      %v157 = vmul.f32 %v155, 1.442695
      %v158 = vpow.pop %v157
      %v159 = vmul.f32 %v156, 1.442695
      %v160 = vpow.pop %v159
      %v161 = vsel %vm148, %v158, 0.0
      %162 = vadd.xlane.f32.xlu0 %v161
      %v163 = vpop.xlane.xlu0 %162
      %v164 = vsel %vm148, %v160, 0.0
      %165 = vadd.xlane.f32.xlu0 %v164
      %v166 = vpop.xlane.xlu0 %165
      %v167 = vpack.c.bf16 %v160, %v158
      %168 = vrot.lane.b32.xlu0 %v124, 64
      %v169 = vpop.permute.xlu0 %168
      %v172 = vsel %vm148, %v167, 0
      %174 = vmatpush.bf16.msra.mxu0 0
      %175 = vmatpush.bf16.msra.mxu0 0
      %176 = vmatpush.bf16.msra.mxu0 0
      %177 = vmatpush.bf16.msra.mxu0 0
      %178 = vmatpush.bf16.msra.mxu0 0
      %179 = vmatpush.bf16.msra.mxu0 0
      %180 = vmatpush.bf16.msra.mxu0 0
      %181 = vmatpush.bf16.msra.mxu0 %v169
      %182 = vmatmul.bf16.gmra.mxu0 %v172
      %v183 = vpop.f32.mrf.mxu0
      %v184 = vadd.f32 0.0, %v183
      %v185 = vpop.f32.mrf.mxu0
      %v186 = vadd.f32 0.0, %v185
      %187 = vdwg.mxu0
      %v188 = vrcp.pop %v163
      %v189 = vrcp.pop %v166
      %v190 = vmul.f32 %v184, %v188
      %v191 = vmul.f32 %v186, %v189
      %v192 = vpack.c.bf16 %v190, %v190
      %v193 = vpack.c.bf16 %v191, %v191
      %vm194 = vcmask 60416
      %195 = vst.msk [vmem:[%s116] sm:$0xf] %vm194, %v192
      %196 = vst.msk [vmem:[%s116 + $0x4] sm:$0xf] %vm194, %v193
      %v197 = vld [vmem:[%s111] sm:$0xf]
      %v198 = vld [vmem:[%s111 + $0x4] sm:$0xf]
      %v201 = vunpack.c.l.b16 %v197
      %v202 = vunpack.c.l.b16 %v198
      %v203 = vpack.c.b16 %v202, %v201
      %204 = vrot.lane.b32.xlu0 %v203, 120
      %v205 = vpop.permute.xlu0 %204
      %206 = vrot.lane.b32.xlu0 %v203, 88
      %v207 = vpop.permute.xlu0 %206
      %v209 = vsel %vm127, %v205, 0
      %v212 = vsel %vm127, %v207, 0
      %214 = vmatpush.bf16.xpose.msra.mxu0 0
      %215 = vmatpush.bf16.xpose.msra.mxu0 0
      %216 = vmatpush.bf16.xpose.msra.mxu0 0
      %217 = vmatpush.bf16.xpose.msra.mxu0 0
      %218 = vmatpush.bf16.xpose.msra.mxu0 0
      %219 = vmatpush.bf16.xpose.msra.mxu0 0
      %220 = vmatpush.bf16.xpose.msra.mxu0 0
      %221 = vmatpush.bf16.xpose.msra.mxu0 %v212
      %222 = vmatmul.bf16.gmra.mxu0 %v209
      %v223 = vpop.f32.mrf.mxu0
      %v224 = vadd.f32 0.0, %v223
      %v225 = vpop.f32.mrf.mxu0
      %v226 = vadd.f32 0.0, %v225
      %227 = vdwg.mxu0
      %v228 = vsel %vm148, %v224, -inf
      %229 = vmax.xlane.f32.xlu0 %v228
      %v230 = vpop.xlane.xlu0 %229
      %v231 = vsel %vm148, %v226, -inf
      %232 = vmax.xlane.f32.xlu0 %v231
      %v233 = vpop.xlane.xlu0 %232
      %v234 = vsub.f32 %v224, %v230
      %v235 = vsub.f32 %v226, %v233
      %v236 = vmul.f32 %v234, 1.442695
      %v237 = vpow.pop %v236
      %v238 = vmul.f32 %v235, 1.442695
      %v239 = vpow.pop %v238
      %v240 = vsel %vm148, %v237, 0.0
      %241 = vadd.xlane.f32.xlu0 %v240
      %v242 = vpop.xlane.xlu0 %241
      %v243 = vsel %vm148, %v239, 0.0
      %244 = vadd.xlane.f32.xlu0 %v243
      %v245 = vpop.xlane.xlu0 %244
      %v246 = vpack.c.bf16 %v239, %v237
      %247 = vrot.lane.b32.xlu0 %v203, 56
      %v248 = vpop.permute.xlu0 %247
      %v251 = vsel %vm148, %v246, 0
      %253 = vmatpush.bf16.msra.mxu0 0
      %254 = vmatpush.bf16.msra.mxu0 0
      %255 = vmatpush.bf16.msra.mxu0 0
      %256 = vmatpush.bf16.msra.mxu0 0
      %257 = vmatpush.bf16.msra.mxu0 0
      %258 = vmatpush.bf16.msra.mxu0 0
      %259 = vmatpush.bf16.msra.mxu0 0
      %260 = vmatpush.bf16.msra.mxu0 %v248
      %261 = vmatmul.bf16.gmra.mxu0 %v251
      %v262 = vpop.f32.mrf.mxu0
      %v263 = vadd.f32 0.0, %v262
      %v264 = vpop.f32.mrf.mxu0
      %v265 = vadd.f32 0.0, %v264
      %266 = vdwg.mxu0
      %v267 = vrcp.pop %v242
      %v268 = vrcp.pop %v245
      %v269 = vmul.f32 %v263, %v267
      %v270 = vmul.f32 %v265, %v268
      %v271 = vpack.c.bf16 %v269, %v269
      %v272 = vpack.c.bf16 %v270, %v270
      %275 = vrot.lane.b32.xlu0 %v271, 8
      %v276 = vpop.permute.xlu0 %275
      %277 = vrot.lane.b32.xlu0 %v272, 8
      %v278 = vpop.permute.xlu0 %277
      %vm281 = vcmask 126016
      %282 = vst.msk [vmem:[%s116] sm:$0xf] %vm281, %v276
      %283 = vst.msk [vmem:[%s116 + $0x4] sm:$0xf] %vm281, %v278
      %v284 = vld [vmem:[%s111] sm:$0xf]
      %v285 = vld [vmem:[%s111 + $0x4] sm:$0xf]
      %v288 = vunpack.c.l.b16 %v284
      %v289 = vunpack.c.l.b16 %v285
      %v290 = vpack.c.b16 %v289, %v288
      %291 = vrot.lane.b32.xlu0 %v290, 112
      %v292 = vpop.permute.xlu0 %291
      %293 = vrot.lane.b32.xlu0 %v290, 80
      %v294 = vpop.permute.xlu0 %293
      %v296 = vsel %vm127, %v292, 0
      %v299 = vsel %vm127, %v294, 0
      %301 = vmatpush.bf16.xpose.msra.mxu0 0
      %302 = vmatpush.bf16.xpose.msra.mxu0 0
      %303 = vmatpush.bf16.xpose.msra.mxu0 0
      %304 = vmatpush.bf16.xpose.msra.mxu0 0
      %305 = vmatpush.bf16.xpose.msra.mxu0 0
      %306 = vmatpush.bf16.xpose.msra.mxu0 0
      %307 = vmatpush.bf16.xpose.msra.mxu0 0
      %308 = vmatpush.bf16.xpose.msra.mxu0 %v299
      %309 = vmatmul.bf16.gmra.mxu0 %v296
      %v310 = vpop.f32.mrf.mxu0
      %v311 = vadd.f32 0.0, %v310
      %v312 = vpop.f32.mrf.mxu0
      %v313 = vadd.f32 0.0, %v312
      %314 = vdwg.mxu0
      %v315 = vsel %vm148, %v311, -inf
      %316 = vmax.xlane.f32.xlu0 %v315
      %v317 = vpop.xlane.xlu0 %316
      %v318 = vsel %vm148, %v313, -inf
      %319 = vmax.xlane.f32.xlu0 %v318
      %v320 = vpop.xlane.xlu0 %319
      %v321 = vsub.f32 %v311, %v317
      %v322 = vsub.f32 %v313, %v320
      %v323 = vmul.f32 %v321, 1.442695
      %v324 = vpow.pop %v323
      %v325 = vmul.f32 %v322, 1.442695
      %v326 = vpow.pop %v325
      %v327 = vsel %vm148, %v324, 0.0
      %328 = vadd.xlane.f32.xlu0 %v327
      %v329 = vpop.xlane.xlu0 %328
      %v330 = vsel %vm148, %v326, 0.0
      %331 = vadd.xlane.f32.xlu0 %v330
      %v332 = vpop.xlane.xlu0 %331
      %v333 = vpack.c.bf16 %v326, %v324
      %334 = vrot.lane.b32.xlu0 %v290, 48
      %v335 = vpop.permute.xlu0 %334
      %v338 = vsel %vm148, %v333, 0
      %340 = vmatpush.bf16.msra.mxu0 0
      %341 = vmatpush.bf16.msra.mxu0 0
      %342 = vmatpush.bf16.msra.mxu0 0
      %343 = vmatpush.bf16.msra.mxu0 0
      %344 = vmatpush.bf16.msra.mxu0 0
      %345 = vmatpush.bf16.msra.mxu0 0
      %346 = vmatpush.bf16.msra.mxu0 0
      %347 = vmatpush.bf16.msra.mxu0 %v335
      %348 = vmatmul.bf16.gmra.mxu0 %v338
      %v349 = vpop.f32.mrf.mxu0
      %v350 = vadd.f32 0.0, %v349
      %v351 = vpop.f32.mrf.mxu0
      %v352 = vadd.f32 0.0, %v351
      %353 = vdwg.mxu0
      %v354 = vrcp.pop %v329
      %v355 = vrcp.pop %v332
      %v356 = vmul.f32 %v350, %v354
      %v357 = vmul.f32 %v352, %v355
      %v358 = vpack.c.bf16 %v356, %v356
      %v359 = vpack.c.bf16 %v357, %v357
      %362 = vrot.lane.b32.xlu0 %v358, 16
      %v363 = vpop.permute.xlu0 %362
      %364 = vrot.lane.b32.xlu0 %v359, 16
      %v365 = vpop.permute.xlu0 %364
      %vm368 = vcmask 191616
      %369 = vst.msk [vmem:[%s116] sm:$0xf] %vm368, %v363
      %370 = vst.msk [vmem:[%s116 + $0x4] sm:$0xf] %vm368, %v365
      %v371 = vld [vmem:[%s111] sm:$0xf]
      %v372 = vld [vmem:[%s111 + $0x4] sm:$0xf]
      %v375 = vunpack.c.l.b16 %v371
      %v376 = vunpack.c.l.b16 %v372
      %v377 = vpack.c.b16 %v376, %v375
      %378 = vrot.lane.b32.xlu0 %v377, 104
      %v379 = vpop.permute.xlu0 %378
      %380 = vrot.lane.b32.xlu0 %v377, 72
      %v381 = vpop.permute.xlu0 %380
      %v383 = vsel %vm127, %v379, 0
      %v386 = vsel %vm127, %v381, 0
      %388 = vmatpush.bf16.xpose.msra.mxu0 0
      %389 = vmatpush.bf16.xpose.msra.mxu0 0
      %390 = vmatpush.bf16.xpose.msra.mxu0 0
      %391 = vmatpush.bf16.xpose.msra.mxu0 0
      %392 = vmatpush.bf16.xpose.msra.mxu0 0
      %393 = vmatpush.bf16.xpose.msra.mxu0 0
      %394 = vmatpush.bf16.xpose.msra.mxu0 0
      %395 = vmatpush.bf16.xpose.msra.mxu0 %v386
      %396 = vmatmul.bf16.gmra.mxu0 %v383
      %v397 = vpop.f32.mrf.mxu0
      %v398 = vadd.f32 0.0, %v397
      %v399 = vpop.f32.mrf.mxu0
      %v400 = vadd.f32 0.0, %v399
      %401 = vdwg.mxu0
      %v402 = vsel %vm148, %v398, -inf
      %403 = vmax.xlane.f32.xlu0 %v402
      %v404 = vpop.xlane.xlu0 %403
      %v405 = vsel %vm148, %v400, -inf
      %406 = vmax.xlane.f32.xlu0 %v405
      %v407 = vpop.xlane.xlu0 %406
      %v408 = vsub.f32 %v398, %v404
      %v409 = vsub.f32 %v400, %v407
      %v410 = vmul.f32 %v408, 1.442695
      %v411 = vpow.pop %v410
      %v412 = vmul.f32 %v409, 1.442695
      %v413 = vpow.pop %v412
      %v414 = vsel %vm148, %v411, 0.0
      %415 = vadd.xlane.f32.xlu0 %v414
      %v416 = vpop.xlane.xlu0 %415
      %v417 = vsel %vm148, %v413, 0.0
      %418 = vadd.xlane.f32.xlu0 %v417
      %v419 = vpop.xlane.xlu0 %418
      %v420 = vpack.c.bf16 %v413, %v411
      %421 = vrot.lane.b32.xlu0 %v377, 40
      %v422 = vpop.permute.xlu0 %421
      %v425 = vsel %vm148, %v420, 0
      %427 = vmatpush.bf16.msra.mxu0 0
      %428 = vmatpush.bf16.msra.mxu0 0
      %429 = vmatpush.bf16.msra.mxu0 0
      %430 = vmatpush.bf16.msra.mxu0 0
      %431 = vmatpush.bf16.msra.mxu0 0
      %432 = vmatpush.bf16.msra.mxu0 0
      %433 = vmatpush.bf16.msra.mxu0 0
      %434 = vmatpush.bf16.msra.mxu0 %v422
      %435 = vmatmul.bf16.gmra.mxu0 %v425
      %v436 = vpop.f32.mrf.mxu0
      %v437 = vadd.f32 0.0, %v436
      %v438 = vpop.f32.mrf.mxu0
      %v439 = vadd.f32 0.0, %v438
      %440 = vdwg.mxu0
      %v441 = vrcp.pop %v416
      %v442 = vrcp.pop %v419
      %v443 = vmul.f32 %v437, %v441
      %v444 = vmul.f32 %v439, %v442
      %v445 = vpack.c.bf16 %v443, %v443
      %v446 = vpack.c.bf16 %v444, %v444
      %449 = vrot.lane.b32.xlu0 %v445, 24
      %v450 = vpop.permute.xlu0 %449
      %451 = vrot.lane.b32.xlu0 %v446, 24
      %v452 = vpop.permute.xlu0 %451
      %vm455 = vcmask 257216
      %456 = vst.msk [vmem:[%s116] sm:$0xf] %vm455, %v450
      %457 = vst.msk [vmem:[%s116 + $0x4] sm:$0xf] %vm455, %v452
      %p458 = scmp.lt.s32.totalorder %s12, 1
      %s459 = scalar_select %p458, %s12, 1
      %s460 = smul.addr %s459, 2
      %s461 = smul.addr %s460, 4
      %s462 = scalar_lea.vmem %s1, %s461
      // Predicated region
      $region25: #{vit_forward.16} parent=23 // pred_check
        %p463 = pneg %p56
      $region26: #{vit_forward.16} parent=23 // pred_check_branch
        %465 = sbr.rel (%p463) target = $region28
      $region27: #{vit_forward.16} parent=23 // pred_region
        _
      $region28: #{vit_forward.16} parent=23 // pred_fallthru
        _
    $region24: #{vit_forward.16} parent=5 // pred_fallthru
      _
    %p466 = scmp.le.s32.totalorder 2, %s7
    // Predicated region
    $region29: #{vit_forward.16} parent=5 // pred_check
      %p467 = pneg %p466
    $region30: #{vit_forward.16} parent=5 // pred_check_branch
      %469 = sbr.rel (%p467) target = $region32
    $region31: #{vit_forward.16} parent=5 // pred_region
      %s470 = ssub.s32 %s7, 2
      // Predicated region
      $region33: #{vit_forward.16} parent=31 // pred_check
        %p471 = pneg %p62
      $region34: #{vit_forward.16} parent=31 // pred_check_branch
        %473 = sbr.rel (%p471) target = $region36
      $region35: #{vit_forward.16} parent=31 // pred_region
        %p474 = scmp.lt.s32.totalorder %s13, 1
        %s475 = scalar_select %p474, %s13, 1
        %s476 = smul.addr %s475, 2
        %s477 = smul.addr %s476, 4
        %s478 = scalar_lea.vmem %s1, %s477
      $region36: #{vit_forward.16} parent=31 // pred_fallthru
        _
    $region32: #{vit_forward.16} parent=5 // pred_fallthru
      _
  $region6: #{vit_forward.16} parent=0 // loop_footer
    %s11 = sadd.s32 1, %s7
  $region7: #{vit_forward.16} parent=0 // loop_footer_branch
    %6 = sbr.rel target = $region3
  $region8: #{vit_forward.16} parent=0 // loop_exit
    _

// kernel: vit_forward.18
$region0: #{vit_forward.18}
  #allocation0 [shape = 'u32[]', space=smem, size = 0x4, offset = 0x4, fixed_abs, tag = 'smem constant byte address 0x4 - core index']
  #allocation1 [shape = 'u32[72,128]{1,0:T(1,128)}', space=vmem, size = 0x9000, scoped, tag = 'internal scratch']
  #allocation2 [shape = 'bf16[32,32]{1,0:T(8,128)(2,1)}', space=vmem, size = 0x2000, scoped, tag = 'scratch operand']
  %s0 = inlined_call_operand.vmem [shape: bf16[32,32], index: 0, kind: input, shape index: {}]
  %s1 = inlined_call_operand.vmem [shape: f32[1,32], index: 1, kind: input, shape index: {}]
  %s2 = inlined_call_operand.vmem [shape: f32[1,32], index: 2, kind: input, shape index: {}]
  %s3 = inlined_call_operand.vmem [shape: bf16[32,128], index: 3, kind: input, shape index: {}]
  %s4 = inlined_call_operand.vmem [shape: f32[1,128], index: 4, kind: input, shape index: {}]
  %s5 = inlined_call_operand.vmem [shape: bf16[32,128], index: 5, kind: output, shape index: {}]
  %s6 = sld [smem:[#allocation0]]
  $region34: #{vit_forward.18} parent=0
    _
  %s8 = ssub.s32 1, %s6
  %s9 = scalar_select 0, %s8, %s6
  // Predicated region
  $region2: #{vit_forward.18} parent=0 // pred_check
    _
  $region3: #{vit_forward.18} parent=0 // pred_check_branch
    %11 = sbr.rel (0) target = $region5
  $region4: #{vit_forward.18} parent=0 // pred_region
    _
  $region5: #{vit_forward.18} parent=0 // pred_fallthru
    _
  // Predicated region
  $region6: #{vit_forward.18} parent=0 // pred_check
    _
  $region7: #{vit_forward.18} parent=0 // pred_check_branch
    %13 = sbr.rel (0) target = $region9
  $region8: #{vit_forward.18} parent=0 // pred_region
    _
  $region9: #{vit_forward.18} parent=0 // pred_fallthru
    _
  // Predicated region
  $region10: #{vit_forward.18} parent=0 // pred_check
    _
  $region11: #{vit_forward.18} parent=0 // pred_check_branch
    %15 = sbr.rel (0) target = $region13
  $region12: #{vit_forward.18} parent=0 // pred_region
    _
  $region13: #{vit_forward.18} parent=0 // pred_fallthru
    _
  // Predicated region
  $region14: #{vit_forward.18} parent=0 // pred_check
    _
  $region15: #{vit_forward.18} parent=0 // pred_check_branch
    %17 = sbr.rel (0) target = $region17
  $region16: #{vit_forward.18} parent=0 // pred_region
    _
  $region17: #{vit_forward.18} parent=0 // pred_fallthru
    _
  // Predicated region
  $region18: #{vit_forward.18} parent=0 // pred_check
    _
  $region19: #{vit_forward.18} parent=0 // pred_check_branch
    %19 = sbr.rel (0) target = $region21
  $region20: #{vit_forward.18} parent=0 // pred_region
    _
  $region21: #{vit_forward.18} parent=0 // pred_fallthru
    _
  %p21 = scmp.eq.s32.totalorder 0, 0
  // Predicated region
  $region22: #{vit_forward.18} parent=0 // pred_check
    %p22 = pneg %p21
  $region23: #{vit_forward.18} parent=0 // pred_check_branch
    %24 = sbr.rel (%p22) target = $region25
  $region24: #{vit_forward.18} parent=0 // pred_region
    %v25 = vld [vmem:[%s0] sm:$0xf]
    %v26 = vld [vmem:[%s0 + $0x4] sm:$0xf]
    %v27 = vld [vmem:[%s0 + $0x8] sm:$0xf]
    %v28 = vld [vmem:[%s0 + $0xc] sm:$0xf]
    %v29 = vunpack.c.l.bf16 %v25
    %v30 = vunpack.c.l.bf16 %v26
    %v31 = vunpack.c.l.bf16 %v27
    %v32 = vunpack.c.l.bf16 %v28
    %vm33 = vcmask 261120
    %v34 = vsel %vm33, %v29, 0.0
    %35 = vadd.xlane.f32.xlu0 %v34
    %v36 = vpop.xlane.xlu0 %35
    %v37 = vsel %vm33, %v30, 0.0
    %38 = vadd.xlane.f32.xlu0 %v37
    %v39 = vpop.xlane.xlu0 %38
    %v40 = vsel %vm33, %v31, 0.0
    %41 = vadd.xlane.f32.xlu0 %v40
    %v42 = vpop.xlane.xlu0 %41
    %v43 = vsel %vm33, %v32, 0.0
    %44 = vadd.xlane.f32.xlu0 %v43
    %v45 = vpop.xlane.xlu0 %44
    %v46 = vrcp.pop 32.0
    %v47 = vmul.f32 32.0, %v46
    %v48 = vsub.f32 1.0, %v47
    %v49 = vmul.f32 %v46, %v48
    %v50 = vadd.f32 %v46, %v49
    %vm51 = vweird.f32 %v46
    %v52 = vsel %vm51, %v46, %v50
    %v53 = vmul.f32 %v36, %v52
    %v54 = vmul.f32 %v39, %v52
    %v55 = vmul.f32 %v42, %v52
    %v56 = vmul.f32 %v45, %v52
    %v57 = vsub.f32 %v29, %v53
    %v58 = vsub.f32 %v30, %v54
    %v59 = vsub.f32 %v31, %v55
    %v60 = vsub.f32 %v32, %v56
    %v61 = vmul.f32 %v57, %v57
    %v62 = vmul.f32 %v58, %v58
    %v63 = vmul.f32 %v59, %v59
    %v64 = vmul.f32 %v60, %v60
    %v65 = vsel %vm33, %v61, 0.0
    %66 = vadd.xlane.f32.xlu0 %v65
    %v67 = vpop.xlane.xlu0 %66
    %v68 = vsel %vm33, %v62, 0.0
    %69 = vadd.xlane.f32.xlu0 %v68
    %v70 = vpop.xlane.xlu0 %69
    %v71 = vsel %vm33, %v63, 0.0
    %72 = vadd.xlane.f32.xlu0 %v71
    %v73 = vpop.xlane.xlu0 %72
    %v74 = vsel %vm33, %v64, 0.0
    %75 = vadd.xlane.f32.xlu0 %v74
    %v76 = vpop.xlane.xlu0 %75
    %v77 = vmul.f32 %v67, %v52
    %v78 = vmul.f32 %v70, %v52
    %v79 = vmul.f32 %v73, %v52
    %v80 = vmul.f32 %v76, %v52
    %v81 = vadd.f32 %v77, 1e-06
    %v82 = vadd.f32 %v78, 1e-06
    %v83 = vadd.f32 %v79, 1e-06
    %v84 = vadd.f32 %v80, 1e-06
    %v85 = vrsqrt.pop %v81
    %v86 = vmul.f32 %v85, %v81
    %v87 = vmul.f32 %v86, %v85
    %v88 = vmul.f32 0.5, %v87
    %v89 = vsub.f32 1.5, %v88
    %v90 = vmul.f32 %v85, %v89
    %vm91 = vweird.f32 %v81
    %vm92 = vweird.f32 %v85
    %vm93 = vmor %vm91, %vm92
    %v94 = vsel %vm93, %v85, %v90
    %v95 = vrsqrt.pop %v82
    %v96 = vmul.f32 %v95, %v82
    %v97 = vmul.f32 %v96, %v95
    %v98 = vmul.f32 0.5, %v97
    %v99 = vsub.f32 1.5, %v98
    %v100 = vmul.f32 %v95, %v99
    %vm101 = vweird.f32 %v82
    %vm102 = vweird.f32 %v95
    %vm103 = vmor %vm101, %vm102
    %v104 = vsel %vm103, %v95, %v100
    %v105 = vrsqrt.pop %v83
    %v106 = vmul.f32 %v105, %v83
    %v107 = vmul.f32 %v106, %v105
    %v108 = vmul.f32 0.5, %v107
    %v109 = vsub.f32 1.5, %v108
    %v110 = vmul.f32 %v105, %v109
    %vm111 = vweird.f32 %v83
    %vm112 = vweird.f32 %v105
    %vm113 = vmor %vm111, %vm112
    %v114 = vsel %vm113, %v105, %v110
    %v115 = vrsqrt.pop %v84
    %v116 = vmul.f32 %v115, %v84
    %v117 = vmul.f32 %v116, %v115
    %v118 = vmul.f32 0.5, %v117
    %v119 = vsub.f32 1.5, %v118
    %v120 = vmul.f32 %v115, %v119
    %vm121 = vweird.f32 %v84
    %vm122 = vweird.f32 %v115
    %vm123 = vmor %vm121, %vm122
    %v124 = vsel %vm123, %v115, %v120
    %v125 = vmul.f32 %v57, %v94
    %v126 = vmul.f32 %v58, %v104
    %v127 = vmul.f32 %v59, %v114
    %v128 = vmul.f32 %v60, %v124
    %v129 = vld [vmem:[%s1] sm:$0x1]
    %v131 = vperm.slane %v129, 0
    %v133 = vmul.f32 %v125, %v131
    %v134 = vmul.f32 %v126, %v131
    %v135 = vmul.f32 %v127, %v131
    %v136 = vmul.f32 %v128, %v131
    %v137 = vld [vmem:[%s2] sm:$0x1]
    %v139 = vperm.slane %v137, 0
    %v141 = vadd.f32 %v133, %v139
    %v142 = vadd.f32 %v134, %v139
    %v143 = vadd.f32 %v135, %v139
    %v144 = vadd.f32 %v136, %v139
    %v145 = vpack.c.bf16 %v141, %v141
    %v146 = vpack.c.bf16 %v142, %v142
    %v147 = vpack.c.bf16 %v143, %v143
    %v148 = vpack.c.bf16 %v144, %v144
    %vm149 = vcmask 257024
    %150 = vst.msk [vmem:[#allocation2] sm:$0xf] %vm149, %v145
    %151 = vst.msk [vmem:[#allocation2 + $0x4] sm:$0xf] %vm149, %v146
    %152 = vst.msk [vmem:[#allocation2 + $0x8] sm:$0xf] %vm149, %v147
    %153 = vst.msk [vmem:[#allocation2 + $0xc] sm:$0xf] %vm149, %v148
  $region25: #{vit_forward.18} parent=0 // pred_fallthru
    _
  %v154 = vld [vmem:[#allocation2] sm:$0xf]
  %v155 = vld [vmem:[#allocation2 + $0x4] sm:$0xf]
  %v156 = vld [vmem:[#allocation2 + $0x8] sm:$0xf]
  %v157 = vld [vmem:[#allocation2 + $0xc] sm:$0xf]
  %v158 = vld [vmem:[%s3] sm:$0xf]
  %v159 = vld [vmem:[%s3 + $0x4] sm:$0xf]
  %v160 = vld [vmem:[%s3 + $0x8] sm:$0xf]
  %v161 = vld [vmem:[%s3 + $0xc] sm:$0xf]
  %v162 = vld [vmem:[%s4] sm:$0x1]
  %v164 = vperm.slane %v162, 0
  %v170 = vunpack.c.l.b16 %v154
  %v171 = vunpack.c.l.b16 %v155
  %v172 = vunpack.c.l.b16 %v156
  %v173 = vunpack.c.l.b16 %v157
  %v174 = vpack.c.b16 %v171, %v170
  %v175 = vpack.c.b16 %v173, %v172
  %v180 = vunpack.c.l.b16 %v158
  %v181 = vunpack.c.l.b16 %v159
  %v182 = vunpack.c.l.b16 %v160
  %v183 = vunpack.c.l.b16 %v161
  %v184 = vpack.c.b16 %v181, %v180
  %v185 = vpack.c.b16 %v183, %v182
  %vm188 = vcmask 261120
  %v190 = vsel %vm188, %v174, 0
  %v193 = vsel %vm188, %v175, 0
  %195 = vmatpush.bf16.msra.mxu0 0
  %196 = vmatpush.bf16.msra.mxu0 0
  %197 = vmatpush.bf16.msra.mxu0 0
  %198 = vmatpush.bf16.msra.mxu0 0
  %199 = vmatpush.bf16.msra.mxu0 0
  %200 = vmatpush.bf16.msra.mxu0 0
  %201 = vmatpush.bf16.msra.mxu0 %v185
  %202 = vmatpush.bf16.msra.mxu0 %v184
  %203 = vmatmul.bf16.gmra.mxu0 %v190
  %v204 = vpop.f32.mrf.mxu0
  %v205 = vadd.f32 %v164, %v204
  %v206 = vpop.f32.mrf.mxu0
  %v207 = vadd.f32 %v164, %v206
  %208 = vmatmul.bf16.gmra.mxu0 %v193
  %v209 = vpop.f32.mrf.mxu0
  %v210 = vadd.f32 %v164, %v209
  %v211 = vpop.f32.mrf.mxu0
  %v212 = vadd.f32 %v164, %v211
  %213 = vdwg.mxu0
  %v214 = vmul.f32 %v205, %v205
  %v215 = vmul.f32 %v207, %v207
  %v216 = vmul.f32 %v210, %v210
  %v217 = vmul.f32 %v212, %v212
  %v218 = vmul.f32 %v205, %v214
  %v219 = vmul.f32 %v207, %v215
  %v220 = vmul.f32 %v210, %v216
  %v221 = vmul.f32 %v212, %v217
  %v222 = vmul.f32 %v218, 0.044715
  %v223 = vmul.f32 %v219, 0.044715
  %v224 = vmul.f32 %v220, 0.044715
  %v225 = vmul.f32 %v221, 0.044715
  %v226 = vadd.f32 %v205, %v222
  %v227 = vadd.f32 %v207, %v223
  %v228 = vadd.f32 %v210, %v224
  %v229 = vadd.f32 %v212, %v225
  %v230 = vmul.f32 %v226, 0.7978846
  %v231 = vmul.f32 %v227, 0.7978846
  %v232 = vmul.f32 %v228, 0.7978846
  %v233 = vmul.f32 %v229, 0.7978846
  %v234 = vtanh.pop %v230
  %v235 = vtanh.pop %v231
  %v236 = vtanh.pop %v232
  %v237 = vtanh.pop %v233
  %v238 = vadd.f32 %v234, 1.0
  %v239 = vadd.f32 %v235, 1.0
  %v240 = vadd.f32 %v236, 1.0
  %v241 = vadd.f32 %v237, 1.0
  %v242 = vmul.f32 %v238, 0.5
  %v243 = vmul.f32 %v239, 0.5
  %v244 = vmul.f32 %v240, 0.5
  %v245 = vmul.f32 %v241, 0.5
  %v246 = vmul.f32 %v205, %v242
  %v247 = vmul.f32 %v207, %v243
  %v248 = vmul.f32 %v210, %v244
  %v249 = vmul.f32 %v212, %v245
  %v250 = vpack.c.bf16 %v246, %v246
  %v251 = vpack.c.bf16 %v247, %v247
  %v252 = vpack.c.bf16 %v248, %v248
  %v253 = vpack.c.bf16 %v249, %v249
  %254 = vst [vmem:[%s5] sm:$0xf] %v250
  %255 = vst [vmem:[%s5 + $0x4] sm:$0xf] %v251
  %256 = vst [vmem:[%s5 + $0x8] sm:$0xf] %v252
  %257 = vst [vmem:[%s5 + $0xc] sm:$0xf] %v253
  // Predicated region
  $region26: #{vit_forward.18} parent=0 // pred_check
    _
  $region27: #{vit_forward.18} parent=0 // pred_check_branch
    %259 = sbr.rel (0) target = $region29
  $region28: #{vit_forward.18} parent=0 // pred_region
    _
  $region29: #{vit_forward.18} parent=0 // pred_fallthru
    _
  // Predicated region
  $region30: #{vit_forward.18} parent=0 // pred_check
    _
  $region31: #{vit_forward.18} parent=0 // pred_check_branch
    %261 = sbr.rel (0) target = $region33
  $region32: #{vit_forward.18} parent=0 // pred_region
    _
  $region33: #{vit_forward.18} parent=0 // pred_fallthru
    _

// kernel: vit_forward.19
$region0: #{vit_forward.19}
  #allocation0 [shape = 'u32[]', space=smem, size = 0x4, offset = 0x4, fixed_abs, tag = 'smem constant byte address 0x4 - core index']
  #allocation1 [shape = 'u32[72,128]{1,0:T(1,128)}', space=vmem, size = 0x9000, scoped, tag = 'internal scratch']
  #allocation2 [shape = 'f32[32,32]{1,0:T(8,128)}', space=vmem, size = 0x4000, scoped, tag = 'scratch operand']
  %s0 = inlined_call_operand.vmem [shape: bf16[32,128], index: 0, kind: input, shape index: {}]
  %s1 = inlined_call_operand.vmem [shape: bf16[128,32], index: 1, kind: input, shape index: {}]
  %s2 = inlined_call_operand.vmem [shape: f32[1,32], index: 2, kind: input, shape index: {}]
  %s3 = inlined_call_operand.vmem [shape: bf16[32,32], index: 3, kind: input, shape index: {}]
  %s4 = inlined_call_operand.vmem [shape: bf16[32,32], index: 4, kind: output, shape index: {}]
  %s5 = sld [smem:[#allocation0]]
  $region34: #{vit_forward.19} parent=0
    _
  %s7 = ssub.s32 1, %s5
  %s8 = scalar_select 0, %s7, %s5
  // Predicated region
  $region2: #{vit_forward.19} parent=0 // pred_check
    _
  $region3: #{vit_forward.19} parent=0 // pred_check_branch
    %10 = sbr.rel (0) target = $region5
  $region4: #{vit_forward.19} parent=0 // pred_region
    _
  $region5: #{vit_forward.19} parent=0 // pred_fallthru
    _
  // Predicated region
  $region6: #{vit_forward.19} parent=0 // pred_check
    _
  $region7: #{vit_forward.19} parent=0 // pred_check_branch
    %12 = sbr.rel (0) target = $region9
  $region8: #{vit_forward.19} parent=0 // pred_region
    _
  $region9: #{vit_forward.19} parent=0 // pred_fallthru
    _
  // Predicated region
  $region10: #{vit_forward.19} parent=0 // pred_check
    _
  $region11: #{vit_forward.19} parent=0 // pred_check_branch
    %14 = sbr.rel (0) target = $region13
  $region12: #{vit_forward.19} parent=0 // pred_region
    _
  $region13: #{vit_forward.19} parent=0 // pred_fallthru
    _
  // Predicated region
  $region14: #{vit_forward.19} parent=0 // pred_check
    _
  $region15: #{vit_forward.19} parent=0 // pred_check_branch
    %16 = sbr.rel (0) target = $region17
  $region16: #{vit_forward.19} parent=0 // pred_region
    _
  $region17: #{vit_forward.19} parent=0 // pred_fallthru
    _
  %p17 = scmp.eq.s32.totalorder 0, 0
  // Predicated region
  $region18: #{vit_forward.19} parent=0 // pred_check
    %p18 = pneg %p17
  $region19: #{vit_forward.19} parent=0 // pred_check_branch
    %20 = sbr.rel (%p18) target = $region21
  $region20: #{vit_forward.19} parent=0 // pred_region
    %vm21 = vcmask 261120
    %22 = vst.msk [vmem:[#allocation2] sm:$0xff] %vm21, 0.0
    %23 = vst.msk [vmem:[#allocation2 + $0x8] sm:$0xff] %vm21, 0.0
    %24 = vst.msk [vmem:[#allocation2 + $0x10] sm:$0xff] %vm21, 0.0
    %25 = vst.msk [vmem:[#allocation2 + $0x18] sm:$0xff] %vm21, 0.0
  $region21: #{vit_forward.19} parent=0 // pred_fallthru
    _
  %v26 = vld [vmem:[#allocation2] sm:$0xff]
  %v27 = vld [vmem:[#allocation2 + $0x8] sm:$0xff]
  %v28 = vld [vmem:[#allocation2 + $0x10] sm:$0xff]
  %v29 = vld [vmem:[#allocation2 + $0x18] sm:$0xff]
  %v30 = vld [vmem:[%s0] sm:$0xf]
  %v31 = vld [vmem:[%s0 + $0x4] sm:$0xf]
  %v32 = vld [vmem:[%s0 + $0x8] sm:$0xf]
  %v33 = vld [vmem:[%s0 + $0xc] sm:$0xf]
  %v34 = vld [vmem:[%s1] sm:$0xf]
  %v35 = vld [vmem:[%s1 + $0x4] sm:$0xf]
  %v36 = vld [vmem:[%s1 + $0x8] sm:$0xf]
  %v37 = vld [vmem:[%s1 + $0xc] sm:$0xf]
  %v38 = vld [vmem:[%s1 + $0x10] sm:$0xf]
  %v39 = vld [vmem:[%s1 + $0x14] sm:$0xf]
  %v40 = vld [vmem:[%s1 + $0x18] sm:$0xf]
  %v41 = vld [vmem:[%s1 + $0x1c] sm:$0xf]
  %v42 = vld [vmem:[%s1 + $0x20] sm:$0xf]
  %v43 = vld [vmem:[%s1 + $0x24] sm:$0xf]
  %v44 = vld [vmem:[%s1 + $0x28] sm:$0xf]
  %v45 = vld [vmem:[%s1 + $0x2c] sm:$0xf]
  %v46 = vld [vmem:[%s1 + $0x30] sm:$0xf]
  %v47 = vld [vmem:[%s1 + $0x34] sm:$0xf]
  %v48 = vld [vmem:[%s1 + $0x38] sm:$0xf]
  %v49 = vld [vmem:[%s1 + $0x3c] sm:$0xf]
  %v54 = vunpack.c.l.b16 %v30
  %v55 = vunpack.c.l.b16 %v31
  %v56 = vunpack.c.l.b16 %v32
  %v57 = vunpack.c.l.b16 %v33
  %v58 = vpack.c.b16 %v55, %v54
  %v59 = vpack.c.b16 %v57, %v56
  %v78 = vunpack.c.l.b16 %v34
  %v79 = vunpack.c.l.b16 %v35
  %v80 = vunpack.c.l.b16 %v36
  %v81 = vunpack.c.l.b16 %v37
  %v82 = vunpack.c.l.b16 %v38
  %v83 = vunpack.c.l.b16 %v39
  %v84 = vunpack.c.l.b16 %v40
  %v85 = vunpack.c.l.b16 %v41
  %v86 = vunpack.c.l.b16 %v42
  %v87 = vunpack.c.l.b16 %v43
  %v88 = vunpack.c.l.b16 %v44
  %v89 = vunpack.c.l.b16 %v45
  %v90 = vunpack.c.l.b16 %v46
  %v91 = vunpack.c.l.b16 %v47
  %v92 = vunpack.c.l.b16 %v48
  %v93 = vunpack.c.l.b16 %v49
  %v94 = vpack.c.b16 %v79, %v78
  %v95 = vpack.c.b16 %v81, %v80
  %v96 = vpack.c.b16 %v83, %v82
  %v97 = vpack.c.b16 %v85, %v84
  %v98 = vpack.c.b16 %v87, %v86
  %v99 = vpack.c.b16 %v89, %v88
  %v100 = vpack.c.b16 %v91, %v90
  %v101 = vpack.c.b16 %v93, %v92
  %110 = vmatpush.bf16.msra.mxu0 %v101
  %111 = vmatpush.bf16.msra.mxu0 %v100
  %112 = vmatpush.bf16.msra.mxu0 %v99
  %113 = vmatpush.bf16.msra.mxu0 %v98
  %114 = vmatpush.bf16.msra.mxu0 %v97
  %115 = vmatpush.bf16.msra.mxu0 %v96
  %116 = vmatpush.bf16.msra.mxu0 %v95
  %117 = vmatpush.bf16.msra.mxu0 %v94
  %118 = vmatmul.bf16.gmra.mxu0 %v58
  %v119 = vpop.f32.mrf.mxu0
  %v120 = vadd.f32 0.0, %v119
  %v121 = vpop.f32.mrf.mxu0
  %v122 = vadd.f32 0.0, %v121
  %123 = vmatmul.bf16.gmra.mxu0 %v59
  %v124 = vpop.f32.mrf.mxu0
  %v125 = vadd.f32 0.0, %v124
  %v126 = vpop.f32.mrf.mxu0
  %v127 = vadd.f32 0.0, %v126
  %128 = vdwg.mxu0
  %v129 = vadd.f32 %v26, %v120
  %v130 = vadd.f32 %v27, %v122
  %v131 = vadd.f32 %v28, %v125
  %v132 = vadd.f32 %v29, %v127
  %vm133 = vcmask 261120
  %134 = vst.msk [vmem:[#allocation2] sm:$0xff] %vm133, %v129
  %135 = vst.msk [vmem:[#allocation2 + $0x8] sm:$0xff] %vm133, %v130
  %136 = vst.msk [vmem:[#allocation2 + $0x10] sm:$0xff] %vm133, %v131
  %137 = vst.msk [vmem:[#allocation2 + $0x18] sm:$0xff] %vm133, %v132
  // Predicated region
  $region22: #{vit_forward.19} parent=0 // pred_check
    %p138 = pneg %p17
  $region23: #{vit_forward.19} parent=0 // pred_check_branch
    %140 = sbr.rel (%p138) target = $region25
  $region24: #{vit_forward.19} parent=0 // pred_region
    %v141 = vld [vmem:[#allocation2] sm:$0xff]
    %v142 = vld [vmem:[#allocation2 + $0x8] sm:$0xff]
    %v143 = vld [vmem:[#allocation2 + $0x10] sm:$0xff]
    %v144 = vld [vmem:[#allocation2 + $0x18] sm:$0xff]
    %v145 = vld [vmem:[%s2] sm:$0x1]
    %v147 = vperm.slane %v145, 0
    %v149 = vadd.f32 %v141, %v147
    %v150 = vadd.f32 %v142, %v147
    %v151 = vadd.f32 %v143, %v147
    %v152 = vadd.f32 %v144, %v147
    %v153 = vld [vmem:[%s3] sm:$0xf]
    %v154 = vld [vmem:[%s3 + $0x4] sm:$0xf]
    %v155 = vld [vmem:[%s3 + $0x8] sm:$0xf]
    %v156 = vld [vmem:[%s3 + $0xc] sm:$0xf]
    %v157 = vunpack.c.l.bf16 %v153
    %v158 = vunpack.c.l.bf16 %v154
    %v159 = vunpack.c.l.bf16 %v155
    %v160 = vunpack.c.l.bf16 %v156
    %v161 = vadd.f32 %v149, %v157
    %v162 = vadd.f32 %v150, %v158
    %v163 = vadd.f32 %v151, %v159
    %v164 = vadd.f32 %v152, %v160
    %v165 = vpack.c.bf16 %v161, %v161
    %v166 = vpack.c.bf16 %v162, %v162
    %v167 = vpack.c.bf16 %v163, %v163
    %v168 = vpack.c.bf16 %v164, %v164
    %vm169 = vcmask 257024
    %170 = vst.msk [vmem:[%s4] sm:$0xf] %vm169, %v165
    %171 = vst.msk [vmem:[%s4 + $0x4] sm:$0xf] %vm169, %v166
    %172 = vst.msk [vmem:[%s4 + $0x8] sm:$0xf] %vm169, %v167
    %173 = vst.msk [vmem:[%s4 + $0xc] sm:$0xf] %vm169, %v168
  $region25: #{vit_forward.19} parent=0 // pred_fallthru
    _
  // Predicated region
  $region26: #{vit_forward.19} parent=0 // pred_check
    _
  $region27: #{vit_forward.19} parent=0 // pred_check_branch
    %175 = sbr.rel (0) target = $region29
  $region28: #{vit_forward.19} parent=0 // pred_region
    _
  $region29: #{vit_forward.19} parent=0 // pred_fallthru
    _
  // Predicated region
  $region30: #{vit_forward.19} parent=0 // pred_check
    _
  $region31: #{vit_forward.19} parent=0 // pred_check_branch
    %177 = sbr.rel (0) target = $region33
  $region32: #{vit_forward.19} parent=0 // pred_region
    _
  $region33: #{vit_forward.19} parent=0 // pred_fallthru
    _

// kernel: vit_forward.25
$region0: #{vit_forward.25}
  #allocation0 [shape = 'u32[]', space=smem, size = 0x4, offset = 0x4, fixed_abs, tag = 'smem constant byte address 0x4 - core index']
  #allocation1 [shape = 'u32[72,128]{1,0:T(1,128)}', space=vmem, size = 0x9000, scoped, tag = 'internal scratch']
  #allocation2 [shape = 'bf16[32,32]{1,0:T(8,128)(2,1)}', space=vmem, size = 0x2000, scoped, tag = 'scratch operand']
  %s0 = inlined_call_operand.vmem [shape: bf16[32,32], index: 0, kind: input, shape index: {}]
  %s1 = inlined_call_operand.vmem [shape: f32[1,32], index: 1, kind: input, shape index: {}]
  %s2 = inlined_call_operand.vmem [shape: f32[1,32], index: 2, kind: input, shape index: {}]
  %s3 = inlined_call_operand.vmem [shape: bf16[32,64], index: 3, kind: input, shape index: {}]
  %s4 = inlined_call_operand.vmem [shape: f32[1,64], index: 4, kind: input, shape index: {}]
  %s5 = inlined_call_operand.vmem [shape: bf16[32,64], index: 5, kind: output, shape index: {}]
  %s6 = sld [smem:[#allocation0]]
  $region34: #{vit_forward.25} parent=0
    _
  %s8 = ssub.s32 1, %s6
  %s9 = scalar_select 0, %s8, %s6
  // Predicated region
  $region2: #{vit_forward.25} parent=0 // pred_check
    _
  $region3: #{vit_forward.25} parent=0 // pred_check_branch
    %11 = sbr.rel (0) target = $region5
  $region4: #{vit_forward.25} parent=0 // pred_region
    _
  $region5: #{vit_forward.25} parent=0 // pred_fallthru
    _
  // Predicated region
  $region6: #{vit_forward.25} parent=0 // pred_check
    _
  $region7: #{vit_forward.25} parent=0 // pred_check_branch
    %13 = sbr.rel (0) target = $region9
  $region8: #{vit_forward.25} parent=0 // pred_region
    _
  $region9: #{vit_forward.25} parent=0 // pred_fallthru
    _
  // Predicated region
  $region10: #{vit_forward.25} parent=0 // pred_check
    _
  $region11: #{vit_forward.25} parent=0 // pred_check_branch
    %15 = sbr.rel (0) target = $region13
  $region12: #{vit_forward.25} parent=0 // pred_region
    _
  $region13: #{vit_forward.25} parent=0 // pred_fallthru
    _
  // Predicated region
  $region14: #{vit_forward.25} parent=0 // pred_check
    _
  $region15: #{vit_forward.25} parent=0 // pred_check_branch
    %17 = sbr.rel (0) target = $region17
  $region16: #{vit_forward.25} parent=0 // pred_region
    _
  $region17: #{vit_forward.25} parent=0 // pred_fallthru
    _
  // Predicated region
  $region18: #{vit_forward.25} parent=0 // pred_check
    _
  $region19: #{vit_forward.25} parent=0 // pred_check_branch
    %19 = sbr.rel (0) target = $region21
  $region20: #{vit_forward.25} parent=0 // pred_region
    _
  $region21: #{vit_forward.25} parent=0 // pred_fallthru
    _
  %p21 = scmp.eq.s32.totalorder 0, 0
  // Predicated region
  $region22: #{vit_forward.25} parent=0 // pred_check
    %p22 = pneg %p21
  $region23: #{vit_forward.25} parent=0 // pred_check_branch
    %24 = sbr.rel (%p22) target = $region25
  $region24: #{vit_forward.25} parent=0 // pred_region
    %v25 = vld [vmem:[%s0] sm:$0xf]
    %v26 = vld [vmem:[%s0 + $0x4] sm:$0xf]
    %v27 = vld [vmem:[%s0 + $0x8] sm:$0xf]
    %v28 = vld [vmem:[%s0 + $0xc] sm:$0xf]
    %v29 = vunpack.c.l.bf16 %v25
    %v30 = vunpack.c.l.bf16 %v26
    %v31 = vunpack.c.l.bf16 %v27
    %v32 = vunpack.c.l.bf16 %v28
    %vm33 = vcmask 261120
    %v34 = vsel %vm33, %v29, 0.0
    %35 = vadd.xlane.f32.xlu0 %v34
    %v36 = vpop.xlane.xlu0 %35
    %v37 = vsel %vm33, %v30, 0.0
    %38 = vadd.xlane.f32.xlu0 %v37
    %v39 = vpop.xlane.xlu0 %38
    %v40 = vsel %vm33, %v31, 0.0
    %41 = vadd.xlane.f32.xlu0 %v40
    %v42 = vpop.xlane.xlu0 %41
    %v43 = vsel %vm33, %v32, 0.0
    %44 = vadd.xlane.f32.xlu0 %v43
    %v45 = vpop.xlane.xlu0 %44
    %v46 = vrcp.pop 32.0
    %v47 = vmul.f32 32.0, %v46
    %v48 = vsub.f32 1.0, %v47
    %v49 = vmul.f32 %v46, %v48
    %v50 = vadd.f32 %v46, %v49
    %vm51 = vweird.f32 %v46
    %v52 = vsel %vm51, %v46, %v50
    %v53 = vmul.f32 %v36, %v52
    %v54 = vmul.f32 %v39, %v52
    %v55 = vmul.f32 %v42, %v52
    %v56 = vmul.f32 %v45, %v52
    %v57 = vsub.f32 %v29, %v53
    %v58 = vsub.f32 %v30, %v54
    %v59 = vsub.f32 %v31, %v55
    %v60 = vsub.f32 %v32, %v56
    %v61 = vmul.f32 %v57, %v57
    %v62 = vmul.f32 %v58, %v58
    %v63 = vmul.f32 %v59, %v59
    %v64 = vmul.f32 %v60, %v60
    %v65 = vsel %vm33, %v61, 0.0
    %66 = vadd.xlane.f32.xlu0 %v65
    %v67 = vpop.xlane.xlu0 %66
    %v68 = vsel %vm33, %v62, 0.0
    %69 = vadd.xlane.f32.xlu0 %v68
    %v70 = vpop.xlane.xlu0 %69
    %v71 = vsel %vm33, %v63, 0.0
    %72 = vadd.xlane.f32.xlu0 %v71
    %v73 = vpop.xlane.xlu0 %72
    %v74 = vsel %vm33, %v64, 0.0
    %75 = vadd.xlane.f32.xlu0 %v74
    %v76 = vpop.xlane.xlu0 %75
    %v77 = vmul.f32 %v67, %v52
    %v78 = vmul.f32 %v70, %v52
    %v79 = vmul.f32 %v73, %v52
    %v80 = vmul.f32 %v76, %v52
    %v81 = vadd.f32 %v77, 1e-06
    %v82 = vadd.f32 %v78, 1e-06
    %v83 = vadd.f32 %v79, 1e-06
    %v84 = vadd.f32 %v80, 1e-06
    %v85 = vrsqrt.pop %v81
    %v86 = vmul.f32 %v85, %v81
    %v87 = vmul.f32 %v86, %v85
    %v88 = vmul.f32 0.5, %v87
    %v89 = vsub.f32 1.5, %v88
    %v90 = vmul.f32 %v85, %v89
    %vm91 = vweird.f32 %v81
    %vm92 = vweird.f32 %v85
    %vm93 = vmor %vm91, %vm92
    %v94 = vsel %vm93, %v85, %v90
    %v95 = vrsqrt.pop %v82
    %v96 = vmul.f32 %v95, %v82
    %v97 = vmul.f32 %v96, %v95
    %v98 = vmul.f32 0.5, %v97
    %v99 = vsub.f32 1.5, %v98
    %v100 = vmul.f32 %v95, %v99
    %vm101 = vweird.f32 %v82
    %vm102 = vweird.f32 %v95
    %vm103 = vmor %vm101, %vm102
    %v104 = vsel %vm103, %v95, %v100
    %v105 = vrsqrt.pop %v83
    %v106 = vmul.f32 %v105, %v83
    %v107 = vmul.f32 %v106, %v105
    %v108 = vmul.f32 0.5, %v107
    %v109 = vsub.f32 1.5, %v108
    %v110 = vmul.f32 %v105, %v109
    %vm111 = vweird.f32 %v83
    %vm112 = vweird.f32 %v105
    %vm113 = vmor %vm111, %vm112
    %v114 = vsel %vm113, %v105, %v110
    %v115 = vrsqrt.pop %v84
    %v116 = vmul.f32 %v115, %v84
    %v117 = vmul.f32 %v116, %v115
    %v118 = vmul.f32 0.5, %v117
    %v119 = vsub.f32 1.5, %v118
    %v120 = vmul.f32 %v115, %v119
    %vm121 = vweird.f32 %v84
    %vm122 = vweird.f32 %v115
    %vm123 = vmor %vm121, %vm122
    %v124 = vsel %vm123, %v115, %v120
    %v125 = vmul.f32 %v57, %v94
    %v126 = vmul.f32 %v58, %v104
    %v127 = vmul.f32 %v59, %v114
    %v128 = vmul.f32 %v60, %v124
    %v129 = vld [vmem:[%s1] sm:$0x1]
    %v131 = vperm.slane %v129, 0
    %v133 = vmul.f32 %v125, %v131
    %v134 = vmul.f32 %v126, %v131
    %v135 = vmul.f32 %v127, %v131
    %v136 = vmul.f32 %v128, %v131
    %v137 = vld [vmem:[%s2] sm:$0x1]
    %v139 = vperm.slane %v137, 0
    %v141 = vadd.f32 %v133, %v139
    %v142 = vadd.f32 %v134, %v139
    %v143 = vadd.f32 %v135, %v139
    %v144 = vadd.f32 %v136, %v139
    %v145 = vpack.c.bf16 %v141, %v141
    %v146 = vpack.c.bf16 %v142, %v142
    %v147 = vpack.c.bf16 %v143, %v143
    %v148 = vpack.c.bf16 %v144, %v144
    %vm149 = vcmask 257024
    %150 = vst.msk [vmem:[#allocation2] sm:$0xf] %vm149, %v145
    %151 = vst.msk [vmem:[#allocation2 + $0x4] sm:$0xf] %vm149, %v146
    %152 = vst.msk [vmem:[#allocation2 + $0x8] sm:$0xf] %vm149, %v147
    %153 = vst.msk [vmem:[#allocation2 + $0xc] sm:$0xf] %vm149, %v148
  $region25: #{vit_forward.25} parent=0 // pred_fallthru
    _
  %v154 = vld [vmem:[#allocation2] sm:$0xf]
  %v155 = vld [vmem:[#allocation2 + $0x4] sm:$0xf]
  %v156 = vld [vmem:[#allocation2 + $0x8] sm:$0xf]
  %v157 = vld [vmem:[#allocation2 + $0xc] sm:$0xf]
  %v158 = vld [vmem:[%s3] sm:$0xf]
  %v159 = vld [vmem:[%s3 + $0x4] sm:$0xf]
  %v160 = vld [vmem:[%s3 + $0x8] sm:$0xf]
  %v161 = vld [vmem:[%s3 + $0xc] sm:$0xf]
  %v162 = vld [vmem:[%s4] sm:$0x1]
  %v164 = vperm.slane %v162, 0
  %v170 = vunpack.c.l.b16 %v154
  %v171 = vunpack.c.l.b16 %v155
  %v172 = vunpack.c.l.b16 %v156
  %v173 = vunpack.c.l.b16 %v157
  %v174 = vpack.c.b16 %v171, %v170
  %v175 = vpack.c.b16 %v173, %v172
  %v180 = vunpack.c.l.b16 %v158
  %v181 = vunpack.c.l.b16 %v159
  %v182 = vunpack.c.l.b16 %v160
  %v183 = vunpack.c.l.b16 %v161
  %v184 = vpack.c.b16 %v181, %v180
  %v185 = vpack.c.b16 %v183, %v182
  %vm188 = vcmask 261120
  %v190 = vsel %vm188, %v174, 0
  %v193 = vsel %vm188, %v175, 0
  %195 = vmatpush.bf16.msra.mxu0 0
  %196 = vmatpush.bf16.msra.mxu0 0
  %197 = vmatpush.bf16.msra.mxu0 0
  %198 = vmatpush.bf16.msra.mxu0 0
  %199 = vmatpush.bf16.msra.mxu0 0
  %200 = vmatpush.bf16.msra.mxu0 0
  %201 = vmatpush.bf16.msra.mxu0 %v185
  %202 = vmatpush.bf16.msra.mxu0 %v184
  %203 = vmatmul.bf16.gmra.mxu0 %v190
  %v204 = vpop.f32.mrf.mxu0
  %v205 = vadd.f32 %v164, %v204
  %v206 = vpop.f32.mrf.mxu0
  %v207 = vadd.f32 %v164, %v206
  %208 = vmatmul.bf16.gmra.mxu0 %v193
  %v209 = vpop.f32.mrf.mxu0
  %v210 = vadd.f32 %v164, %v209
  %v211 = vpop.f32.mrf.mxu0
  %v212 = vadd.f32 %v164, %v211
  %213 = vdwg.mxu0
  %v214 = vpack.c.bf16 %v205, %v205
  %v215 = vpack.c.bf16 %v207, %v207
  %v216 = vpack.c.bf16 %v210, %v210
  %v217 = vpack.c.bf16 %v212, %v212
  %vm218 = vcmask 519168
  %219 = vst.msk [vmem:[%s5] sm:$0xf] %vm218, %v214
  %220 = vst.msk [vmem:[%s5 + $0x4] sm:$0xf] %vm218, %v215
  %221 = vst.msk [vmem:[%s5 + $0x8] sm:$0xf] %vm218, %v216
  %222 = vst.msk [vmem:[%s5 + $0xc] sm:$0xf] %vm218, %v217
  // Predicated region
  $region26: #{vit_forward.25} parent=0 // pred_check
    _
  $region27: #{vit_forward.25} parent=0 // pred_check_branch
    %224 = sbr.rel (0) target = $region29
  $region28: #{vit_forward.25} parent=0 // pred_region
    _
  $region29: #{vit_forward.25} parent=0 // pred_fallthru
    _
  // Predicated region
  $region30: #{vit_forward.25} parent=0 // pred_check
    _
  $region31: #{vit_forward.25} parent=0 // pred_check_branch
    %226 = sbr.rel (0) target = $region33
  $region32: #{vit_forward.25} parent=0 // pred_region
    _
  $region33: #{vit_forward.25} parent=0 // pred_fallthru
    _

// kernel: vit_forward.26
$region0: #{vit_forward.26}
  #allocation0 [shape = 'u32[]', space=smem, size = 0x4, offset = 0x4, fixed_abs, tag = 'smem constant byte address 0x4 - core index']
  #allocation1 [shape = 'u32[72,128]{1,0:T(1,128)}', space=vmem, size = 0x9000, scoped, tag = 'internal scratch']
  %s0 = inlined_call_operand.vmem [shape: bf16[2,1,32], index: 0, kind: input, shape index: {}]
  %s1 = inlined_call_operand.vmem [shape: bf16[2,16,64], index: 1, kind: input, shape index: {}]
  %s2 = inlined_call_operand.vmem [shape: bf16[2,1,32], index: 2, kind: output, shape index: {}]
  %s3 = sld [smem:[#allocation0]]
  $region18: #{vit_forward.26} parent=0
    _
  %s5 = ssub.s32 1, %s3
  %s6 = scalar_select 0, %s5, %s3
  // Predicated region
  $region2: #{vit_forward.26} parent=0 // pred_check
    _
  $region3: #{vit_forward.26} parent=0 // pred_check_branch
    %8 = sbr.rel (0) target = $region5
  $region4: #{vit_forward.26} parent=0 // pred_region
    _
  $region5: #{vit_forward.26} parent=0 // pred_fallthru
    _
  // Predicated region
  $region6: #{vit_forward.26} parent=0 // pred_check
    _
  $region7: #{vit_forward.26} parent=0 // pred_check_branch
    %10 = sbr.rel (0) target = $region9
  $region8: #{vit_forward.26} parent=0 // pred_region
    _
  $region9: #{vit_forward.26} parent=0 // pred_fallthru
    _
  %v12 = vld [vmem:[%s0] sm:$0x1]
  %v13 = vld [vmem:[%s1] sm:$0xf]
  %v14 = vld [vmem:[%s1 + $0x4] sm:$0xf]
  %v17 = vunpack.c.l.b16 %v13
  %v18 = vunpack.c.l.b16 %v14
  %v19 = vpack.c.b16 %v18, %v17
  %vm20 = vcmask 64512
  %v22 = vsel %vm20, %v12, 0
  %v25 = vsel %vm20, %v19, 0
  %27 = vmatpush.bf16.xpose.msra.mxu0 0
  %28 = vmatpush.bf16.xpose.msra.mxu0 0
  %29 = vmatpush.bf16.xpose.msra.mxu0 0
  %30 = vmatpush.bf16.xpose.msra.mxu0 0
  %31 = vmatpush.bf16.xpose.msra.mxu0 0
  %32 = vmatpush.bf16.xpose.msra.mxu0 0
  %33 = vmatpush.bf16.xpose.msra.mxu0 0
  %34 = vmatpush.bf16.xpose.msra.mxu0 %v25
  %35 = vmatmul.bf16.gmra.mxu0 %v22
  %v36 = vpop.f32.mrf.mxu0
  %v37 = vadd.f32 0.0, %v36
  %v38 = vpop.f32.mrf.mxu0
  %39 = vdwg.mxu0
  %vm40 = vcmask 122880
  %v41 = vsel %vm40, %v37, -inf
  %42 = vmax.xlane.f32.xlu0 %v41
  %v43 = vpop.xlane.xlu0 %42
  %v44 = vsub.f32 %v37, %v43
  %v45 = vmul.f32 %v44, 1.442695
  %v46 = vpow.pop %v45
  %v47 = vsel %vm40, %v46, 0.0
  %48 = vadd.xlane.f32.xlu0 %v47
  %v49 = vpop.xlane.xlu0 %48
  %v50 = vpack.c.bf16 %v46, %v46
  %51 = vrot.lane.b32.xlu0 %v19, 96
  %v52 = vpop.permute.xlu0 %51
  %vm54 = vcmask 130048
  %v56 = vsel %vm54, %v50, 0
  %58 = vmatpush.bf16.msra.mxu0 0
  %59 = vmatpush.bf16.msra.mxu0 0
  %60 = vmatpush.bf16.msra.mxu0 0
  %61 = vmatpush.bf16.msra.mxu0 0
  %62 = vmatpush.bf16.msra.mxu0 0
  %63 = vmatpush.bf16.msra.mxu0 0
  %64 = vmatpush.bf16.msra.mxu0 0
  %65 = vmatpush.bf16.msra.mxu0 %v52
  %66 = vmatmul.bf16.gmra.mxu0 %v56
  %v67 = vpop.f32.mrf.mxu0
  %v68 = vadd.f32 0.0, %v67
  %v69 = vpop.f32.mrf.mxu0
  %70 = vdwg.mxu0
  %v71 = vrcp.pop %v49
  %v72 = vmul.f32 %v68, %v71
  %v73 = vpack.c.bf16 %v72, %v72
  %vm74 = vcmask 57344
  %vm75 = vsmask.f32 256
  %vm76 = vmand %vm74, %vm75
  %v77 = vld [vmem:[%s2] sm:$0x1]
  %v78 = vsel %vm76, %v73, %v77
  %79 = vst [vmem:[%s2] sm:$0x1] %v78
  %v80 = vld [vmem:[%s0] sm:$0x1]
  %v81 = vld [vmem:[%s1] sm:$0xf]
  %v82 = vld [vmem:[%s1 + $0x4] sm:$0xf]
  %84 = vst [vmem:[#allocation1] ss:$9 sm:$0xff] %v80
  %v85 = vld [vmem:[#allocation1] sm:$0xff]
  %87 = vrot.lane.b32.xlu0 %v85, 120
  %v88 = vpop.permute.xlu0 %87
  %v91 = vunpack.c.l.b16 %v81
  %v92 = vunpack.c.l.b16 %v82
  %v93 = vpack.c.b16 %v92, %v91
  %94 = vrot.lane.b32.xlu0 %v93, 120
  %v95 = vpop.permute.xlu0 %94
  %v97 = vsel %vm20, %v88, 0
  %v100 = vsel %vm20, %v95, 0
  %102 = vmatpush.bf16.xpose.msra.mxu0 0
  %103 = vmatpush.bf16.xpose.msra.mxu0 0
  %104 = vmatpush.bf16.xpose.msra.mxu0 0
  %105 = vmatpush.bf16.xpose.msra.mxu0 0
  %106 = vmatpush.bf16.xpose.msra.mxu0 0
  %107 = vmatpush.bf16.xpose.msra.mxu0 0
  %108 = vmatpush.bf16.xpose.msra.mxu0 0
  %109 = vmatpush.bf16.xpose.msra.mxu0 %v100
  %110 = vmatmul.bf16.gmra.mxu0 %v97
  %v111 = vpop.f32.mrf.mxu0
  %v112 = vadd.f32 0.0, %v111
  %v113 = vpop.f32.mrf.mxu0
  %114 = vdwg.mxu0
  %v115 = vsel %vm40, %v112, -inf
  %116 = vmax.xlane.f32.xlu0 %v115
  %v117 = vpop.xlane.xlu0 %116
  %v118 = vsub.f32 %v112, %v117
  %v119 = vmul.f32 %v118, 1.442695
  %v120 = vpow.pop %v119
  %v121 = vsel %vm40, %v120, 0.0
  %122 = vadd.xlane.f32.xlu0 %v121
  %v123 = vpop.xlane.xlu0 %122
  %v124 = vpack.c.bf16 %v120, %v120
  %125 = vrot.lane.b32.xlu0 %v93, 88
  %v126 = vpop.permute.xlu0 %125
  %v129 = vsel %vm54, %v124, 0
  %131 = vmatpush.bf16.msra.mxu0 0
  %132 = vmatpush.bf16.msra.mxu0 0
  %133 = vmatpush.bf16.msra.mxu0 0
  %134 = vmatpush.bf16.msra.mxu0 0
  %135 = vmatpush.bf16.msra.mxu0 0
  %136 = vmatpush.bf16.msra.mxu0 0
  %137 = vmatpush.bf16.msra.mxu0 0
  %138 = vmatpush.bf16.msra.mxu0 %v126
  %139 = vmatmul.bf16.gmra.mxu0 %v129
  %v140 = vpop.f32.mrf.mxu0
  %v141 = vadd.f32 0.0, %v140
  %v142 = vpop.f32.mrf.mxu0
  %143 = vdwg.mxu0
  %v144 = vrcp.pop %v123
  %v145 = vmul.f32 %v141, %v144
  %v146 = vpack.c.bf16 %v145, %v145
  %v148 = vrot.slane %v146, 3
  %vm149 = vcmask 1040384
  %v152 = vsel %vm149, %v146, %v148
  %154 = vrot.lane.b32.xlu0 %v152, 8
  %v155 = vpop.permute.xlu0 %154
  %vm157 = vcmask 122944
  %vm158 = vmand %vm157, %vm75
  %v159 = vld [vmem:[%s2] sm:$0x1]
  %v160 = vsel %vm158, %v155, %v159
  %161 = vst [vmem:[%s2] sm:$0x1] %v160
  %v162 = vld [vmem:[%s0] sm:$0x1]
  %v163 = vld [vmem:[%s1] sm:$0xf]
  %v164 = vld [vmem:[%s1 + $0x4] sm:$0xf]
  %166 = vst [vmem:[#allocation1] ss:$9 sm:$0xff] %v162
  %v167 = vld [vmem:[#allocation1] sm:$0xff]
  %169 = vrot.lane.b32.xlu0 %v167, 112
  %v170 = vpop.permute.xlu0 %169
  %v173 = vunpack.c.l.b16 %v163
  %v174 = vunpack.c.l.b16 %v164
  %v175 = vpack.c.b16 %v174, %v173
  %176 = vrot.lane.b32.xlu0 %v175, 112
  %v177 = vpop.permute.xlu0 %176
  %v179 = vsel %vm20, %v170, 0
  %v182 = vsel %vm20, %v177, 0
  %184 = vmatpush.bf16.xpose.msra.mxu0 0
  %185 = vmatpush.bf16.xpose.msra.mxu0 0
  %186 = vmatpush.bf16.xpose.msra.mxu0 0
  %187 = vmatpush.bf16.xpose.msra.mxu0 0
  %188 = vmatpush.bf16.xpose.msra.mxu0 0
  %189 = vmatpush.bf16.xpose.msra.mxu0 0
  %190 = vmatpush.bf16.xpose.msra.mxu0 0
  %191 = vmatpush.bf16.xpose.msra.mxu0 %v182
  %192 = vmatmul.bf16.gmra.mxu0 %v179
  %v193 = vpop.f32.mrf.mxu0
  %v194 = vadd.f32 0.0, %v193
  %v195 = vpop.f32.mrf.mxu0
  %196 = vdwg.mxu0
  %v197 = vsel %vm40, %v194, -inf
  %198 = vmax.xlane.f32.xlu0 %v197
  %v199 = vpop.xlane.xlu0 %198
  %v200 = vsub.f32 %v194, %v199
  %v201 = vmul.f32 %v200, 1.442695
  %v202 = vpow.pop %v201
  %v203 = vsel %vm40, %v202, 0.0
  %204 = vadd.xlane.f32.xlu0 %v203
  %v205 = vpop.xlane.xlu0 %204
  %v206 = vpack.c.bf16 %v202, %v202
  %207 = vrot.lane.b32.xlu0 %v175, 80
  %v208 = vpop.permute.xlu0 %207
  %v211 = vsel %vm54, %v206, 0
  %213 = vmatpush.bf16.msra.mxu0 0
  %214 = vmatpush.bf16.msra.mxu0 0
  %215 = vmatpush.bf16.msra.mxu0 0
  %216 = vmatpush.bf16.msra.mxu0 0
  %217 = vmatpush.bf16.msra.mxu0 0
  %218 = vmatpush.bf16.msra.mxu0 0
  %219 = vmatpush.bf16.msra.mxu0 0
  %220 = vmatpush.bf16.msra.mxu0 %v208
  %221 = vmatmul.bf16.gmra.mxu0 %v211
  %v222 = vpop.f32.mrf.mxu0
  %v223 = vadd.f32 0.0, %v222
  %v224 = vpop.f32.mrf.mxu0
  %225 = vdwg.mxu0
  %v226 = vrcp.pop %v205
  %v227 = vmul.f32 %v223, %v226
  %v228 = vpack.c.bf16 %v227, %v227
  %v230 = vrot.slane %v228, 3
  %v233 = vsel %vm149, %v228, %v230
  %235 = vrot.lane.b32.xlu0 %v233, 16
  %v236 = vpop.permute.xlu0 %235
  %vm238 = vcmask 188544
  %vm239 = vmand %vm238, %vm75
  %v240 = vld [vmem:[%s2] sm:$0x1]
  %v241 = vsel %vm239, %v236, %v240
  %242 = vst [vmem:[%s2] sm:$0x1] %v241
  %v243 = vld [vmem:[%s0] sm:$0x1]
  %v244 = vld [vmem:[%s1] sm:$0xf]
  %v245 = vld [vmem:[%s1 + $0x4] sm:$0xf]
  %247 = vst [vmem:[#allocation1] ss:$9 sm:$0xff] %v243
  %v248 = vld [vmem:[#allocation1] sm:$0xff]
  %250 = vrot.lane.b32.xlu0 %v248, 104
  %v251 = vpop.permute.xlu0 %250
  %v254 = vunpack.c.l.b16 %v244
  %v255 = vunpack.c.l.b16 %v245
  %v256 = vpack.c.b16 %v255, %v254
  %257 = vrot.lane.b32.xlu0 %v256, 104
  %v258 = vpop.permute.xlu0 %257
  %v260 = vsel %vm20, %v251, 0
  %v263 = vsel %vm20, %v258, 0
  %265 = vmatpush.bf16.xpose.msra.mxu0 0
  %266 = vmatpush.bf16.xpose.msra.mxu0 0
  %267 = vmatpush.bf16.xpose.msra.mxu0 0
  %268 = vmatpush.bf16.xpose.msra.mxu0 0
  %269 = vmatpush.bf16.xpose.msra.mxu0 0
  %270 = vmatpush.bf16.xpose.msra.mxu0 0
  %271 = vmatpush.bf16.xpose.msra.mxu0 0
  %272 = vmatpush.bf16.xpose.msra.mxu0 %v263
  %273 = vmatmul.bf16.gmra.mxu0 %v260
  %v274 = vpop.f32.mrf.mxu0
  %v275 = vadd.f32 0.0, %v274
  %v276 = vpop.f32.mrf.mxu0
  %277 = vdwg.mxu0
  %v278 = vsel %vm40, %v275, -inf
  %279 = vmax.xlane.f32.xlu0 %v278
  %v280 = vpop.xlane.xlu0 %279
  %v281 = vsub.f32 %v275, %v280
  %v282 = vmul.f32 %v281, 1.442695
  %v283 = vpow.pop %v282
  %v284 = vsel %vm40, %v283, 0.0
  %285 = vadd.xlane.f32.xlu0 %v284
  %v286 = vpop.xlane.xlu0 %285
  %v287 = vpack.c.bf16 %v283, %v283
  %288 = vrot.lane.b32.xlu0 %v256, 72
  %v289 = vpop.permute.xlu0 %288
  %v292 = vsel %vm54, %v287, 0
  %294 = vmatpush.bf16.msra.mxu0 0
  %295 = vmatpush.bf16.msra.mxu0 0
  %296 = vmatpush.bf16.msra.mxu0 0
  %297 = vmatpush.bf16.msra.mxu0 0
  %298 = vmatpush.bf16.msra.mxu0 0
  %299 = vmatpush.bf16.msra.mxu0 0
  %300 = vmatpush.bf16.msra.mxu0 0
  %301 = vmatpush.bf16.msra.mxu0 %v289
  %302 = vmatmul.bf16.gmra.mxu0 %v292
  %v303 = vpop.f32.mrf.mxu0
  %v304 = vadd.f32 0.0, %v303
  %v305 = vpop.f32.mrf.mxu0
  %306 = vdwg.mxu0
  %v307 = vrcp.pop %v286
  %v308 = vmul.f32 %v304, %v307
  %v309 = vpack.c.bf16 %v308, %v308
  %v311 = vrot.slane %v309, 3
  %v314 = vsel %vm149, %v309, %v311
  %316 = vrot.lane.b32.xlu0 %v314, 24
  %v317 = vpop.permute.xlu0 %316
  %vm319 = vcmask 254144
  %vm320 = vmand %vm319, %vm75
  %v321 = vld [vmem:[%s2] sm:$0x1]
  %v322 = vsel %vm320, %v317, %v321
  %323 = vst [vmem:[%s2] sm:$0x1] %v322
  %s324 = scalar_lea.vmem %s0, 1
  %v325 = vld [vmem:[%s324] sm:$0x1]
  %s326 = scalar_lea.vmem %s1, 8
  %v327 = vld [vmem:[%s326] sm:$0xf]
  %v328 = vld [vmem:[%s326 + $0x4] sm:$0xf]
  %v331 = vunpack.c.l.b16 %v327
  %v332 = vunpack.c.l.b16 %v328
  %v333 = vpack.c.b16 %v332, %v331
  %v335 = vsel %vm20, %v325, 0
  %v338 = vsel %vm20, %v333, 0
  %340 = vmatpush.bf16.xpose.msra.mxu0 0
  %341 = vmatpush.bf16.xpose.msra.mxu0 0
  %342 = vmatpush.bf16.xpose.msra.mxu0 0
  %343 = vmatpush.bf16.xpose.msra.mxu0 0
  %344 = vmatpush.bf16.xpose.msra.mxu0 0
  %345 = vmatpush.bf16.xpose.msra.mxu0 0
  %346 = vmatpush.bf16.xpose.msra.mxu0 0
  %347 = vmatpush.bf16.xpose.msra.mxu0 %v338
  %348 = vmatmul.bf16.gmra.mxu0 %v335
  %v349 = vpop.f32.mrf.mxu0
  %v350 = vadd.f32 0.0, %v349
  %v351 = vpop.f32.mrf.mxu0
  %352 = vdwg.mxu0
  %v353 = vsel %vm40, %v350, -inf
  %354 = vmax.xlane.f32.xlu0 %v353
  %v355 = vpop.xlane.xlu0 %354
  %v356 = vsub.f32 %v350, %v355
  %v357 = vmul.f32 %v356, 1.442695
  %v358 = vpow.pop %v357
  %v359 = vsel %vm40, %v358, 0.0
  %360 = vadd.xlane.f32.xlu0 %v359
  %v361 = vpop.xlane.xlu0 %360
  %v362 = vpack.c.bf16 %v358, %v358
  %363 = vrot.lane.b32.xlu0 %v333, 96
  %v364 = vpop.permute.xlu0 %363
  %v367 = vsel %vm54, %v362, 0
  %369 = vmatpush.bf16.msra.mxu0 0
  %370 = vmatpush.bf16.msra.mxu0 0
  %371 = vmatpush.bf16.msra.mxu0 0
  %372 = vmatpush.bf16.msra.mxu0 0
  %373 = vmatpush.bf16.msra.mxu0 0
  %374 = vmatpush.bf16.msra.mxu0 0
  %375 = vmatpush.bf16.msra.mxu0 0
  %376 = vmatpush.bf16.msra.mxu0 %v364
  %377 = vmatmul.bf16.gmra.mxu0 %v367
  %v378 = vpop.f32.mrf.mxu0
  %v379 = vadd.f32 0.0, %v378
  %v380 = vpop.f32.mrf.mxu0
  %381 = vdwg.mxu0
  %v382 = vrcp.pop %v361
  %v383 = vmul.f32 %v379, %v382
  %v384 = vpack.c.bf16 %v383, %v383
  %s385 = scalar_lea.vmem %s2, 1
  %v386 = vld [vmem:[%s385] sm:$0x1]
  %v387 = vsel %vm76, %v384, %v386
  %388 = vst [vmem:[%s385] sm:$0x1] %v387
  %v389 = vld [vmem:[%s324] sm:$0x1]
  %v390 = vld [vmem:[%s326] sm:$0xf]
  %v391 = vld [vmem:[%s326 + $0x4] sm:$0xf]
  %393 = vst [vmem:[#allocation1] ss:$9 sm:$0xff] %v389
  %v394 = vld [vmem:[#allocation1] sm:$0xff]
  %396 = vrot.lane.b32.xlu0 %v394, 120
  %v397 = vpop.permute.xlu0 %396
  %v400 = vunpack.c.l.b16 %v390
  %v401 = vunpack.c.l.b16 %v391
  %v402 = vpack.c.b16 %v401, %v400
  %403 = vrot.lane.b32.xlu0 %v402, 120
  %v404 = vpop.permute.xlu0 %403
  %v406 = vsel %vm20, %v397, 0
  %v409 = vsel %vm20, %v404, 0
  %411 = vmatpush.bf16.xpose.msra.mxu0 0
  %412 = vmatpush.bf16.xpose.msra.mxu0 0
  %413 = vmatpush.bf16.xpose.msra.mxu0 0
  %414 = vmatpush.bf16.xpose.msra.mxu0 0
  %415 = vmatpush.bf16.xpose.msra.mxu0 0
  %416 = vmatpush.bf16.xpose.msra.mxu0 0
  %417 = vmatpush.bf16.xpose.msra.mxu0 0
  %418 = vmatpush.bf16.xpose.msra.mxu0 %v409
  %419 = vmatmul.bf16.gmra.mxu0 %v406
  %v420 = vpop.f32.mrf.mxu0
  %v421 = vadd.f32 0.0, %v420
  %v422 = vpop.f32.mrf.mxu0
  %423 = vdwg.mxu0
  %v424 = vsel %vm40, %v421, -inf
  %425 = vmax.xlane.f32.xlu0 %v424
  %v426 = vpop.xlane.xlu0 %425
  %v427 = vsub.f32 %v421, %v426
  %v428 = vmul.f32 %v427, 1.442695
  %v429 = vpow.pop %v428
  %v430 = vsel %vm40, %v429, 0.0
  %431 = vadd.xlane.f32.xlu0 %v430
  %v432 = vpop.xlane.xlu0 %431
  %v433 = vpack.c.bf16 %v429, %v429
  %434 = vrot.lane.b32.xlu0 %v402, 88
  %v435 = vpop.permute.xlu0 %434
  %v438 = vsel %vm54, %v433, 0
  %440 = vmatpush.bf16.msra.mxu0 0
  %441 = vmatpush.bf16.msra.mxu0 0
  %442 = vmatpush.bf16.msra.mxu0 0
  %443 = vmatpush.bf16.msra.mxu0 0
  %444 = vmatpush.bf16.msra.mxu0 0
  %445 = vmatpush.bf16.msra.mxu0 0
  %446 = vmatpush.bf16.msra.mxu0 0
  %447 = vmatpush.bf16.msra.mxu0 %v435
  %448 = vmatmul.bf16.gmra.mxu0 %v438
  %v449 = vpop.f32.mrf.mxu0
  %v450 = vadd.f32 0.0, %v449
  %v451 = vpop.f32.mrf.mxu0
  %452 = vdwg.mxu0
  %v453 = vrcp.pop %v432
  %v454 = vmul.f32 %v450, %v453
  %v455 = vpack.c.bf16 %v454, %v454
  %v457 = vrot.slane %v455, 3
  %v460 = vsel %vm149, %v455, %v457
  %462 = vrot.lane.b32.xlu0 %v460, 8
  %v463 = vpop.permute.xlu0 %462
  %v465 = vld [vmem:[%s385] sm:$0x1]
  %v466 = vsel %vm158, %v463, %v465
  %467 = vst [vmem:[%s385] sm:$0x1] %v466
  %v468 = vld [vmem:[%s324] sm:$0x1]
  %v469 = vld [vmem:[%s326] sm:$0xf]
  %v470 = vld [vmem:[%s326 + $0x4] sm:$0xf]
  %472 = vst [vmem:[#allocation1] ss:$9 sm:$0xff] %v468
  %v473 = vld [vmem:[#allocation1] sm:$0xff]
  %475 = vrot.lane.b32.xlu0 %v473, 112
  %v476 = vpop.permute.xlu0 %475
  %v479 = vunpack.c.l.b16 %v469
  %v480 = vunpack.c.l.b16 %v470
  %v481 = vpack.c.b16 %v480, %v479
  %482 = vrot.lane.b32.xlu0 %v481, 112
  %v483 = vpop.permute.xlu0 %482
  %v485 = vsel %vm20, %v476, 0
  %v488 = vsel %vm20, %v483, 0
  %490 = vmatpush.bf16.xpose.msra.mxu0 0
  %491 = vmatpush.bf16.xpose.msra.mxu0 0
  %492 = vmatpush.bf16.xpose.msra.mxu0 0
  %493 = vmatpush.bf16.xpose.msra.mxu0 0
  %494 = vmatpush.bf16.xpose.msra.mxu0 0
  %495 = vmatpush.bf16.xpose.msra.mxu0 0
  %496 = vmatpush.bf16.xpose.msra.mxu0 0
  %497 = vmatpush.bf16.xpose.msra.mxu0 %v488
  %498 = vmatmul.bf16.gmra.mxu0 %v485
  %v499 = vpop.f32.mrf.mxu0
  %v500 = vadd.f32 0.0, %v499
  %v501 = vpop.f32.mrf.mxu0
  %502 = vdwg.mxu0
  %v503 = vsel %vm40, %v500, -inf
  %504 = vmax.xlane.f32.xlu0 %v503
  %v505 = vpop.xlane.xlu0 %504
  %v506 = vsub.f32 %v500, %v505
  %v507 = vmul.f32 %v506, 1.442695
  %v508 = vpow.pop %v507
  %v509 = vsel %vm40, %v508, 0.0
  %510 = vadd.xlane.f32.xlu0 %v509
  %v511 = vpop.xlane.xlu0 %510
  %v512 = vpack.c.bf16 %v508, %v508
  %513 = vrot.lane.b32.xlu0 %v481, 80
  %v514 = vpop.permute.xlu0 %513
  %v517 = vsel %vm54, %v512, 0
  %519 = vmatpush.bf16.msra.mxu0 0
  %520 = vmatpush.bf16.msra.mxu0 0
  %521 = vmatpush.bf16.msra.mxu0 0
  %522 = vmatpush.bf16.msra.mxu0 0
  %523 = vmatpush.bf16.msra.mxu0 0
  %524 = vmatpush.bf16.msra.mxu0 0
  %525 = vmatpush.bf16.msra.mxu0 0
  %526 = vmatpush.bf16.msra.mxu0 %v514
  %527 = vmatmul.bf16.gmra.mxu0 %v517
  %v528 = vpop.f32.mrf.mxu0
  %v529 = vadd.f32 0.0, %v528
  %v530 = vpop.f32.mrf.mxu0
  %531 = vdwg.mxu0
  %v532 = vrcp.pop %v511
  %v533 = vmul.f32 %v529, %v532
  %v534 = vpack.c.bf16 %v533, %v533
  %v536 = vrot.slane %v534, 3
  %v539 = vsel %vm149, %v534, %v536
  %541 = vrot.lane.b32.xlu0 %v539, 16
  %v542 = vpop.permute.xlu0 %541
  %v544 = vld [vmem:[%s385] sm:$0x1]
  %v545 = vsel %vm239, %v542, %v544
  %546 = vst [vmem:[%s385] sm:$0x1] %v545
  %v547 = vld [vmem:[%s324] sm:$0x1]
  %v548 = vld [vmem:[%s326] sm:$0xf]
  %v549 = vld [vmem:[%s326 + $0x4] sm:$0xf]
  %551 = vst [vmem:[#allocation1] ss:$9 sm:$0xff] %v547
  %v552 = vld [vmem:[#allocation1] sm:$0xff]
  %554 = vrot.lane.b32.xlu0 %v552, 104
  %v555 = vpop.permute.xlu0 %554
  %v558 = vunpack.c.l.b16 %v548
  %v559 = vunpack.c.l.b16 %v549
  %v560 = vpack.c.b16 %v559, %v558
  %561 = vrot.lane.b32.xlu0 %v560, 104
  %v562 = vpop.permute.xlu0 %561
  %v564 = vsel %vm20, %v555, 0
  %v567 = vsel %vm20, %v562, 0
  %569 = vmatpush.bf16.xpose.msra.mxu0 0
  %570 = vmatpush.bf16.xpose.msra.mxu0 0
  %571 = vmatpush.bf16.xpose.msra.mxu0 0
  %572 = vmatpush.bf16.xpose.msra.mxu0 0
  %573 = vmatpush.bf16.xpose.msra.mxu0 0
  %574 = vmatpush.bf16.xpose.msra.mxu0 0
  %575 = vmatpush.bf16.xpose.msra.mxu0 0
  %576 = vmatpush.bf16.xpose.msra.mxu0 %v567
  %577 = vmatmul.bf16.gmra.mxu0 %v564
  %v578 = vpop.f32.mrf.mxu0
  %v579 = vadd.f32 0.0, %v578
  %v580 = vpop.f32.mrf.mxu0
  %581 = vdwg.mxu0
  %v582 = vsel %vm40, %v579, -inf
  %583 = vmax.xlane.f32.xlu0 %v582
  %v584 = vpop.xlane.xlu0 %583
  %v585 = vsub.f32 %v579, %v584
  %v586 = vmul.f32 %v585, 1.442695
  %v587 = vpow.pop %v586
  %v588 = vsel %vm40, %v587, 0.0
  %589 = vadd.xlane.f32.xlu0 %v588
  %v590 = vpop.xlane.xlu0 %589
  %v591 = vpack.c.bf16 %v587, %v587
  %592 = vrot.lane.b32.xlu0 %v560, 72
  %v593 = vpop.permute.xlu0 %592
  %v596 = vsel %vm54, %v591, 0
  %598 = vmatpush.bf16.msra.mxu0 0
  %599 = vmatpush.bf16.msra.mxu0 0
  %600 = vmatpush.bf16.msra.mxu0 0
  %601 = vmatpush.bf16.msra.mxu0 0
  %602 = vmatpush.bf16.msra.mxu0 0
  %603 = vmatpush.bf16.msra.mxu0 0
  %604 = vmatpush.bf16.msra.mxu0 0
  %605 = vmatpush.bf16.msra.mxu0 %v593
  %606 = vmatmul.bf16.gmra.mxu0 %v596
  %v607 = vpop.f32.mrf.mxu0
  %v608 = vadd.f32 0.0, %v607
  %v609 = vpop.f32.mrf.mxu0
  %610 = vdwg.mxu0
  %v611 = vrcp.pop %v590
  %v612 = vmul.f32 %v608, %v611
  %v613 = vpack.c.bf16 %v612, %v612
  %v615 = vrot.slane %v613, 3
  %v618 = vsel %vm149, %v613, %v615
  %620 = vrot.lane.b32.xlu0 %v618, 24
  %v621 = vpop.permute.xlu0 %620
  %v623 = vld [vmem:[%s385] sm:$0x1]
  %v624 = vsel %vm320, %v621, %v623
  %625 = vst [vmem:[%s385] sm:$0x1] %v624
  // Predicated region
  $region10: #{vit_forward.26} parent=0 // pred_check
    _
  $region11: #{vit_forward.26} parent=0 // pred_check_branch
    %627 = sbr.rel (0) target = $region13
  $region12: #{vit_forward.26} parent=0 // pred_region
    _
  $region13: #{vit_forward.26} parent=0 // pred_fallthru
    _
  // Predicated region
  $region14: #{vit_forward.26} parent=0 // pred_check
    _
  $region15: #{vit_forward.26} parent=0 // pred_check_branch
    %629 = sbr.rel (0) target = $region17
  $region16: #{vit_forward.26} parent=0 // pred_region
    _
  $region17: #{vit_forward.26} parent=0 // pred_fallthru
    _

// kernel: vit_forward.27
$region0: #{vit_forward.27}
  #allocation0 [shape = 'u32[]', space=smem, size = 0x4, offset = 0x4, fixed_abs, tag = 'smem constant byte address 0x4 - core index']
  #allocation1 [shape = 'u32[72,128]{1,0:T(1,128)}', space=vmem, size = 0x9000, scoped, tag = 'internal scratch']
  #allocation2 [shape = 'f32[2,16]{1,0:T(2,128)}', space=vmem, size = 0x400, scoped, tag = 'scratch operand']
  %s0 = inlined_call_operand.vmem [shape: bf16[2,32], index: 0, kind: input, shape index: {}]
  %s1 = inlined_call_operand.vmem [shape: bf16[32,16], index: 1, kind: input, shape index: {}]
  %s2 = inlined_call_operand.vmem [shape: f32[1,16], index: 2, kind: input, shape index: {}]
  %s3 = inlined_call_operand.hbm [shape: f32[2,16], index: 3, kind: output, shape index: {}]
  %s4 = sld [smem:[#allocation0]]
  $region30: #{vit_forward.27} parent=0
    _
  %s6 = ssub.s32 1, %s4
  %s7 = scalar_select 0, %s6, %s4
  $region1: #{vit_forward.27} parent=0
    #allocation3 [shape = 'u8[1024]{0}', space=vmem, size = 0x400, scoped, tag = 'output window, operand 0, single buffered']
    #allocation4 [shape = 's32[1]{0}', space=sflag, size = 0x4, scoped, tag = 'scoped memory for vit_forward.27']
    %8 = vsyncpa [#allocation4], 0
    // Predicated region
    $region2: #{vit_forward.27} parent=1 // pred_check
      _
    $region3: #{vit_forward.27} parent=1 // pred_check_branch
      %10 = sbr.rel (0) target = $region5
    $region4: #{vit_forward.27} parent=1 // pred_region
      _
    $region5: #{vit_forward.27} parent=1 // pred_fallthru
      _
    // Predicated region
    $region6: #{vit_forward.27} parent=1 // pred_check
      _
    $region7: #{vit_forward.27} parent=1 // pred_check_branch
      %12 = sbr.rel (0) target = $region9
    $region8: #{vit_forward.27} parent=1 // pred_region
      _
    $region9: #{vit_forward.27} parent=1 // pred_fallthru
      _
    // Predicated region
    $region10: #{vit_forward.27} parent=1 // pred_check
      _
    $region11: #{vit_forward.27} parent=1 // pred_check_branch
      %14 = sbr.rel (0) target = $region13
    $region12: #{vit_forward.27} parent=1 // pred_region
      _
    $region13: #{vit_forward.27} parent=1 // pred_fallthru
      _
    %p16 = scmp.eq.s32.totalorder 0, 0
    // Predicated region
    $region14: #{vit_forward.27} parent=1 // pred_check
      %p17 = pneg %p16
    $region15: #{vit_forward.27} parent=1 // pred_check_branch
      %19 = sbr.rel (%p17) target = $region17
    $region16: #{vit_forward.27} parent=1 // pred_region
      %vm20 = vcmask 123904
      %21 = vst.msk [vmem:[#allocation2] sm:$0x3] %vm20, 0.0
    $region17: #{vit_forward.27} parent=1 // pred_fallthru
      _
    %v22 = vld [vmem:[#allocation2] sm:$0x3]
    %v23 = vld [vmem:[%s0] sm:$0x1]
    %v24 = vld [vmem:[%s1] sm:$0xf]
    %v25 = vld [vmem:[%s1 + $0x4] sm:$0xf]
    %v26 = vld [vmem:[%s1 + $0x8] sm:$0xf]
    %v27 = vld [vmem:[%s1 + $0xc] sm:$0xf]
    %v32 = vunpack.c.l.b16 %v24
    %v33 = vunpack.c.l.b16 %v25
    %v34 = vunpack.c.l.b16 %v26
    %v35 = vunpack.c.l.b16 %v27
    %v36 = vpack.c.b16 %v33, %v32
    %v37 = vpack.c.b16 %v35, %v34
    %vm40 = vcmask 261120
    %v42 = vsel %vm40, %v23, 0
    %44 = vmatpush.bf16.msra.mxu0 0
    %45 = vmatpush.bf16.msra.mxu0 0
    %46 = vmatpush.bf16.msra.mxu0 0
    %47 = vmatpush.bf16.msra.mxu0 0
    %48 = vmatpush.bf16.msra.mxu0 0
    %49 = vmatpush.bf16.msra.mxu0 0
    %50 = vmatpush.bf16.msra.mxu0 %v37
    %51 = vmatpush.bf16.msra.mxu0 %v36
    %52 = vmatmul.bf16.gmra.mxu0 %v42
    %v53 = vpop.f32.mrf.mxu0
    %v54 = vadd.f32 0.0, %v53
    %v55 = vpop.f32.mrf.mxu0
    %56 = vdwg.mxu0
    %v57 = vadd.f32 %v22, %v54
    %vm58 = vcmask 123904
    %59 = vst.msk [vmem:[#allocation2] sm:$0x3] %vm58, %v57
    // Predicated region
    $region18: #{vit_forward.27} parent=1 // pred_check
      %p60 = pneg %p16
    $region19: #{vit_forward.27} parent=1 // pred_check_branch
      %62 = sbr.rel (%p60) target = $region21
    $region20: #{vit_forward.27} parent=1 // pred_region
      %v63 = vld [vmem:[#allocation2] sm:$0x3]
      %v64 = vld [vmem:[%s2] sm:$0x1]
      %v66 = vperm.slane %v64, 0
      %v68 = vadd.f32 %v63, %v66
      %69 = vst.msk [vmem:[#allocation3] sm:$0x3] %vm58, %v68
    $region21: #{vit_forward.27} parent=1 // pred_fallthru
      _
    // Predicated region
    $region22: #{vit_forward.27} parent=1 // pred_check
      _
    $region23: #{vit_forward.27} parent=1 // pred_check_branch
      %71 = sbr.rel (0) target = $region25
    $region24: #{vit_forward.27} parent=1 // pred_region
      %73 = vsyncadd [#allocation4], 0
      %s75 = sshll.u32 [#allocation3], 4
      %s76 = int_to_ptr.vmem [resolvable:$true] %s75
      %s77 = sshll.u32 %s3, 4
      %s78 = int_to_ptr.hbm [resolvable:$true] %s77
      %80 = dma.vmem_to_hbm [thread:$0]  %s76, 32, %s78, [#allocation4]
    $region25: #{vit_forward.27} parent=1 // pred_fallthru
      _
    // Predicated region
    $region26: #{vit_forward.27} parent=1 // pred_check
      _
    $region27: #{vit_forward.27} parent=1 // pred_check_branch
      %82 = sbr.rel (0) target = $region29
    $region28: #{vit_forward.27} parent=1 // pred_region
      %84 = dma.done [#allocation4], 32
    $region29: #{vit_forward.27} parent=1 // pred_fallthru
      _
    %85 = vsyncpa [#allocation4], 1

</llo_original>
